<compile_context>
chip_gen: v7x
topology: tpu7x:2x2x1
jax: 0.10.0
libtpu: 0.0.40
codegen_flags: <defaults>
</compile_context>

<pallas_src>
import numpy as np
import jax
import jax.numpy as jnp
from jax.experimental import pallas as pl
from jax.experimental.pallas import tpu as pltpu

LASER_DIM = 180            # forced by architecture: conv stack 180 -> 44 -> 10 -> 4, 4 ch => 16 feats
STATE_DIM = LASER_DIM + 5  # [..., distance, cos, sin, lin_vel, ang_vel]
ACTION_DIM = 2
NEG_SLOPE = 0.01           # F.leaky_relu default

# Padded lane widths (all multiples of 128)
C1 = 256        # conv1 output lanes (4*44 = 176 -> 256)
C2 = 128        # conv2 output lanes (8*10 = 80  -> 128)
C3 = 128        # conv3 output lanes (4*4  = 16  -> 128); also the merged-feature width
H1 = 512        # layer_1 / layer_4 width (400 -> 512); stacked = 1024
H2 = 384        # layer_2 / layer_5 width (300 -> 384); stacked = 768
OUT_LANES = 128 # lane-dense output slab: lane 0 = q1, lane 1 = q2
N_CONV_FEAT = 16  # conv features occupy lanes 0..15; embeddings go to lanes 16..35


def _round_up(x, m):
    return ((x + m - 1) // m) * m


# ---------------------------------------------------------------------------
# Parameter construction (deterministic, in-script)
# ---------------------------------------------------------------------------
def _conv1d_as_matmul(W, b, L_in, stride):
    """Express Conv1d(valid, given stride) as (C_in*L_in, C_out*L_out) dense matmul.

    Input / output activations are channel-major flattened: idx = c * L + t,
    which matches PyTorch's flatten(start_dim=1) ordering.
    """
    C_out, C_in, K = W.shape
    L_out = (L_in - K) // stride + 1
    M = np.zeros((C_in * L_in, C_out * L_out), dtype=np.float32)
    for co in range(C_out):
        for ci in range(C_in):
            for t in range(L_out):
                s0 = ci * L_in + t * stride
                M[s0:s0 + K, co * L_out + t] = W[co, ci, :]
    bflat = np.repeat(np.asarray(b, np.float32), L_out)
    return M, bflat, L_out


def init_params(seed=0):
    rng = np.random.default_rng(seed)

    def uni(shape, fan_in):
        bound = 1.0 / np.sqrt(fan_in)
        return rng.uniform(-bound, bound, size=shape).astype(np.float32)

    P = {}
    P["cW1"] = uni((4, 1, 8), 8);    P["cb1"] = uni((4,), 8)
    P["cW2"] = uni((8, 4, 8), 32);   P["cb2"] = uni((8,), 32)
    P["cW3"] = uni((4, 8, 4), 32);   P["cb3"] = uni((4,), 32)
    P["gW"] = uni((10, 3), 3);       P["gb"] = uni((10,), 3)
    P["aW"] = uni((10, 2), 2);       P["ab"] = uni((10,), 2)
    P["l1W"] = uni((400, 36), 36);   P["l1b"] = uni((400,), 36)
    P["l2sW"] = uni((300, 400), 400)                     # bias of layer_2_s unused in forward
    P["l2aW"] = uni((300, ACTION_DIM), ACTION_DIM);      P["l2ab"] = uni((300,), ACTION_DIM)
    P["l3W"] = uni((1, 300), 300);   P["l3b"] = uni((1,), 300)
    P["l4W"] = uni((400, 36), 36);   P["l4b"] = uni((400,), 36)
    P["l5sW"] = uni((300, 400), 400)                     # bias of layer_5_s unused in forward
    P["l5aW"] = uni((300, ACTION_DIM), ACTION_DIM);      P["l5ab"] = uni((300,), ACTION_DIM)
    P["l6W"] = uni((1, 300), 300);   P["l6b"] = uni((1,), 300)
    return P


def pack_kernel_params(P):
    """Pack PyTorch-layout params into lane-padded, head-stacked kernel matrices."""
    M1, b1f, L1 = _conv1d_as_matmul(P["cW1"], P["cb1"], LASER_DIM, 4)  # (180,176), L1=44
    M2, b2f, L2 = _conv1d_as_matmul(P["cW2"], P["cb2"], L1, 4)         # (176, 80), L2=10
    M3, b3f, L3 = _conv1d_as_matmul(P["cW3"], P["cb3"], L2, 2)         # ( 80, 16), L3=4

    # conv1 extended to consume the full 185-lane state (tail rows zero), cols padded
    m1 = np.zeros((STATE_DIM, C1), np.float32)
    m1[:LASER_DIM, :M1.shape[1]] = M1
    b1 = np.zeros((1, C1), np.float32); b1[0, :b1f.shape[0]] = b1f

    m2 = np.zeros((C1, C2), np.float32); m2[:M2.shape[0], :M2.shape[1]] = M2
    b2 = np.zeros((1, C2), np.float32); b2[0, :b2f.shape[0]] = b2f

    m3 = np.zeros((C2, C3), np.float32); m3[:M3.shape[0], :M3.shape[1]] = M3
    b3 = np.zeros((1, C3), np.float32); b3[0, :b3f.shape[0]] = b3f

    # Fused goal + prev-action embedding, consuming the full 185-lane state.
    # Outputs are placed at lanes 16..35 so the embedding merges with the conv
    # features (lanes 0..15) via a single VPU add in the kernel.
    wt = np.zeros((STATE_DIM, C3), np.float32)
    wt[LASER_DIM:LASER_DIM + 3, N_CONV_FEAT:N_CONV_FEAT + 10] = P["gW"].T
    wt[LASER_DIM + 3:STATE_DIM, N_CONV_FEAT + 10:N_CONV_FEAT + 20] = P["aW"].T
    bt = np.zeros((1, C3), np.float32)
    bt[0, N_CONV_FEAT:N_CONV_FEAT + 10] = P["gb"]
    bt[0, N_CONV_FEAT + 10:N_CONV_FEAT + 20] = P["ab"]

    # Merged + stacked layer_1 / layer_4: rows 0..35 = [conv(16) | goal(10) | act(10)],
    # columns [head1(400) | pad(112) | head2(400) | pad(112)] = 1024.
    w1 = P["l1W"].T  # (36, 400)
    w4 = P["l4W"].T
    wl = np.zeros((C3, 2 * H1), np.float32)
    wl[0:36, 0:400] = w1
    wl[0:36, H1:H1 + 400] = w4
    bl = np.zeros((1, 2 * H1), np.float32)
    bl[0, 0:400] = P["l1b"];  bl[0, H1:H1 + 400] = P["l4b"]

    # Second layers, state path (bias intentionally NOT added — matches torch.mm usage)
    w2s = np.zeros((H1, H2), np.float32); w2s[0:400, 0:300] = P["l2sW"].T
    w5s = np.zeros((H1, H2), np.float32); w5s[0:400, 0:300] = P["l5sW"].T

    # Second layers, action path (K=2): stacked to (2, 768) with stacked biases.
    # Consumed on the VPU as broadcast multiply-adds (no MXU pass).
    wact = np.zeros((ACTION_DIM, 2 * H2), np.float32)
    wact[:, 0:300] = P["l2aW"].T;  wact[:, H2:H2 + 300] = P["l5aW"].T
    bact = np.zeros((1, 2 * H2), np.float32)
    bact[0, 0:300] = P["l2ab"];  bact[0, H2:H2 + 300] = P["l5ab"]

    # Final 300->1 layers as row vectors (VPU multiply + lane reduce in kernel)
    w3 = np.zeros((1, H2), np.float32); w3[0, 0:300] = P["l3W"][0]
    w6 = np.zeros((1, H2), np.float32); w6[0, 0:300] = P["l6W"][0]
    bq = np.zeros((1, OUT_LANES), np.float32)
    bq[0, 0] = P["l3b"][0]; bq[0, 1] = P["l6b"][0]

    f32 = lambda a: jnp.asarray(a, jnp.float32)
    bf16 = lambda a: jnp.asarray(a, jnp.bfloat16)   # MXU-native dtype for the big layers
    return (f32(m1), f32(b1), f32(m2), f32(b2), f32(m3), f32(b3),
            f32(wt), f32(bt), bf16(wl), f32(bl),
            bf16(w2s), bf16(w5s), f32(wact), f32(bact),
            f32(w3), f32(w6), f32(bq))


# ---------------------------------------------------------------------------
# Pallas kernel: whole Critic forward for one batch tile
# ---------------------------------------------------------------------------
def _critic_kernel(
    s_ref, act_ref,
    m1_ref, b1_ref, m2_ref, b2_ref, m3_ref, b3_ref,
    wt_ref, bt_ref, wl_ref, bl_ref,
    w2s_ref, w5s_ref, wact_ref, bact_ref,
    w3_ref, w6_ref, bq_ref,
    out_ref,
):
    def lrelu(x):
        return jnp.where(x > 0, x, NEG_SLOPE * x)

    def mm(x, w):
        return jnp.dot(x, w, preferred_element_type=jnp.float32)

    x = s_ref[...]                                         # (TB, 185) full state

    # Shared CNN trunk (conv-as-matmul on channel-major flattened activations; f32)
    h = lrelu(mm(x, m1_ref[...]) + b1_ref[...])            # (TB, 256)  lanes 0..175 real
    h = lrelu(mm(h, m2_ref[...]) + b2_ref[...])            # (TB, 128)  lanes 0..79  real
    l = lrelu(mm(h, m3_ref[...]) + b3_ref[...])            # (TB, 128)  lanes 0..15  real

    # Goal / prev-action embedding emitted into lanes 16..35; padded lanes are exact
    # zeros, so merging with the conv features is a pure VPU add.
    ga = lrelu(mm(x, wt_ref[...]) + bt_ref[...])           # (TB, 128)  lanes 16..35 real
    feat = l + ga                                          # (TB, 128)  lanes 0..35 real

    # Stacked Q1/Q2 first layers in a single (128,1024) matmul (bf16 operands, f32 acc)
    s_all = lrelu(mm(feat.astype(jnp.bfloat16), wl_ref[...]) + bl_ref[...])   # (TB, 1024)

    # Action path of the second layers (K=2) on the VPU: broadcast multiply-adds
    # against the stacked (2,768) weight rows + stacked layer_2_a / layer_5_a biases.
    a = act_ref[...]
    wa = wact_ref[...]
    ap = a[:, 0:1] * wa[0:1, :] + a[:, 1:2] * wa[1:2, :] + bact_ref[...]      # (TB, 768)

    # Second layers (layer_2_s / layer_5_s biases intentionally omitted — torch.mm path)
    sb = s_all.astype(jnp.bfloat16)
    h1 = lrelu(mm(sb[:, :H1], w2s_ref[...]) + ap[:, :H2])   # (TB, 384)
    h2 = lrelu(mm(sb[:, H1:], w5s_ref[...]) + ap[:, H2:])   # (TB, 384)

    # Final 300->1 layers: VPU multiply + XLU lane reduction (no N=1 MXU pass)
    q1 = jnp.sum(h1 * w3_ref[...], axis=-1, keepdims=True)     # (TB, 1)
    q2 = jnp.sum(h2 * w6_ref[...], axis=-1, keepdims=True)     # (TB, 1)

    # Lane-dense (TB, 128) output slab: lane 0 = q1, lane 1 = q2, rest zero.
    lane = jax.lax.broadcasted_iota(jnp.int32, out_ref.shape, 1)
    out_ref[...] = jnp.where(lane == 0, q1, jnp.where(lane == 1, q2, 0.0)) + bq_ref[...]


def critic_forward(s, action, kernel_params, *, tb=512):
    """s: (B, 185) f32, action: (B, 2) f32 -> (q1 (B,1), q2 (B,1))."""
    B = s.shape[0]
    if B <= 16:
        # Tiny batch: single grid step, padded to a full sublane group (8 rows).
        Bp = _round_up(B, 8)
        TB = Bp
    else:
        # At least two grid steps so both v7x TensorCores get work; TB multiple of 8.
        TB = max(8, min(tb, _round_up(pl.cdiv(B, 2), 8)))
        Bp = _round_up(B, TB)
    if Bp != B:
        s = jnp.pad(s, ((0, Bp - B), (0, 0)))
        action = jnp.pad(action, ((0, Bp - B), (0, 0)))

    def batch_spec(n):
        return pl.BlockSpec((TB, n), lambda i: (i, 0))

    def weight_spec(w):
        # Grid-invariant weights: single VMEM copy, no pointless double-buffering.
        return pl.BlockSpec(w.shape, lambda i: (0, 0), pipeline_mode=pl.Buffered(1))

    in_specs = ([batch_spec(STATE_DIM), batch_spec(ACTION_DIM)]
                + [weight_spec(w) for w in kernel_params])

    out = pl.pallas_call(
        _critic_kernel,
        out_shape=jax.ShapeDtypeStruct((Bp, OUT_LANES), jnp.float32),
        grid=(Bp // TB,),
        in_specs=in_specs,
        out_specs=batch_spec(OUT_LANES),
        compiler_params=pltpu.CompilerParams(
            dimension_semantics=("parallel",),
            vmem_limit_bytes=64 * 1024 * 1024),
    )(s, action, *kernel_params)

    return out[:B, 0:1], out[:B, 1:2]


# ---------------------------------------------------------------------------
# Pure-JAX reference (uses real Conv1d) for a correctness check
# ---------------------------------------------------------------------------
def reference(s, action, P):
    def lrelu(x):
        return jnp.where(x > 0, x, NEG_SLOPE * x)

    def conv1d(x, W, b, stride):
        y = jax.lax.conv_general_dilated(
            x, jnp.asarray(W), (stride,), "VALID",
            dimension_numbers=("NCH", "OIH", "NCH"))
        return y + jnp.asarray(b)[None, :, None]

    laser = s[:, :-5][:, None, :]
    h = lrelu(conv1d(laser, P["cW1"], P["cb1"], 4))
    h = lrelu(conv1d(h, P["cW2"], P["cb2"], 4))
    h = lrelu(conv1d(h, P["cW3"], P["cb3"], 2))
    l = h.reshape(h.shape[0], -1)
    g = lrelu(s[:, -5:-2] @ P["gW"].T + P["gb"])
    a = lrelu(s[:, -2:] @ P["aW"].T + P["ab"])
    sc = jnp.concatenate([l, g, a], axis=-1)

    s1 = lrelu(sc @ P["l1W"].T + P["l1b"])
    s1 = lrelu(s1 @ P["l2sW"].T + action @ P["l2aW"].T + P["l2ab"])
    q1 = s1 @ P["l3W"].T + P["l3b"]

    s2 = lrelu(sc @ P["l4W"].T + P["l4b"])
    s2 = lrelu(s2 @ P["l5sW"].T + action @ P["l5aW"].T + P["l5ab"])
    q2 = s2 @ P["l6W"].T + P["l6b"]
    return q1, q2


if __name__ == "__main__":
    key = jax.random.PRNGKey(0)
    ks, ka = jax.random.split(key)

    P = init_params(seed=0)
    kernel_params = pack_kernel_params(P)

    # Check 1: tiny batch (padded to 8 rows, single grid step)
    B = 2
    s = jax.random.normal(ks, (B, STATE_DIM), dtype=jnp.float32)
    action = jax.random.uniform(ka, (B, ACTION_DIM), dtype=jnp.float32,
                                minval=-1.0, maxval=1.0)
    q1, q2 = critic_forward(s, action, kernel_params)
    jax.block_until_ready((q1, q2))
    r1, r2 = reference(s, action, P)
    assert q1.shape == (B, 1) and q2.shape == (B, 1)
    assert np.allclose(np.asarray(q1), np.asarray(r1), atol=1e-3, rtol=1e-3)
    assert np.allclose(np.asarray(q2), np.asarray(r2), atol=1e-3, rtol=1e-3)

    # Check 2: multi-step batch grid + batch padding
    B2 = 40
    s2 = jax.random.normal(jax.random.PRNGKey(1), (B2, STATE_DIM), dtype=jnp.float32)
    a2 = jax.random.uniform(jax.random.PRNGKey(2), (B2, ACTION_DIM), dtype=jnp.float32,
                            minval=-1.0, maxval=1.0)
    g1, g2 = critic_forward(s2, a2, kernel_params, tb=16)
    jax.block_until_ready((g1, g2))
    rr1, rr2 = reference(s2, a2, P)
    assert g1.shape == (B2, 1) and g2.shape == (B2, 1)
    assert np.allclose(np.asarray(g1), np.asarray(rr1), atol=1e-3, rtol=1e-3)
    assert np.allclose(np.asarray(g2), np.asarray(rr2), atol=1e-3, rtol=1e-3)

    print("KERNEL_OK")
</pallas_src>

<mosaic_0001>
module attributes {stable_mosaic.version = 11 : i64} {
  func.func @_critic_kernel(%arg0: i32, %arg1: memref<8x185xf32, #tpu.memory_space<vmem>>, %arg2: memref<8x2xf32, #tpu.memory_space<vmem>>, %arg3: memref<185x256xf32, #tpu.memory_space<vmem>>, %arg4: memref<1x256xf32, #tpu.memory_space<vmem>>, %arg5: memref<256x128xf32, #tpu.memory_space<vmem>>, %arg6: memref<1x128xf32, #tpu.memory_space<vmem>>, %arg7: memref<128x128xf32, #tpu.memory_space<vmem>>, %arg8: memref<1x128xf32, #tpu.memory_space<vmem>>, %arg9: memref<185x128xf32, #tpu.memory_space<vmem>>, %arg10: memref<1x128xf32, #tpu.memory_space<vmem>>, %arg11: memref<128x1024xbf16, #tpu.memory_space<vmem>>, %arg12: memref<1x1024xf32, #tpu.memory_space<vmem>>, %arg13: memref<512x384xbf16, #tpu.memory_space<vmem>>, %arg14: memref<512x384xbf16, #tpu.memory_space<vmem>>, %arg15: memref<2x768xf32, #tpu.memory_space<vmem>>, %arg16: memref<1x768xf32, #tpu.memory_space<vmem>>, %arg17: memref<1x384xf32, #tpu.memory_space<vmem>>, %arg18: memref<1x384xf32, #tpu.memory_space<vmem>>, %arg19: memref<1x128xf32, #tpu.memory_space<vmem>>, %arg20: memref<8x128xf32, #tpu.memory_space<vmem>>) attributes {dimension_semantics = [#tpu.dimension_semantics<parallel>], iteration_bounds = array<i64: 1>, scalar_prefetch = 0 : i64, scratch_operands = 0 : i64, tpu.core_type = #tpu.core_type<tc>, window_params = [{transform_indices = @transform_0, window_bounds = array<i64: 8, 185>}, {transform_indices = @transform_1, window_bounds = array<i64: 8, 2>}, {pipeline_mode = #tpu.pipeline_mode<synchronous>, transform_indices = @transform_2, window_bounds = array<i64: 185, 256>}, {pipeline_mode = #tpu.pipeline_mode<synchronous>, transform_indices = @transform_3, window_bounds = array<i64: 1, 256>}, {pipeline_mode = #tpu.pipeline_mode<synchronous>, transform_indices = @transform_4, window_bounds = array<i64: 256, 128>}, {pipeline_mode = #tpu.pipeline_mode<synchronous>, transform_indices = @transform_5, window_bounds = array<i64: 1, 128>}, {pipeline_mode = #tpu.pipeline_mode<synchronous>, transform_indices = @transform_6, window_bounds = array<i64: 128, 128>}, {pipeline_mode = #tpu.pipeline_mode<synchronous>, transform_indices = @transform_7, window_bounds = array<i64: 1, 128>}, {pipeline_mode = #tpu.pipeline_mode<synchronous>, transform_indices = @transform_8, window_bounds = array<i64: 185, 128>}, {pipeline_mode = #tpu.pipeline_mode<synchronous>, transform_indices = @transform_9, window_bounds = array<i64: 1, 128>}, {pipeline_mode = #tpu.pipeline_mode<synchronous>, transform_indices = @transform_10, window_bounds = array<i64: 128, 1024>}, {pipeline_mode = #tpu.pipeline_mode<synchronous>, transform_indices = @transform_11, window_bounds = array<i64: 1, 1024>}, {pipeline_mode = #tpu.pipeline_mode<synchronous>, transform_indices = @transform_12, window_bounds = array<i64: 512, 384>}, {pipeline_mode = #tpu.pipeline_mode<synchronous>, transform_indices = @transform_13, window_bounds = array<i64: 512, 384>}, {pipeline_mode = #tpu.pipeline_mode<synchronous>, transform_indices = @transform_14, window_bounds = array<i64: 2, 768>}, {pipeline_mode = #tpu.pipeline_mode<synchronous>, transform_indices = @transform_15, window_bounds = array<i64: 1, 768>}, {pipeline_mode = #tpu.pipeline_mode<synchronous>, transform_indices = @transform_16, window_bounds = array<i64: 1, 384>}, {pipeline_mode = #tpu.pipeline_mode<synchronous>, transform_indices = @transform_17, window_bounds = array<i64: 1, 384>}, {pipeline_mode = #tpu.pipeline_mode<synchronous>, transform_indices = @transform_18, window_bounds = array<i64: 1, 128>}, {transform_indices = @transform_19, window_bounds = array<i64: 8, 128>}]} {
    %c0 = arith.constant 0 : index
    %c0_0 = arith.constant 0 : index
    %0 = vector.load %arg1[%c0, %c0_0] : memref<8x185xf32, #tpu.memory_space<vmem>>, vector<8x185xf32>
    %c0_1 = arith.constant 0 : index
    %c0_2 = arith.constant 0 : index
    %1 = vector.load %arg3[%c0_1, %c0_2] : memref<185x256xf32, #tpu.memory_space<vmem>>, vector<185x256xf32>
    %cst = arith.constant dense<0.000000e+00> : vector<8x256xf32>
    %2 = tpu.matmul %0, %1, %cst {dimension_numbers = #tpu.dot_dimension_numbers<[1], [0], [0], [1], [0, 0, 1, 1], [], []>} : vector<8x185xf32>, vector<185x256xf32>, vector<8x256xf32> -> vector<8x256xf32>
    %c0_3 = arith.constant 0 : index
    %c0_4 = arith.constant 0 : index
    %3 = vector.load %arg4[%c0_3, %c0_4] : memref<1x256xf32, #tpu.memory_space<vmem>>, vector<1x256xf32>
    %4 = vector.broadcast %3 : vector<1x256xf32> to vector<8x256xf32>
    %5 = arith.addf %2, %4 : vector<8x256xf32>
    %cst_5 = arith.constant 0.000000e+00 : f32
    %6 = vector.broadcast %cst_5 : f32 to vector<8x256xf32>
    %7 = arith.cmpf ogt, %5, %6 : vector<8x256xf32>
    %cst_6 = arith.constant 0.00999999977 : f32
    %8 = vector.broadcast %cst_6 : f32 to vector<8x256xf32>
    %9 = arith.mulf %8, %5 : vector<8x256xf32>
    %10 = arith.select %7, %5, %9 : vector<8x256xi1>, vector<8x256xf32>
    %c0_7 = arith.constant 0 : index
    %c0_8 = arith.constant 0 : index
    %11 = vector.load %arg5[%c0_7, %c0_8] : memref<256x128xf32, #tpu.memory_space<vmem>>, vector<256x128xf32>
    %cst_9 = arith.constant dense<0.000000e+00> : vector<8x128xf32>
    %12 = tpu.matmul %10, %11, %cst_9 {dimension_numbers = #tpu.dot_dimension_numbers<[1], [0], [0], [1], [0, 0, 1, 1], [], []>} : vector<8x256xf32>, vector<256x128xf32>, vector<8x128xf32> -> vector<8x128xf32>
    %c0_10 = arith.constant 0 : index
    %c0_11 = arith.constant 0 : index
    %13 = vector.load %arg6[%c0_10, %c0_11] : memref<1x128xf32, #tpu.memory_space<vmem>>, vector<1x128xf32>
    %14 = vector.broadcast %13 : vector<1x128xf32> to vector<8x128xf32>
    %15 = arith.addf %12, %14 : vector<8x128xf32>
    %cst_12 = arith.constant 0.000000e+00 : f32
    %16 = vector.broadcast %cst_12 : f32 to vector<8x128xf32>
    %17 = arith.cmpf ogt, %15, %16 : vector<8x128xf32>
    %cst_13 = arith.constant 0.00999999977 : f32
    %18 = vector.broadcast %cst_13 : f32 to vector<8x128xf32>
    %19 = arith.mulf %18, %15 : vector<8x128xf32>
    %20 = arith.select %17, %15, %19 : vector<8x128xi1>, vector<8x128xf32>
    %c0_14 = arith.constant 0 : index
    %c0_15 = arith.constant 0 : index
    %21 = vector.load %arg7[%c0_14, %c0_15] : memref<128x128xf32, #tpu.memory_space<vmem>>, vector<128x128xf32>
    %cst_16 = arith.constant dense<0.000000e+00> : vector<8x128xf32>
    %22 = tpu.matmul %20, %21, %cst_16 {dimension_numbers = #tpu.dot_dimension_numbers<[1], [0], [0], [1], [0, 0, 1, 1], [], []>} : vector<8x128xf32>, vector<128x128xf32>, vector<8x128xf32> -> vector<8x128xf32>
    %c0_17 = arith.constant 0 : index
    %c0_18 = arith.constant 0 : index
    %23 = vector.load %arg8[%c0_17, %c0_18] : memref<1x128xf32, #tpu.memory_space<vmem>>, vector<1x128xf32>
    %24 = vector.broadcast %23 : vector<1x128xf32> to vector<8x128xf32>
    %25 = arith.addf %22, %24 : vector<8x128xf32>
    %cst_19 = arith.constant 0.000000e+00 : f32
    %26 = vector.broadcast %cst_19 : f32 to vector<8x128xf32>
    %27 = arith.cmpf ogt, %25, %26 : vector<8x128xf32>
    %cst_20 = arith.constant 0.00999999977 : f32
    %28 = vector.broadcast %cst_20 : f32 to vector<8x128xf32>
    %29 = arith.mulf %28, %25 : vector<8x128xf32>
    %30 = arith.select %27, %25, %29 : vector<8x128xi1>, vector<8x128xf32>
    %c0_21 = arith.constant 0 : index
    %c0_22 = arith.constant 0 : index
    %31 = vector.load %arg9[%c0_21, %c0_22] : memref<185x128xf32, #tpu.memory_space<vmem>>, vector<185x128xf32>
    %cst_23 = arith.constant dense<0.000000e+00> : vector<8x128xf32>
    %32 = tpu.matmul %0, %31, %cst_23 {dimension_numbers = #tpu.dot_dimension_numbers<[1], [0], [0], [1], [0, 0, 1, 1], [], []>} : vector<8x185xf32>, vector<185x128xf32>, vector<8x128xf32> -> vector<8x128xf32>
    %c0_24 = arith.constant 0 : index
    %c0_25 = arith.constant 0 : index
    %33 = vector.load %arg10[%c0_24, %c0_25] : memref<1x128xf32, #tpu.memory_space<vmem>>, vector<1x128xf32>
    %34 = vector.broadcast %33 : vector<1x128xf32> to vector<8x128xf32>
    %35 = arith.addf %32, %34 : vector<8x128xf32>
    %cst_26 = arith.constant 0.000000e+00 : f32
    %36 = vector.broadcast %cst_26 : f32 to vector<8x128xf32>
    %37 = arith.cmpf ogt, %35, %36 : vector<8x128xf32>
    %cst_27 = arith.constant 0.00999999977 : f32
    %38 = vector.broadcast %cst_27 : f32 to vector<8x128xf32>
    %39 = arith.mulf %38, %35 : vector<8x128xf32>
    %40 = arith.select %37, %35, %39 : vector<8x128xi1>, vector<8x128xf32>
    %41 = arith.addf %30, %40 : vector<8x128xf32>
    %42 = arith.truncf %41 : vector<8x128xf32> to vector<8x128xbf16>
    %c0_28 = arith.constant 0 : index
    %c0_29 = arith.constant 0 : index
    %43 = vector.load %arg11[%c0_28, %c0_29] : memref<128x1024xbf16, #tpu.memory_space<vmem>>, vector<128x1024xbf16>
    %cst_30 = arith.constant dense<0.000000e+00> : vector<8x1024xf32>
    %44 = tpu.matmul %42, %43, %cst_30 {dimension_numbers = #tpu.dot_dimension_numbers<[1], [0], [0], [1], [0, 0, 1, 1], [], []>} : vector<8x128xbf16>, vector<128x1024xbf16>, vector<8x1024xf32> -> vector<8x1024xf32>
    %c0_31 = arith.constant 0 : index
    %c0_32 = arith.constant 0 : index
    %45 = vector.load %arg12[%c0_31, %c0_32] : memref<1x1024xf32, #tpu.memory_space<vmem>>, vector<1x1024xf32>
    %46 = vector.broadcast %45 : vector<1x1024xf32> to vector<8x1024xf32>
    %47 = arith.addf %44, %46 : vector<8x1024xf32>
    %cst_33 = arith.constant 0.000000e+00 : f32
    %48 = vector.broadcast %cst_33 : f32 to vector<8x1024xf32>
    %49 = arith.cmpf ogt, %47, %48 : vector<8x1024xf32>
    %cst_34 = arith.constant 0.00999999977 : f32
    %50 = vector.broadcast %cst_34 : f32 to vector<8x1024xf32>
    %51 = arith.mulf %50, %47 : vector<8x1024xf32>
    %52 = arith.select %49, %47, %51 : vector<8x1024xi1>, vector<8x1024xf32>
    %c0_35 = arith.constant 0 : index
    %c0_36 = arith.constant 0 : index
    %53 = vector.load %arg2[%c0_35, %c0_36] : memref<8x2xf32, #tpu.memory_space<vmem>>, vector<8x2xf32>
    %c0_37 = arith.constant 0 : index
    %c0_38 = arith.constant 0 : index
    %54 = vector.load %arg15[%c0_37, %c0_38] : memref<2x768xf32, #tpu.memory_space<vmem>>, vector<2x768xf32>
    %55 = vector.extract_strided_slice %53 {offsets = [0, 0], sizes = [8, 1], strides = [1, 1]} : vector<8x2xf32> to vector<8x1xf32>
    %56 = vector.extract_strided_slice %54 {offsets = [0, 0], sizes = [1, 768], strides = [1, 1]} : vector<2x768xf32> to vector<1x768xf32>
    %57 = vector.broadcast %55 : vector<8x1xf32> to vector<8x768xf32>
    %58 = vector.broadcast %56 : vector<1x768xf32> to vector<8x768xf32>
    %59 = arith.mulf %57, %58 : vector<8x768xf32>
    %60 = vector.extract_strided_slice %53 {offsets = [0, 1], sizes = [8, 1], strides = [1, 1]} : vector<8x2xf32> to vector<8x1xf32>
    %61 = vector.extract_strided_slice %54 {offsets = [1, 0], sizes = [1, 768], strides = [1, 1]} : vector<2x768xf32> to vector<1x768xf32>
    %62 = vector.broadcast %60 : vector<8x1xf32> to vector<8x768xf32>
    %63 = vector.broadcast %61 : vector<1x768xf32> to vector<8x768xf32>
    %64 = arith.mulf %62, %63 : vector<8x768xf32>
    %65 = arith.addf %59, %64 : vector<8x768xf32>
    %c0_39 = arith.constant 0 : index
    %c0_40 = arith.constant 0 : index
    %66 = vector.load %arg16[%c0_39, %c0_40] : memref<1x768xf32, #tpu.memory_space<vmem>>, vector<1x768xf32>
    %67 = vector.broadcast %66 : vector<1x768xf32> to vector<8x768xf32>
    %68 = arith.addf %65, %67 : vector<8x768xf32>
    %69 = arith.truncf %52 : vector<8x1024xf32> to vector<8x1024xbf16>
    %70 = vector.extract_strided_slice %69 {offsets = [0, 0], sizes = [8, 512], strides = [1, 1]} : vector<8x1024xbf16> to vector<8x512xbf16>
    %c0_41 = arith.constant 0 : index
    %c0_42 = arith.constant 0 : index
    %71 = vector.load %arg13[%c0_41, %c0_42] : memref<512x384xbf16, #tpu.memory_space<vmem>>, vector<512x384xbf16>
    %cst_43 = arith.constant dense<0.000000e+00> : vector<8x384xf32>
    %72 = tpu.matmul %70, %71, %cst_43 {dimension_numbers = #tpu.dot_dimension_numbers<[1], [0], [0], [1], [0, 0, 1, 1], [], []>} : vector<8x512xbf16>, vector<512x384xbf16>, vector<8x384xf32> -> vector<8x384xf32>
    %73 = vector.extract_strided_slice %68 {offsets = [0, 0], sizes = [8, 384], strides = [1, 1]} : vector<8x768xf32> to vector<8x384xf32>
    %74 = arith.addf %72, %73 : vector<8x384xf32>
    %cst_44 = arith.constant 0.000000e+00 : f32
    %75 = vector.broadcast %cst_44 : f32 to vector<8x384xf32>
    %76 = arith.cmpf ogt, %74, %75 : vector<8x384xf32>
    %cst_45 = arith.constant 0.00999999977 : f32
    %77 = vector.broadcast %cst_45 : f32 to vector<8x384xf32>
    %78 = arith.mulf %77, %74 : vector<8x384xf32>
    %79 = arith.select %76, %74, %78 : vector<8x384xi1>, vector<8x384xf32>
    %80 = vector.extract_strided_slice %69 {offsets = [0, 512], sizes = [8, 512], strides = [1, 1]} : vector<8x1024xbf16> to vector<8x512xbf16>
    %c0_46 = arith.constant 0 : index
    %c0_47 = arith.constant 0 : index
    %81 = vector.load %arg14[%c0_46, %c0_47] : memref<512x384xbf16, #tpu.memory_space<vmem>>, vector<512x384xbf16>
    %cst_48 = arith.constant dense<0.000000e+00> : vector<8x384xf32>
    %82 = tpu.matmul %80, %81, %cst_48 {dimension_numbers = #tpu.dot_dimension_numbers<[1], [0], [0], [1], [0, 0, 1, 1], [], []>} : vector<8x512xbf16>, vector<512x384xbf16>, vector<8x384xf32> -> vector<8x384xf32>
    %83 = vector.extract_strided_slice %68 {offsets = [0, 384], sizes = [8, 384], strides = [1, 1]} : vector<8x768xf32> to vector<8x384xf32>
    %84 = arith.addf %82, %83 : vector<8x384xf32>
    %cst_49 = arith.constant 0.000000e+00 : f32
    %85 = vector.broadcast %cst_49 : f32 to vector<8x384xf32>
    %86 = arith.cmpf ogt, %84, %85 : vector<8x384xf32>
    %cst_50 = arith.constant 0.00999999977 : f32
    %87 = vector.broadcast %cst_50 : f32 to vector<8x384xf32>
    %88 = arith.mulf %87, %84 : vector<8x384xf32>
    %89 = arith.select %86, %84, %88 : vector<8x384xi1>, vector<8x384xf32>
    %c0_51 = arith.constant 0 : index
    %c0_52 = arith.constant 0 : index
    %90 = vector.load %arg17[%c0_51, %c0_52] : memref<1x384xf32, #tpu.memory_space<vmem>>, vector<1x384xf32>
    %91 = vector.broadcast %90 : vector<1x384xf32> to vector<8x384xf32>
    %92 = arith.mulf %79, %91 : vector<8x384xf32>
    %cst_53 = arith.constant dense<0.000000e+00> : vector<8xf32>
    %93 = vector.multi_reduction <add>, %92, %cst_53 [1] : vector<8x384xf32> to vector<8xf32>
    %94 = vector.shape_cast %93 : vector<8xf32> to vector<8x1xf32>
    %c0_54 = arith.constant 0 : index
    %c0_55 = arith.constant 0 : index
    %95 = vector.load %arg18[%c0_54, %c0_55] : memref<1x384xf32, #tpu.memory_space<vmem>>, vector<1x384xf32>
    %96 = vector.broadcast %95 : vector<1x384xf32> to vector<8x384xf32>
    %97 = arith.mulf %89, %96 : vector<8x384xf32>
    %cst_56 = arith.constant dense<0.000000e+00> : vector<8xf32>
    %98 = vector.multi_reduction <add>, %97, %cst_56 [1] : vector<8x384xf32> to vector<8xf32>
    %99 = vector.shape_cast %98 : vector<8xf32> to vector<8x1xf32>
    %100 = tpu.iota {dimensions = array<i32: 1>} : vector<8x128xi32>
    %c0_i32 = arith.constant 0 : i32
    %101 = vector.broadcast %c0_i32 : i32 to vector<8x128xi32>
    %102 = arith.cmpi eq, %100, %101 : vector<8x128xi32>
    %c1_i32 = arith.constant 1 : i32
    %103 = vector.broadcast %c1_i32 : i32 to vector<8x128xi32>
    %104 = arith.cmpi eq, %100, %103 : vector<8x128xi32>
    %cst_57 = arith.constant 0.000000e+00 : f32
    %105 = vector.shape_cast %99 : vector<8x1xf32> to vector<8x1xf32>
    %106 = vector.broadcast %105 : vector<8x1xf32> to vector<8x128xf32>
    %107 = vector.broadcast %cst_57 : f32 to vector<8x128xf32>
    %108 = arith.select %104, %106, %107 : vector<8x128xi1>, vector<8x128xf32>
    %109 = vector.shape_cast %94 : vector<8x1xf32> to vector<8x1xf32>
    %110 = vector.broadcast %109 : vector<8x1xf32> to vector<8x128xf32>
    %111 = arith.select %102, %110, %108 : vector<8x128xi1>, vector<8x128xf32>
    %c0_58 = arith.constant 0 : index
    %c0_59 = arith.constant 0 : index
    %112 = vector.load %arg19[%c0_58, %c0_59] : memref<1x128xf32, #tpu.memory_space<vmem>>, vector<1x128xf32>
    %113 = vector.broadcast %112 : vector<1x128xf32> to vector<8x128xf32>
    %114 = arith.addf %111, %113 : vector<8x128xf32>
    %c0_60 = arith.constant 0 : index
    %c0_61 = arith.constant 0 : index
    %115 = vector.load %arg20[%c0_60, %c0_61] : memref<8x128xf32, #tpu.memory_space<vmem>>, vector<8x128xf32>
    tpu.vector_store %arg20[%c0_60, %c0_61], %114 {strides = array<i32>} : memref<8x128xf32, #tpu.memory_space<vmem>>, vector<8x128xf32>,
    return
  }
  func.func @transform_0(%arg0: i32) -> (i32, i32) {
    %c0_i32 = arith.constant 0 : i32
    %c0_i32_0 = arith.constant 0 : i32
    return %arg0, %c0_i32 : i32, i32
  }
  func.func @transform_1(%arg0: i32) -> (i32, i32) {
    %c0_i32 = arith.constant 0 : i32
    %c0_i32_0 = arith.constant 0 : i32
    return %arg0, %c0_i32 : i32, i32
  }
  func.func @transform_2(%arg0: i32) -> (i32, i32) {
    %c0_i32 = arith.constant 0 : i32
    %c0_i32_0 = arith.constant 0 : i32
    %c0_i32_1 = arith.constant 0 : i32
    return %c0_i32, %c0_i32_0 : i32, i32
  }
  func.func @transform_3(%arg0: i32) -> (i32, i32) {
    %c0_i32 = arith.constant 0 : i32
    %c0_i32_0 = arith.constant 0 : i32
    %c0_i32_1 = arith.constant 0 : i32
    return %c0_i32, %c0_i32_0 : i32, i32
  }
  func.func @transform_4(%arg0: i32) -> (i32, i32) {
    %c0_i32 = arith.constant 0 : i32
    %c0_i32_0 = arith.constant 0 : i32
    %c0_i32_1 = arith.constant 0 : i32
    return %c0_i32, %c0_i32_0 : i32, i32
  }
  func.func @transform_5(%arg0: i32) -> (i32, i32) {
    %c0_i32 = arith.constant 0 : i32
    %c0_i32_0 = arith.constant 0 : i32
    %c0_i32_1 = arith.constant 0 : i32
    return %c0_i32, %c0_i32_0 : i32, i32
  }
  func.func @transform_6(%arg0: i32) -> (i32, i32) {
    %c0_i32 = arith.constant 0 : i32
    %c0_i32_0 = arith.constant 0 : i32
    %c0_i32_1 = arith.constant 0 : i32
    return %c0_i32, %c0_i32_0 : i32, i32
  }
  func.func @transform_7(%arg0: i32) -> (i32, i32) {
    %c0_i32 = arith.constant 0 : i32
    %c0_i32_0 = arith.constant 0 : i32
    %c0_i32_1 = arith.constant 0 : i32
    return %c0_i32, %c0_i32_0 : i32, i32
  }
  func.func @transform_8(%arg0: i32) -> (i32, i32) {
    %c0_i32 = arith.constant 0 : i32
    %c0_i32_0 = arith.constant 0 : i32
    %c0_i32_1 = arith.constant 0 : i32
    return %c0_i32, %c0_i32_0 : i32, i32
  }
  func.func @transform_9(%arg0: i32) -> (i32, i32) {
    %c0_i32 = arith.constant 0 : i32
    %c0_i32_0 = arith.constant 0 : i32
    %c0_i32_1 = arith.constant 0 : i32
    return %c0_i32, %c0_i32_0 : i32, i32
  }
  func.func @transform_10(%arg0: i32) -> (i32, i32) {
    %c0_i32 = arith.constant 0 : i32
    %c0_i32_0 = arith.constant 0 : i32
    %c0_i32_1 = arith.constant 0 : i32
    return %c0_i32, %c0_i32_0 : i32, i32
  }
  func.func @transform_11(%arg0: i32) -> (i32, i32) {
    %c0_i32 = arith.constant 0 : i32
    %c0_i32_0 = arith.constant 0 : i32
    %c0_i32_1 = arith.constant 0 : i32
    return %c0_i32, %c0_i32_0 : i32, i32
  }
  func.func @transform_12(%arg0: i32) -> (i32, i32) {
    %c0_i32 = arith.constant 0 : i32
    %c0_i32_0 = arith.constant 0 : i32
    %c0_i32_1 = arith.constant 0 : i32
    return %c0_i32, %c0_i32_0 : i32, i32
  }
  func.func @transform_13(%arg0: i32) -> (i32, i32) {
    %c0_i32 = arith.constant 0 : i32
    %c0_i32_0 = arith.constant 0 : i32
    %c0_i32_1 = arith.constant 0 : i32
    return %c0_i32, %c0_i32_0 : i32, i32
  }
  func.func @transform_14(%arg0: i32) -> (i32, i32) {
    %c0_i32 = arith.constant 0 : i32
    %c0_i32_0 = arith.constant 0 : i32
    %c0_i32_1 = arith.constant 0 : i32
    return %c0_i32, %c0_i32_0 : i32, i32
  }
  func.func @transform_15(%arg0: i32) -> (i32, i32) {
    %c0_i32 = arith.constant 0 : i32
    %c0_i32_0 = arith.constant 0 : i32
    %c0_i32_1 = arith.constant 0 : i32
    return %c0_i32, %c0_i32_0 : i32, i32
  }
  func.func @transform_16(%arg0: i32) -> (i32, i32) {
    %c0_i32 = arith.constant 0 : i32
    %c0_i32_0 = arith.constant 0 : i32
    %c0_i32_1 = arith.constant 0 : i32
    return %c0_i32, %c0_i32_0 : i32, i32
  }
  func.func @transform_17(%arg0: i32) -> (i32, i32) {
    %c0_i32 = arith.constant 0 : i32
    %c0_i32_0 = arith.constant 0 : i32
    %c0_i32_1 = arith.constant 0 : i32
    return %c0_i32, %c0_i32_0 : i32, i32
  }
  func.func @transform_18(%arg0: i32) -> (i32, i32) {
    %c0_i32 = arith.constant 0 : i32
    %c0_i32_0 = arith.constant 0 : i32
    %c0_i32_1 = arith.constant 0 : i32
    return %c0_i32, %c0_i32_0 : i32, i32
  }
  func.func @transform_19(%arg0: i32) -> (i32, i32) {
    %c0_i32 = arith.constant 0 : i32
    %c0_i32_0 = arith.constant 0 : i32
    return %arg0, %c0_i32 : i32, i32
  }
}

</mosaic_0001>

<llo_original>
// kernel: tpu_custom_call.1
$region0: #{tpu_custom_call.1}
  #allocation0 [shape = 'u32[]', space=smem, size = 0x4, offset = 0x4, fixed_abs, tag = 'smem constant byte address 0x4 - core index']
  #allocation1 [shape = 'u32[144,128]{1,0:T(1,128)}', space=vmem, size = 0x12000, scoped, tag = 'internal scratch']
  %s0 = inlined_call_operand.hbm [shape: f32[8,185], index: 0, kind: input, shape index: {}]
  %s1 = inlined_call_operand.hbm [shape: f32[8,2], index: 1, kind: input, shape index: {}]
  %s2 = inlined_call_operand.hbm [shape: f32[185,256], index: 2, kind: input, shape index: {}]
  %s3 = inlined_call_operand.hbm [shape: f32[1,256], index: 3, kind: input, shape index: {}]
  %s4 = inlined_call_operand.hbm [shape: f32[256,128], index: 4, kind: input, shape index: {}]
  %s5 = inlined_call_operand.hbm [shape: f32[1,128], index: 5, kind: input, shape index: {}]
  %s6 = inlined_call_operand.hbm [shape: f32[128,128], index: 6, kind: input, shape index: {}]
  %s7 = inlined_call_operand.hbm [shape: f32[1,128], index: 7, kind: input, shape index: {}]
  %s8 = inlined_call_operand.hbm [shape: f32[185,128], index: 8, kind: input, shape index: {}]
  %s9 = inlined_call_operand.hbm [shape: f32[1,128], index: 9, kind: input, shape index: {}]
  %s10 = inlined_call_operand.hbm [shape: bf16[128,1024], index: 10, kind: input, shape index: {}]
  %s11 = inlined_call_operand.hbm [shape: f32[1,1024], index: 11, kind: input, shape index: {}]
  %s12 = inlined_call_operand.hbm [shape: bf16[512,384], index: 12, kind: input, shape index: {}]
  %s13 = inlined_call_operand.hbm [shape: bf16[512,384], index: 13, kind: input, shape index: {}]
  %s14 = inlined_call_operand.hbm [shape: f32[2,768], index: 14, kind: input, shape index: {}]
  %s15 = inlined_call_operand.hbm [shape: f32[1,768], index: 15, kind: input, shape index: {}]
  %s16 = inlined_call_operand.hbm [shape: f32[1,384], index: 16, kind: input, shape index: {}]
  %s17 = inlined_call_operand.hbm [shape: f32[1,384], index: 17, kind: input, shape index: {}]
  %s18 = inlined_call_operand.hbm [shape: f32[1,128], index: 18, kind: input, shape index: {}]
  %s19 = inlined_call_operand.hbm [shape: f32[8,128], index: 19, kind: output, shape index: {}]
  %s20 = sld [smem:[#allocation0]]
  $region162: #{tpu_custom_call.1} parent=0
    _
  %s22 = ssub.s32 1, %s20
  %s23 = scalar_select 0, %s22, %s20
  $region1: #{tpu_custom_call.1} parent=0
    #allocation2 [shape = 'u8[8192]{0}', space=vmem, size = 0x2000, scoped, tag = 'input window, operand 0, single buffered']
    #allocation3 [shape = 's32[1]{0}', space=sflag, size = 0x4, scoped, tag = 'scoped memory for tpu_custom_call.1']
    #allocation4 [shape = 's32[1]{0}', space=sflag, size = 0x4, scoped, tag = 'scoped memory for tpu_custom_call.1']
    #allocation5 [shape = 'u8[4096]{0}', space=vmem, size = 0x1000, scoped, tag = 'input window, operand 1, single buffered']
    #allocation6 [shape = 's32[1]{0}', space=sflag, size = 0x4, scoped, tag = 'scoped memory for tpu_custom_call.1']
    #allocation7 [shape = 'u8[196608]{0}', space=vmem, size = 0x30000, scoped, tag = 'input window, operand 2, single buffered']
    #allocation8 [shape = 'u8[1024]{0}', space=vmem, size = 0x400, scoped, tag = 'input window, operand 3, single buffered']
    #allocation9 [shape = 's32[1]{0}', space=sflag, size = 0x4, scoped, tag = 'scoped memory for tpu_custom_call.1']
    #allocation10 [shape = 'u8[131072]{0}', space=vmem, size = 0x20000, scoped, tag = 'input window, operand 4, single buffered']
    #allocation11 [shape = 'u8[512]{0}', space=vmem, size = 0x400, scoped, tag = 'input window, operand 5, single buffered']
    #allocation12 [shape = 's32[1]{0}', space=sflag, size = 0x4, scoped, tag = 'scoped memory for tpu_custom_call.1']
    #allocation13 [shape = 'u8[65536]{0}', space=vmem, size = 0x10000, scoped, tag = 'input window, operand 6, single buffered']
    #allocation14 [shape = 'u8[512]{0}', space=vmem, size = 0x400, scoped, tag = 'input window, operand 7, single buffered']
    #allocation15 [shape = 's32[1]{0}', space=sflag, size = 0x4, scoped, tag = 'scoped memory for tpu_custom_call.1']
    #allocation16 [shape = 'u8[98304]{0}', space=vmem, size = 0x18000, scoped, tag = 'input window, operand 8, single buffered']
    #allocation17 [shape = 'u8[512]{0}', space=vmem, size = 0x400, scoped, tag = 'input window, operand 9, single buffered']
    #allocation18 [shape = 's32[1]{0}', space=sflag, size = 0x4, scoped, tag = 'scoped memory for tpu_custom_call.1']
    #allocation19 [shape = 'u8[262144]{0}', space=vmem, size = 0x40000, scoped, tag = 'input window, operand 10, single buffered']
    #allocation20 [shape = 'u8[4096]{0}', space=vmem, size = 0x1000, scoped, tag = 'input window, operand 11, single buffered']
    #allocation21 [shape = 's32[1]{0}', space=sflag, size = 0x4, scoped, tag = 'scoped memory for tpu_custom_call.1']
    #allocation22 [shape = 'u8[393216]{0}', space=vmem, size = 0x60000, scoped, tag = 'input window, operand 12, single buffered']
    #allocation23 [shape = 'u8[393216]{0}', space=vmem, size = 0x60000, scoped, tag = 'input window, operand 13, single buffered']
    #allocation24 [shape = 's32[1]{0}', space=sflag, size = 0x4, scoped, tag = 'scoped memory for tpu_custom_call.1']
    #allocation25 [shape = 'u8[6144]{0}', space=vmem, size = 0x1800, scoped, tag = 'input window, operand 14, single buffered']
    #allocation26 [shape = 'u8[3072]{0}', space=vmem, size = 0xc00, scoped, tag = 'input window, operand 15, single buffered']
    #allocation27 [shape = 's32[1]{0}', space=sflag, size = 0x4, scoped, tag = 'scoped memory for tpu_custom_call.1']
    #allocation28 [shape = 'u8[1536]{0}', space=vmem, size = 0x800, scoped, tag = 'input window, operand 16, single buffered']
    #allocation29 [shape = 'u8[1536]{0}', space=vmem, size = 0x800, scoped, tag = 'input window, operand 17, single buffered']
    #allocation30 [shape = 's32[1]{0}', space=sflag, size = 0x4, scoped, tag = 'scoped memory for tpu_custom_call.1']
    #allocation31 [shape = 'u8[512]{0}', space=vmem, size = 0x400, scoped, tag = 'input window, operand 18, single buffered']
    #allocation32 [shape = 'u8[4096]{0}', space=vmem, size = 0x1000, scoped, tag = 'output window, operand 0, single buffered']
    %24 = vsyncpa [#allocation3], 0
    %25 = vsyncpa [#allocation6], 0
    %26 = vsyncpa [#allocation9], 0
    %27 = vsyncpa [#allocation12], 0
    %28 = vsyncpa [#allocation15], 0
    %29 = vsyncpa [#allocation18], 0
    %30 = vsyncpa [#allocation21], 0
    %31 = vsyncpa [#allocation24], 0
    %32 = vsyncpa [#allocation27], 0
    %33 = vsyncpa [#allocation30], 0
    %34 = vsyncpa [#allocation4], 0
    // Predicated region
    $region2: #{tpu_custom_call.1} parent=1 // pred_check
      _
    $region3: #{tpu_custom_call.1} parent=1 // pred_check_branch
      %36 = sbr.rel (0) target = $region5
    $region4: #{tpu_custom_call.1} parent=1 // pred_region
      %s38 = ssub.s32 256, 256
      %39 = vsyncadd [#allocation3], %s38
      %s41 = sshll.u32 [#allocation2], 4
      %s42 = int_to_ptr.vmem [resolvable:$true] %s41
      %44 = dma.hbm_to_vmem [thread:$0]  %s0, 256, %s42, [#allocation3]
    $region5: #{tpu_custom_call.1} parent=1 // pred_fallthru
      _
    // Predicated region
    $region6: #{tpu_custom_call.1} parent=1 // pred_check
      _
    $region7: #{tpu_custom_call.1} parent=1 // pred_check_branch
      %46 = sbr.rel (0) target = $region9
    $region8: #{tpu_custom_call.1} parent=1 // pred_region
      %s48 = ssub.s32 128, 128
      %49 = vsyncadd [#allocation6], %s48
      %s51 = sshll.u32 [#allocation5], 4
      %s52 = int_to_ptr.vmem [resolvable:$true] %s51
      %54 = dma.hbm_to_vmem [thread:$0]  %s1, 128, %s52, [#allocation6]
    $region9: #{tpu_custom_call.1} parent=1 // pred_fallthru
      _
    // Predicated region
    $region10: #{tpu_custom_call.1} parent=1 // pred_check
      _
    $region11: #{tpu_custom_call.1} parent=1 // pred_check_branch
      %56 = sbr.rel (0) target = $region13
    $region12: #{tpu_custom_call.1} parent=1 // pred_region
      %s58 = ssub.s32 6144, 6144
      %59 = vsyncadd [#allocation6], %s58
      %s60 = sshll.u32 [#allocation7], 4
      %s61 = int_to_ptr.vmem [resolvable:$true] %s60
      %66 = dma.hbm_to_vmem [thread:$0]  %s2, 6144, %s61, [#allocation6], 256, 256, 16
    $region13: #{tpu_custom_call.1} parent=1 // pred_fallthru
      _
    // Predicated region
    $region14: #{tpu_custom_call.1} parent=1 // pred_check
      _
    $region15: #{tpu_custom_call.1} parent=1 // pred_check_branch
      %68 = sbr.rel (0) target = $region17
    $region16: #{tpu_custom_call.1} parent=1 // pred_region
      %s70 = ssub.s32 32, 32
      %71 = vsyncadd [#allocation9], %s70
      %s73 = sshll.u32 [#allocation8], 4
      %s74 = int_to_ptr.vmem [resolvable:$true] %s73
      %76 = dma.hbm_to_vmem [thread:$0]  %s3, 32, %s74, [#allocation9]
    $region17: #{tpu_custom_call.1} parent=1 // pred_fallthru
      _
    // Predicated region
    $region18: #{tpu_custom_call.1} parent=1 // pred_check
      _
    $region19: #{tpu_custom_call.1} parent=1 // pred_check_branch
      %78 = sbr.rel (0) target = $region21
    $region20: #{tpu_custom_call.1} parent=1 // pred_region
      %s80 = ssub.s32 4096, 4096
      %81 = vsyncadd [#allocation9], %s80
      %s82 = sshll.u32 [#allocation10], 4
      %s83 = int_to_ptr.vmem [resolvable:$true] %s82
      %88 = dma.hbm_to_vmem [thread:$0]  %s4, 4096, %s83, [#allocation9], 128, 128, 8
    $region21: #{tpu_custom_call.1} parent=1 // pred_fallthru
      _
    // Predicated region
    $region22: #{tpu_custom_call.1} parent=1 // pred_check
      _
    $region23: #{tpu_custom_call.1} parent=1 // pred_check_branch
      %90 = sbr.rel (0) target = $region25
    $region24: #{tpu_custom_call.1} parent=1 // pred_region
      %s92 = ssub.s32 16, 16
      %93 = vsyncadd [#allocation12], %s92
      %s95 = sshll.u32 [#allocation11], 4
      %s96 = int_to_ptr.vmem [resolvable:$true] %s95
      %98 = dma.hbm_to_vmem [thread:$0]  %s5, 16, %s96, [#allocation12]
    $region25: #{tpu_custom_call.1} parent=1 // pred_fallthru
      _
    // Predicated region
    $region26: #{tpu_custom_call.1} parent=1 // pred_check
      _
    $region27: #{tpu_custom_call.1} parent=1 // pred_check_branch
      %100 = sbr.rel (0) target = $region29
    $region28: #{tpu_custom_call.1} parent=1 // pred_region
      %s102 = ssub.s32 2048, 2048
      %103 = vsyncadd [#allocation12], %s102
      %s104 = sshll.u32 [#allocation13], 4
      %s105 = int_to_ptr.vmem [resolvable:$true] %s104
      %110 = dma.hbm_to_vmem [thread:$0]  %s6, 2048, %s105, [#allocation12], 128, 128, 8
    $region29: #{tpu_custom_call.1} parent=1 // pred_fallthru
      _
    // Predicated region
    $region30: #{tpu_custom_call.1} parent=1 // pred_check
      _
    $region31: #{tpu_custom_call.1} parent=1 // pred_check_branch
      %112 = sbr.rel (0) target = $region33
    $region32: #{tpu_custom_call.1} parent=1 // pred_region
      %s114 = ssub.s32 16, 16
      %115 = vsyncadd [#allocation15], %s114
      %s117 = sshll.u32 [#allocation14], 4
      %s118 = int_to_ptr.vmem [resolvable:$true] %s117
      %120 = dma.hbm_to_vmem [thread:$0]  %s7, 16, %s118, [#allocation15]
    $region33: #{tpu_custom_call.1} parent=1 // pred_fallthru
      _
    // Predicated region
    $region34: #{tpu_custom_call.1} parent=1 // pred_check
      _
    $region35: #{tpu_custom_call.1} parent=1 // pred_check_branch
      %122 = sbr.rel (0) target = $region37
    $region36: #{tpu_custom_call.1} parent=1 // pred_region
      %s124 = ssub.s32 3072, 3072
      %125 = vsyncadd [#allocation15], %s124
      %s126 = sshll.u32 [#allocation16], 4
      %s127 = int_to_ptr.vmem [resolvable:$true] %s126
      %132 = dma.hbm_to_vmem [thread:$0]  %s8, 3072, %s127, [#allocation15], 128, 128, 8
    $region37: #{tpu_custom_call.1} parent=1 // pred_fallthru
      _
    // Predicated region
    $region38: #{tpu_custom_call.1} parent=1 // pred_check
      _
    $region39: #{tpu_custom_call.1} parent=1 // pred_check_branch
      %134 = sbr.rel (0) target = $region41
    $region40: #{tpu_custom_call.1} parent=1 // pred_region
      %s136 = ssub.s32 16, 16
      %137 = vsyncadd [#allocation18], %s136
      %s139 = sshll.u32 [#allocation17], 4
      %s140 = int_to_ptr.vmem [resolvable:$true] %s139
      %142 = dma.hbm_to_vmem [thread:$0]  %s9, 16, %s140, [#allocation18]
    $region41: #{tpu_custom_call.1} parent=1 // pred_fallthru
      _
    // Predicated region
    $region42: #{tpu_custom_call.1} parent=1 // pred_check
      _
    $region43: #{tpu_custom_call.1} parent=1 // pred_check_branch
      %144 = sbr.rel (0) target = $region45
    $region44: #{tpu_custom_call.1} parent=1 // pred_region
      %s146 = ssub.s32 8192, 8192
      %147 = vsyncadd [#allocation18], %s146
      %s148 = sshll.u32 [#allocation19], 4
      %s149 = int_to_ptr.vmem [resolvable:$true] %s148
      %154 = dma.hbm_to_vmem [thread:$0]  %s10, 8192, %s149, [#allocation18], 512, 512, 32
    $region45: #{tpu_custom_call.1} parent=1 // pred_fallthru
      _
    // Predicated region
    $region46: #{tpu_custom_call.1} parent=1 // pred_check
      _
    $region47: #{tpu_custom_call.1} parent=1 // pred_check_branch
      %156 = sbr.rel (0) target = $region49
    $region48: #{tpu_custom_call.1} parent=1 // pred_region
      %s158 = ssub.s32 128, 128
      %159 = vsyncadd [#allocation21], %s158
      %s161 = sshll.u32 [#allocation20], 4
      %s162 = int_to_ptr.vmem [resolvable:$true] %s161
      %164 = dma.hbm_to_vmem [thread:$0]  %s11, 128, %s162, [#allocation21]
    $region49: #{tpu_custom_call.1} parent=1 // pred_fallthru
      _
    // Predicated region
    $region50: #{tpu_custom_call.1} parent=1 // pred_check
      _
    $region51: #{tpu_custom_call.1} parent=1 // pred_check_branch
      %166 = sbr.rel (0) target = $region53
    $region52: #{tpu_custom_call.1} parent=1 // pred_region
      %s168 = ssub.s32 12288, 12288
      %169 = vsyncadd [#allocation21], %s168
      %s170 = sshll.u32 [#allocation22], 4
      %s171 = int_to_ptr.vmem [resolvable:$true] %s170
      %176 = dma.hbm_to_vmem [thread:$0]  %s12, 12288, %s171, [#allocation21], 192, 192, 12
    $region53: #{tpu_custom_call.1} parent=1 // pred_fallthru
      _
    // Predicated region
    $region54: #{tpu_custom_call.1} parent=1 // pred_check
      _
    $region55: #{tpu_custom_call.1} parent=1 // pred_check_branch
      %178 = sbr.rel (0) target = $region57
    $region56: #{tpu_custom_call.1} parent=1 // pred_region
      %s180 = ssub.s32 12288, 12288
      %181 = vsyncadd [#allocation24], %s180
      %s182 = sshll.u32 [#allocation23], 4
      %s183 = int_to_ptr.vmem [resolvable:$true] %s182
      %188 = dma.hbm_to_vmem [thread:$0]  %s13, 12288, %s183, [#allocation24], 192, 192, 12
    $region57: #{tpu_custom_call.1} parent=1 // pred_fallthru
      _
    // Predicated region
    $region58: #{tpu_custom_call.1} parent=1 // pred_check
      _
    $region59: #{tpu_custom_call.1} parent=1 // pred_check_branch
      %190 = sbr.rel (0) target = $region61
    $region60: #{tpu_custom_call.1} parent=1 // pred_region
      %s192 = ssub.s32 192, 192
      %193 = vsyncadd [#allocation24], %s192
      %s195 = sshll.u32 [#allocation25], 4
      %s196 = int_to_ptr.vmem [resolvable:$true] %s195
      %198 = dma.hbm_to_vmem [thread:$0]  %s14, 192, %s196, [#allocation24]
    $region61: #{tpu_custom_call.1} parent=1 // pred_fallthru
      _
    // Predicated region
    $region62: #{tpu_custom_call.1} parent=1 // pred_check
      _
    $region63: #{tpu_custom_call.1} parent=1 // pred_check_branch
      %200 = sbr.rel (0) target = $region65
    $region64: #{tpu_custom_call.1} parent=1 // pred_region
      %s202 = ssub.s32 96, 96
      %203 = vsyncadd [#allocation27], %s202
      %s205 = sshll.u32 [#allocation26], 4
      %s206 = int_to_ptr.vmem [resolvable:$true] %s205
      %208 = dma.hbm_to_vmem [thread:$0]  %s15, 96, %s206, [#allocation27]
    $region65: #{tpu_custom_call.1} parent=1 // pred_fallthru
      _
    // Predicated region
    $region66: #{tpu_custom_call.1} parent=1 // pred_check
      _
    $region67: #{tpu_custom_call.1} parent=1 // pred_check_branch
      %210 = sbr.rel (0) target = $region69
    $region68: #{tpu_custom_call.1} parent=1 // pred_region
      %s212 = ssub.s32 48, 48
      %213 = vsyncadd [#allocation27], %s212
      %s215 = sshll.u32 [#allocation28], 4
      %s216 = int_to_ptr.vmem [resolvable:$true] %s215
      %218 = dma.hbm_to_vmem [thread:$0]  %s16, 48, %s216, [#allocation27]
    $region69: #{tpu_custom_call.1} parent=1 // pred_fallthru
      _
    // Predicated region
    $region70: #{tpu_custom_call.1} parent=1 // pred_check
      _
    $region71: #{tpu_custom_call.1} parent=1 // pred_check_branch
      %220 = sbr.rel (0) target = $region73
    $region72: #{tpu_custom_call.1} parent=1 // pred_region
      %s222 = ssub.s32 48, 48
      %223 = vsyncadd [#allocation30], %s222
      %s225 = sshll.u32 [#allocation29], 4
      %s226 = int_to_ptr.vmem [resolvable:$true] %s225
      %228 = dma.hbm_to_vmem [thread:$0]  %s17, 48, %s226, [#allocation30]
    $region73: #{tpu_custom_call.1} parent=1 // pred_fallthru
      _
    // Predicated region
    $region74: #{tpu_custom_call.1} parent=1 // pred_check
      _
    $region75: #{tpu_custom_call.1} parent=1 // pred_check_branch
      %230 = sbr.rel (0) target = $region77
    $region76: #{tpu_custom_call.1} parent=1 // pred_region
      %s232 = ssub.s32 16, 16
      %233 = vsyncadd [#allocation30], %s232
      %s235 = sshll.u32 [#allocation31], 4
      %s236 = int_to_ptr.vmem [resolvable:$true] %s235
      %238 = dma.hbm_to_vmem [thread:$0]  %s18, 16, %s236, [#allocation30]
    $region77: #{tpu_custom_call.1} parent=1 // pred_fallthru
      _
    // Predicated region
    $region78: #{tpu_custom_call.1} parent=1 // pred_check
      _
    $region79: #{tpu_custom_call.1} parent=1 // pred_check_branch
      %240 = sbr.rel (0) target = $region81
    $region80: #{tpu_custom_call.1} parent=1 // pred_region
      %241 = dma.done [#allocation3], 256
    $region81: #{tpu_custom_call.1} parent=1 // pred_fallthru
      _
    // Predicated region
    $region82: #{tpu_custom_call.1} parent=1 // pred_check
      _
    $region83: #{tpu_custom_call.1} parent=1 // pred_check_branch
      %243 = sbr.rel (0) target = $region85
    $region84: #{tpu_custom_call.1} parent=1 // pred_region
      %244 = dma.done [#allocation6], 128
    $region85: #{tpu_custom_call.1} parent=1 // pred_fallthru
      _
    // Predicated region
    $region86: #{tpu_custom_call.1} parent=1 // pred_check
      _
    $region87: #{tpu_custom_call.1} parent=1 // pred_check_branch
      %246 = sbr.rel (0) target = $region89
    $region88: #{tpu_custom_call.1} parent=1 // pred_region
      %247 = dma.done [#allocation6], 6144
    $region89: #{tpu_custom_call.1} parent=1 // pred_fallthru
      _
    // Predicated region
    $region90: #{tpu_custom_call.1} parent=1 // pred_check
      _
    $region91: #{tpu_custom_call.1} parent=1 // pred_check_branch
      %249 = sbr.rel (0) target = $region93
    $region92: #{tpu_custom_call.1} parent=1 // pred_region
      %250 = dma.done [#allocation9], 32
    $region93: #{tpu_custom_call.1} parent=1 // pred_fallthru
      _
    // Predicated region
    $region94: #{tpu_custom_call.1} parent=1 // pred_check
      _
    $region95: #{tpu_custom_call.1} parent=1 // pred_check_branch
      %252 = sbr.rel (0) target = $region97
    $region96: #{tpu_custom_call.1} parent=1 // pred_region
      %253 = dma.done [#allocation9], 4096
    $region97: #{tpu_custom_call.1} parent=1 // pred_fallthru
      _
    // Predicated region
    $region98: #{tpu_custom_call.1} parent=1 // pred_check
      _
    $region99: #{tpu_custom_call.1} parent=1 // pred_check_branch
      %255 = sbr.rel (0) target = $region101
    $region100: #{tpu_custom_call.1} parent=1 // pred_region
      %256 = dma.done [#allocation12], 16
    $region101: #{tpu_custom_call.1} parent=1 // pred_fallthru
      _
    // Predicated region
    $region102: #{tpu_custom_call.1} parent=1 // pred_check
      _
    $region103: #{tpu_custom_call.1} parent=1 // pred_check_branch
      %258 = sbr.rel (0) target = $region105
    $region104: #{tpu_custom_call.1} parent=1 // pred_region
      %259 = dma.done [#allocation12], 2048
    $region105: #{tpu_custom_call.1} parent=1 // pred_fallthru
      _
    // Predicated region
    $region106: #{tpu_custom_call.1} parent=1 // pred_check
      _
    $region107: #{tpu_custom_call.1} parent=1 // pred_check_branch
      %261 = sbr.rel (0) target = $region109
    $region108: #{tpu_custom_call.1} parent=1 // pred_region
      %262 = dma.done [#allocation15], 16
    $region109: #{tpu_custom_call.1} parent=1 // pred_fallthru
      _
    // Predicated region
    $region110: #{tpu_custom_call.1} parent=1 // pred_check
      _
    $region111: #{tpu_custom_call.1} parent=1 // pred_check_branch
      %264 = sbr.rel (0) target = $region113
    $region112: #{tpu_custom_call.1} parent=1 // pred_region
      %265 = dma.done [#allocation15], 3072
    $region113: #{tpu_custom_call.1} parent=1 // pred_fallthru
      _
    // Predicated region
    $region114: #{tpu_custom_call.1} parent=1 // pred_check
      _
    $region115: #{tpu_custom_call.1} parent=1 // pred_check_branch
      %267 = sbr.rel (0) target = $region117
    $region116: #{tpu_custom_call.1} parent=1 // pred_region
      %268 = dma.done [#allocation18], 16
    $region117: #{tpu_custom_call.1} parent=1 // pred_fallthru
      _
    // Predicated region
    $region118: #{tpu_custom_call.1} parent=1 // pred_check
      _
    $region119: #{tpu_custom_call.1} parent=1 // pred_check_branch
      %270 = sbr.rel (0) target = $region121
    $region120: #{tpu_custom_call.1} parent=1 // pred_region
      %271 = dma.done [#allocation18], 8192
    $region121: #{tpu_custom_call.1} parent=1 // pred_fallthru
      _
    // Predicated region
    $region122: #{tpu_custom_call.1} parent=1 // pred_check
      _
    $region123: #{tpu_custom_call.1} parent=1 // pred_check_branch
      %273 = sbr.rel (0) target = $region125
    $region124: #{tpu_custom_call.1} parent=1 // pred_region
      %274 = dma.done [#allocation21], 128
    $region125: #{tpu_custom_call.1} parent=1 // pred_fallthru
      _
    // Predicated region
    $region126: #{tpu_custom_call.1} parent=1 // pred_check
      _
    $region127: #{tpu_custom_call.1} parent=1 // pred_check_branch
      %276 = sbr.rel (0) target = $region129
    $region128: #{tpu_custom_call.1} parent=1 // pred_region
      %277 = dma.done [#allocation21], 12288
    $region129: #{tpu_custom_call.1} parent=1 // pred_fallthru
      _
    // Predicated region
    $region130: #{tpu_custom_call.1} parent=1 // pred_check
      _
    $region131: #{tpu_custom_call.1} parent=1 // pred_check_branch
      %279 = sbr.rel (0) target = $region133
    $region132: #{tpu_custom_call.1} parent=1 // pred_region
      %280 = dma.done [#allocation24], 12288
    $region133: #{tpu_custom_call.1} parent=1 // pred_fallthru
      _
    // Predicated region
    $region134: #{tpu_custom_call.1} parent=1 // pred_check
      _
    $region135: #{tpu_custom_call.1} parent=1 // pred_check_branch
      %282 = sbr.rel (0) target = $region137
    $region136: #{tpu_custom_call.1} parent=1 // pred_region
      %283 = dma.done [#allocation24], 192
    $region137: #{tpu_custom_call.1} parent=1 // pred_fallthru
      _
    // Predicated region
    $region138: #{tpu_custom_call.1} parent=1 // pred_check
      _
    $region139: #{tpu_custom_call.1} parent=1 // pred_check_branch
      %285 = sbr.rel (0) target = $region141
    $region140: #{tpu_custom_call.1} parent=1 // pred_region
      %286 = dma.done [#allocation27], 96
    $region141: #{tpu_custom_call.1} parent=1 // pred_fallthru
      _
    // Predicated region
    $region142: #{tpu_custom_call.1} parent=1 // pred_check
      _
    $region143: #{tpu_custom_call.1} parent=1 // pred_check_branch
      %288 = sbr.rel (0) target = $region145
    $region144: #{tpu_custom_call.1} parent=1 // pred_region
      %289 = dma.done [#allocation27], 48
    $region145: #{tpu_custom_call.1} parent=1 // pred_fallthru
      _
    // Predicated region
    $region146: #{tpu_custom_call.1} parent=1 // pred_check
      _
    $region147: #{tpu_custom_call.1} parent=1 // pred_check_branch
      %291 = sbr.rel (0) target = $region149
    $region148: #{tpu_custom_call.1} parent=1 // pred_region
      %292 = dma.done [#allocation30], 48
    $region149: #{tpu_custom_call.1} parent=1 // pred_fallthru
      _
    // Predicated region
    $region150: #{tpu_custom_call.1} parent=1 // pred_check
      _
    $region151: #{tpu_custom_call.1} parent=1 // pred_check_branch
      %294 = sbr.rel (0) target = $region153
    $region152: #{tpu_custom_call.1} parent=1 // pred_region
      %295 = dma.done [#allocation30], 16
    $region153: #{tpu_custom_call.1} parent=1 // pred_fallthru
      _
    %v297 = vld [vmem:[#allocation2] sm:$0xff]
    %v298 = vld [vmem:[#allocation2 + $0x8] sm:$0xff]
    %v299 = vld [vmem:[#allocation7] sm:$0xff]
    %v300 = vld [vmem:[#allocation7 + $0x8] sm:$0xff]
    %v301 = vld [vmem:[#allocation7 + $0x10] sm:$0xff]
    %v302 = vld [vmem:[#allocation7 + $0x18] sm:$0xff]
    %v303 = vld [vmem:[#allocation7 + $0x20] sm:$0xff]
    %v304 = vld [vmem:[#allocation7 + $0x28] sm:$0xff]
    %v305 = vld [vmem:[#allocation7 + $0x30] sm:$0xff]
    %v306 = vld [vmem:[#allocation7 + $0x38] sm:$0xff]
    %v307 = vld [vmem:[#allocation7 + $0x40] sm:$0xff]
    %v308 = vld [vmem:[#allocation7 + $0x48] sm:$0xff]
    %v309 = vld [vmem:[#allocation7 + $0x50] sm:$0xff]
    %v310 = vld [vmem:[#allocation7 + $0x58] sm:$0xff]
    %v311 = vld [vmem:[#allocation7 + $0x60] sm:$0xff]
    %v312 = vld [vmem:[#allocation7 + $0x68] sm:$0xff]
    %v313 = vld [vmem:[#allocation7 + $0x70] sm:$0xff]
    %v314 = vld [vmem:[#allocation7 + $0x78] sm:$0xff]
    %v315 = vld [vmem:[#allocation7 + $0x80] sm:$0xff]
    %v316 = vld [vmem:[#allocation7 + $0x88] sm:$0xff]
    %v317 = vld [vmem:[#allocation7 + $0x90] sm:$0xff]
    %v318 = vld [vmem:[#allocation7 + $0x98] sm:$0xff]
    %v319 = vld [vmem:[#allocation7 + $0xa0] sm:$0xff]
    %v320 = vld [vmem:[#allocation7 + $0xa8] sm:$0xff]
    %v321 = vld [vmem:[#allocation7 + $0xb0] sm:$0xff]
    %v322 = vld [vmem:[#allocation7 + $0xb8] sm:$0xff]
    %v323 = vld [vmem:[#allocation7 + $0xc0] sm:$0xff]
    %v324 = vld [vmem:[#allocation7 + $0xc8] sm:$0xff]
    %v325 = vld [vmem:[#allocation7 + $0xd0] sm:$0xff]
    %v326 = vld [vmem:[#allocation7 + $0xd8] sm:$0xff]
    %v327 = vld [vmem:[#allocation7 + $0xe0] sm:$0xff]
    %v328 = vld [vmem:[#allocation7 + $0xe8] sm:$0xff]
    %v329 = vld [vmem:[#allocation7 + $0xf0] sm:$0xff]
    %v330 = vld [vmem:[#allocation7 + $0xf8] sm:$0xff]
    %v331 = vld [vmem:[#allocation7 + $0x100] sm:$0xff]
    %v332 = vld [vmem:[#allocation7 + $0x108] sm:$0xff]
    %v333 = vld [vmem:[#allocation7 + $0x110] sm:$0xff]
    %v334 = vld [vmem:[#allocation7 + $0x118] sm:$0xff]
    %v335 = vld [vmem:[#allocation7 + $0x120] sm:$0xff]
    %v336 = vld [vmem:[#allocation7 + $0x128] sm:$0xff]
    %v337 = vld [vmem:[#allocation7 + $0x130] sm:$0xff]
    %v338 = vld [vmem:[#allocation7 + $0x138] sm:$0xff]
    %v339 = vld [vmem:[#allocation7 + $0x140] sm:$0xff]
    %v340 = vld [vmem:[#allocation7 + $0x148] sm:$0xff]
    %v341 = vld [vmem:[#allocation7 + $0x150] sm:$0xff]
    %v342 = vld [vmem:[#allocation7 + $0x158] sm:$0xff]
    %v343 = vld [vmem:[#allocation7 + $0x160] sm:$0xff]
    %v344 = vld [vmem:[#allocation7 + $0x168] sm:$0xff]
    %v345 = vld [vmem:[#allocation7 + $0x170] sm:$0x1]
    %v346 = vld [vmem:[#allocation7 + $0x178] sm:$0x1]
    %v347 = vld [vmem:[#allocation8] sm:$0x3]
    %v349 = vlaneseq
    %v350 = vshrl.u32 %v349, 7
    %v351 = vsub.s32 0, %v350
    %v352 = vrot.slane %v347, %v351
    %v353 = vlaneseq
    %v354 = vshrl.u32 %v353, 7
    %v355 = vsub.s32 1, %v354
    %v356 = vrot.slane %v347, %v355
    %vm359 = vcmask 465920
    %v361 = vsel %vm359, %v298, 0
    %vm363 = vcmask 1040384
    %v365 = vsel %vm363, %v345, 0
    %v368 = vsel %vm363, %v346, 0
    %370 = vmatprep.subr.mxu0 %v300
    %371 = vmatpush1.msra.mxu0 %v299
    %372 = vmatprep.subr.mxu0 %v302
    %373 = vmatpush1.msra.mxu0 %v301
    %374 = vmatprep.subr.mxu0 %v304
    %375 = vmatpush1.msra.mxu0 %v303
    %376 = vmatprep.subr.mxu0 %v306
    %377 = vmatpush1.msra.mxu0 %v305
    %378 = vmatprep.subr.mxu0 %v308
    %379 = vmatpush1.msra.mxu0 %v307
    %380 = vmatprep.subr.mxu0 %v310
    %381 = vmatpush1.msra.mxu0 %v309
    %382 = vmatprep.subr.mxu0 %v312
    %383 = vmatpush1.msra.mxu0 %v311
    %384 = vmatprep.subr.mxu0 %v314
    %385 = vmatpush1.msra.mxu0 %v313
    %386 = vmatprep.subr.mxu0 %v316
    %387 = vmatpush1.msra.mxu0 %v315
    %388 = vmatprep.subr.mxu0 %v318
    %389 = vmatpush1.msra.mxu0 %v317
    %390 = vmatprep.subr.mxu0 %v320
    %391 = vmatpush1.msra.mxu0 %v319
    %392 = vmatprep.subr.mxu0 %v322
    %393 = vmatpush1.msra.mxu0 %v321
    %394 = vmatprep.subr.mxu0 %v324
    %395 = vmatpush1.msra.mxu0 %v323
    %396 = vmatprep.subr.mxu0 %v326
    %397 = vmatpush1.msra.mxu0 %v325
    %398 = vmatprep.subr.mxu0 %v328
    %399 = vmatpush1.msra.mxu0 %v327
    %400 = vmatprep.subr.mxu0 %v330
    %401 = vmatpush1.msra.mxu0 %v329
    %402 = vmatprep.subr.mxu0 %v332
    %403 = vmatpush1.msra.mxu0 %v331
    %404 = vmatprep.subr.mxu0 %v334
    %405 = vmatpush1.msra.mxu0 %v333
    %406 = vmatprep.subr.mxu0 %v336
    %407 = vmatpush1.msra.mxu0 %v335
    %408 = vmatprep.subr.mxu0 %v338
    %409 = vmatpush1.msra.mxu0 %v337
    %410 = vmatprep.subr.mxu0 %v340
    %411 = vmatpush1.msra.mxu0 %v339
    %412 = vmatprep.subr.mxu0 %v342
    %413 = vmatpush1.msra.mxu0 %v341
    %414 = vmatprep.subr.mxu0 %v344
    %415 = vmatpush1.msra.mxu0 %v343
    %416 = vmatprep.subr.mxu0 %v368
    %417 = vmatpush1.msra.mxu0 %v365
    %418 = vmatprep.subr.mxu0 0.0
    %419 = vmatpush1.msra.mxu0 0.0
    %420 = vmatprep.subr.mxu0 0.0
    %421 = vmatpush1.msra.mxu0 0.0
    %422 = vmatprep.subr.mxu0 0.0
    %423 = vmatpush1.msra.mxu0 0.0
    %424 = vmatprep.subr.mxu0 0.0
    %425 = vmatpush1.msra.mxu0 0.0
    %426 = vmatprep.subr.mxu0 0.0
    %427 = vmatpush1.msra.mxu0 0.0
    %428 = vmatprep.subr.mxu0 0.0
    %429 = vmatpush1.msra.mxu0 0.0
    %430 = vmatprep.subr.mxu0 0.0
    %431 = vmatpush1.msra.mxu0 0.0
    %432 = vmatprep.subr.mxu0 0.0
    %433 = vmatpush1.msra.mxu0 0.0
    %434 = vmatprep.mubr.f32.mxu0 %v361
    %435 = vmatmul.mubr.f32.gmra.mrb[0].mxu0 %v297
    %v436 = vpop.f32.mrb[0].mxu0
    %v437 = vadd.f32 %v352, %v436
    %v438 = vpop.f32.mrb[0].mxu0
    %v439 = vadd.f32 %v356, %v438
    %440 = vdwg.mxu0
    %vm441 = vcmp.gt.f32.partialorder %v437, 0.0
    %vm442 = vcmp.gt.f32.partialorder %v439, 0.0
    %v443 = vmul.f32 %v437, 0.01
    %v444 = vmul.f32 %v439, 0.01
    %v445 = vsel %vm441, %v437, %v443
    %v446 = vsel %vm442, %v439, %v444
    %v447 = vld [vmem:[#allocation10] sm:$0xff]
    %v448 = vld [vmem:[#allocation10 + $0x8] sm:$0xff]
    %v449 = vld [vmem:[#allocation10 + $0x10] sm:$0xff]
    %v450 = vld [vmem:[#allocation10 + $0x18] sm:$0xff]
    %v451 = vld [vmem:[#allocation10 + $0x20] sm:$0xff]
    %v452 = vld [vmem:[#allocation10 + $0x28] sm:$0xff]
    %v453 = vld [vmem:[#allocation10 + $0x30] sm:$0xff]
    %v454 = vld [vmem:[#allocation10 + $0x38] sm:$0xff]
    %v455 = vld [vmem:[#allocation10 + $0x40] sm:$0xff]
    %v456 = vld [vmem:[#allocation10 + $0x48] sm:$0xff]
    %v457 = vld [vmem:[#allocation10 + $0x50] sm:$0xff]
    %v458 = vld [vmem:[#allocation10 + $0x58] sm:$0xff]
    %v459 = vld [vmem:[#allocation10 + $0x60] sm:$0xff]
    %v460 = vld [vmem:[#allocation10 + $0x68] sm:$0xff]
    %v461 = vld [vmem:[#allocation10 + $0x70] sm:$0xff]
    %v462 = vld [vmem:[#allocation10 + $0x78] sm:$0xff]
    %v463 = vld [vmem:[#allocation10 + $0x80] sm:$0xff]
    %v464 = vld [vmem:[#allocation10 + $0x88] sm:$0xff]
    %v465 = vld [vmem:[#allocation10 + $0x90] sm:$0xff]
    %v466 = vld [vmem:[#allocation10 + $0x98] sm:$0xff]
    %v467 = vld [vmem:[#allocation10 + $0xa0] sm:$0xff]
    %v468 = vld [vmem:[#allocation10 + $0xa8] sm:$0xff]
    %v469 = vld [vmem:[#allocation10 + $0xb0] sm:$0xff]
    %v470 = vld [vmem:[#allocation10 + $0xb8] sm:$0xff]
    %v471 = vld [vmem:[#allocation10 + $0xc0] sm:$0xff]
    %v472 = vld [vmem:[#allocation10 + $0xc8] sm:$0xff]
    %v473 = vld [vmem:[#allocation10 + $0xd0] sm:$0xff]
    %v474 = vld [vmem:[#allocation10 + $0xd8] sm:$0xff]
    %v475 = vld [vmem:[#allocation10 + $0xe0] sm:$0xff]
    %v476 = vld [vmem:[#allocation10 + $0xe8] sm:$0xff]
    %v477 = vld [vmem:[#allocation10 + $0xf0] sm:$0xff]
    %v478 = vld [vmem:[#allocation10 + $0xf8] sm:$0xff]
    %v479 = vld [vmem:[#allocation11] sm:$0x1]
    %v481 = vlaneseq
    %v482 = vshrl.u32 %v481, 7
    %v483 = vsub.s32 0, %v482
    %v484 = vrot.slane %v479, %v483
    %486 = vmatprep.subr.mxu0 0.0
    %487 = vmatpush1.msra.mxu0 %v447
    %488 = vmatprep.subr.mxu0 0.0
    %489 = vmatpush1.msra.mxu0 %v448
    %490 = vmatprep.subr.mxu0 0.0
    %491 = vmatpush1.msra.mxu0 %v449
    %492 = vmatprep.subr.mxu0 0.0
    %493 = vmatpush1.msra.mxu0 %v450
    %494 = vmatprep.subr.mxu0 0.0
    %495 = vmatpush1.msra.mxu0 %v451
    %496 = vmatprep.subr.mxu0 0.0
    %497 = vmatpush1.msra.mxu0 %v452
    %498 = vmatprep.subr.mxu0 0.0
    %499 = vmatpush1.msra.mxu0 %v453
    %500 = vmatprep.subr.mxu0 0.0
    %501 = vmatpush1.msra.mxu0 %v454
    %502 = vmatprep.subr.mxu0 0.0
    %503 = vmatpush1.msra.mxu0 %v455
    %504 = vmatprep.subr.mxu0 0.0
    %505 = vmatpush1.msra.mxu0 %v456
    %506 = vmatprep.subr.mxu0 0.0
    %507 = vmatpush1.msra.mxu0 %v457
    %508 = vmatprep.subr.mxu0 0.0
    %509 = vmatpush1.msra.mxu0 %v458
    %510 = vmatprep.subr.mxu0 0.0
    %511 = vmatpush1.msra.mxu0 %v459
    %512 = vmatprep.subr.mxu0 0.0
    %513 = vmatpush1.msra.mxu0 %v460
    %514 = vmatprep.subr.mxu0 0.0
    %515 = vmatpush1.msra.mxu0 %v461
    %516 = vmatprep.subr.mxu0 0.0
    %517 = vmatpush1.msra.mxu0 %v462
    %518 = vmatprep.subr.mxu0 0.0
    %519 = vmatpush1.msra.mxu0 %v463
    %520 = vmatprep.subr.mxu0 0.0
    %521 = vmatpush1.msra.mxu0 %v464
    %522 = vmatprep.subr.mxu0 0.0
    %523 = vmatpush1.msra.mxu0 %v465
    %524 = vmatprep.subr.mxu0 0.0
    %525 = vmatpush1.msra.mxu0 %v466
    %526 = vmatprep.subr.mxu0 0.0
    %527 = vmatpush1.msra.mxu0 %v467
    %528 = vmatprep.subr.mxu0 0.0
    %529 = vmatpush1.msra.mxu0 %v468
    %530 = vmatprep.subr.mxu0 0.0
    %531 = vmatpush1.msra.mxu0 %v469
    %532 = vmatprep.subr.mxu0 0.0
    %533 = vmatpush1.msra.mxu0 %v470
    %534 = vmatprep.subr.mxu0 0.0
    %535 = vmatpush1.msra.mxu0 %v471
    %536 = vmatprep.subr.mxu0 0.0
    %537 = vmatpush1.msra.mxu0 %v472
    %538 = vmatprep.subr.mxu0 0.0
    %539 = vmatpush1.msra.mxu0 %v473
    %540 = vmatprep.subr.mxu0 0.0
    %541 = vmatpush1.msra.mxu0 %v474
    %542 = vmatprep.subr.mxu0 0.0
    %543 = vmatpush1.msra.mxu0 %v475
    %544 = vmatprep.subr.mxu0 0.0
    %545 = vmatpush1.msra.mxu0 %v476
    %546 = vmatprep.subr.mxu0 0.0
    %547 = vmatpush1.msra.mxu0 %v477
    %548 = vmatprep.subr.mxu0 0.0
    %549 = vmatpush1.msra.mxu0 %v478
    %550 = vmatprep.mubr.f32.mxu0 %v446
    %551 = vmatmul.mubr.f32.gmra.mrb[0].mxu0 %v445
    %v552 = vpop.f32.mrb[0].mxu0
    %v553 = vadd.f32 %v484, %v552
    %v554 = vpop.f32.mrb[0].mxu0
    %555 = vdwg.mxu0
    %vm556 = vcmp.gt.f32.partialorder %v553, 0.0
    %v557 = vmul.f32 %v553, 0.01
    %v558 = vsel %vm556, %v553, %v557
    %v559 = vld [vmem:[#allocation13] sm:$0xff]
    %v560 = vld [vmem:[#allocation13 + $0x8] sm:$0xff]
    %v561 = vld [vmem:[#allocation13 + $0x10] sm:$0xff]
    %v562 = vld [vmem:[#allocation13 + $0x18] sm:$0xff]
    %v563 = vld [vmem:[#allocation13 + $0x20] sm:$0xff]
    %v564 = vld [vmem:[#allocation13 + $0x28] sm:$0xff]
    %v565 = vld [vmem:[#allocation13 + $0x30] sm:$0xff]
    %v566 = vld [vmem:[#allocation13 + $0x38] sm:$0xff]
    %v567 = vld [vmem:[#allocation13 + $0x40] sm:$0xff]
    %v568 = vld [vmem:[#allocation13 + $0x48] sm:$0xff]
    %v569 = vld [vmem:[#allocation13 + $0x50] sm:$0xff]
    %v570 = vld [vmem:[#allocation13 + $0x58] sm:$0xff]
    %v571 = vld [vmem:[#allocation13 + $0x60] sm:$0xff]
    %v572 = vld [vmem:[#allocation13 + $0x68] sm:$0xff]
    %v573 = vld [vmem:[#allocation13 + $0x70] sm:$0xff]
    %v574 = vld [vmem:[#allocation13 + $0x78] sm:$0xff]
    %v575 = vld [vmem:[#allocation14] sm:$0x1]
    %v577 = vlaneseq
    %v578 = vshrl.u32 %v577, 7
    %v579 = vsub.s32 0, %v578
    %v580 = vrot.slane %v575, %v579
    %582 = vmatprep.subr.mxu0 0.0
    %583 = vmatpush1.msra.mxu0 %v559
    %584 = vmatprep.subr.mxu0 0.0
    %585 = vmatpush1.msra.mxu0 %v560
    %586 = vmatprep.subr.mxu0 0.0
    %587 = vmatpush1.msra.mxu0 %v561
    %588 = vmatprep.subr.mxu0 0.0
    %589 = vmatpush1.msra.mxu0 %v562
    %590 = vmatprep.subr.mxu0 0.0
    %591 = vmatpush1.msra.mxu0 %v563
    %592 = vmatprep.subr.mxu0 0.0
    %593 = vmatpush1.msra.mxu0 %v564
    %594 = vmatprep.subr.mxu0 0.0
    %595 = vmatpush1.msra.mxu0 %v565
    %596 = vmatprep.subr.mxu0 0.0
    %597 = vmatpush1.msra.mxu0 %v566
    %598 = vmatprep.subr.mxu0 0.0
    %599 = vmatpush1.msra.mxu0 %v567
    %600 = vmatprep.subr.mxu0 0.0
    %601 = vmatpush1.msra.mxu0 %v568
    %602 = vmatprep.subr.mxu0 0.0
    %603 = vmatpush1.msra.mxu0 %v569
    %604 = vmatprep.subr.mxu0 0.0
    %605 = vmatpush1.msra.mxu0 %v570
    %606 = vmatprep.subr.mxu0 0.0
    %607 = vmatpush1.msra.mxu0 %v571
    %608 = vmatprep.subr.mxu0 0.0
    %609 = vmatpush1.msra.mxu0 %v572
    %610 = vmatprep.subr.mxu0 0.0
    %611 = vmatpush1.msra.mxu0 %v573
    %612 = vmatprep.subr.mxu0 0.0
    %613 = vmatpush1.msra.mxu0 %v574
    %614 = vmatprep.subr.mxu0 0.0
    %615 = vmatpush1.msra.mxu0 0.0
    %616 = vmatprep.subr.mxu0 0.0
    %617 = vmatpush1.msra.mxu0 0.0
    %618 = vmatprep.subr.mxu0 0.0
    %619 = vmatpush1.msra.mxu0 0.0
    %620 = vmatprep.subr.mxu0 0.0
    %621 = vmatpush1.msra.mxu0 0.0
    %622 = vmatprep.subr.mxu0 0.0
    %623 = vmatpush1.msra.mxu0 0.0
    %624 = vmatprep.subr.mxu0 0.0
    %625 = vmatpush1.msra.mxu0 0.0
    %626 = vmatprep.subr.mxu0 0.0
    %627 = vmatpush1.msra.mxu0 0.0
    %628 = vmatprep.subr.mxu0 0.0
    %629 = vmatpush1.msra.mxu0 0.0
    %630 = vmatprep.subr.mxu0 0.0
    %631 = vmatpush1.msra.mxu0 0.0
    %632 = vmatprep.subr.mxu0 0.0
    %633 = vmatpush1.msra.mxu0 0.0
    %634 = vmatprep.subr.mxu0 0.0
    %635 = vmatpush1.msra.mxu0 0.0
    %636 = vmatprep.subr.mxu0 0.0
    %637 = vmatpush1.msra.mxu0 0.0
    %638 = vmatprep.subr.mxu0 0.0
    %639 = vmatpush1.msra.mxu0 0.0
    %640 = vmatprep.subr.mxu0 0.0
    %641 = vmatpush1.msra.mxu0 0.0
    %642 = vmatprep.subr.mxu0 0.0
    %643 = vmatpush1.msra.mxu0 0.0
    %644 = vmatprep.subr.mxu0 0.0
    %645 = vmatpush1.msra.mxu0 0.0
    %646 = vmatprep.mubr.f32.mxu0 0.0
    %647 = vmatmul.mubr.f32.gmra.mrb[0].mxu0 %v558
    %v648 = vpop.f32.mrb[0].mxu0
    %v649 = vadd.f32 %v580, %v648
    %v650 = vpop.f32.mrb[0].mxu0
    %651 = vdwg.mxu0
    %vm652 = vcmp.gt.f32.partialorder %v649, 0.0
    %v653 = vmul.f32 %v649, 0.01
    %v654 = vsel %vm652, %v649, %v653
    %v655 = vld [vmem:[#allocation16] sm:$0xff]
    %v656 = vld [vmem:[#allocation16 + $0x8] sm:$0xff]
    %v657 = vld [vmem:[#allocation16 + $0x10] sm:$0xff]
    %v658 = vld [vmem:[#allocation16 + $0x18] sm:$0xff]
    %v659 = vld [vmem:[#allocation16 + $0x20] sm:$0xff]
    %v660 = vld [vmem:[#allocation16 + $0x28] sm:$0xff]
    %v661 = vld [vmem:[#allocation16 + $0x30] sm:$0xff]
    %v662 = vld [vmem:[#allocation16 + $0x38] sm:$0xff]
    %v663 = vld [vmem:[#allocation16 + $0x40] sm:$0xff]
    %v664 = vld [vmem:[#allocation16 + $0x48] sm:$0xff]
    %v665 = vld [vmem:[#allocation16 + $0x50] sm:$0xff]
    %v666 = vld [vmem:[#allocation16 + $0x58] sm:$0xff]
    %v667 = vld [vmem:[#allocation16 + $0x60] sm:$0xff]
    %v668 = vld [vmem:[#allocation16 + $0x68] sm:$0xff]
    %v669 = vld [vmem:[#allocation16 + $0x70] sm:$0xff]
    %v670 = vld [vmem:[#allocation16 + $0x78] sm:$0xff]
    %v671 = vld [vmem:[#allocation16 + $0x80] sm:$0xff]
    %v672 = vld [vmem:[#allocation16 + $0x88] sm:$0xff]
    %v673 = vld [vmem:[#allocation16 + $0x90] sm:$0xff]
    %v674 = vld [vmem:[#allocation16 + $0x98] sm:$0xff]
    %v675 = vld [vmem:[#allocation16 + $0xa0] sm:$0xff]
    %v676 = vld [vmem:[#allocation16 + $0xa8] sm:$0xff]
    %v677 = vld [vmem:[#allocation16 + $0xb0] sm:$0xff]
    %v678 = vld [vmem:[#allocation16 + $0xb8] sm:$0x1]
    %v679 = vld [vmem:[#allocation17] sm:$0x1]
    %v681 = vlaneseq
    %v682 = vshrl.u32 %v681, 7
    %v683 = vsub.s32 0, %v682
    %v684 = vrot.slane %v679, %v683
    %v687 = vsel %vm363, %v678, 0
    %689 = vmatprep.subr.mxu0 0.0
    %690 = vmatpush1.msra.mxu0 %v655
    %691 = vmatprep.subr.mxu0 0.0
    %692 = vmatpush1.msra.mxu0 %v656
    %693 = vmatprep.subr.mxu0 0.0
    %694 = vmatpush1.msra.mxu0 %v657
    %695 = vmatprep.subr.mxu0 0.0
    %696 = vmatpush1.msra.mxu0 %v658
    %697 = vmatprep.subr.mxu0 0.0
    %698 = vmatpush1.msra.mxu0 %v659
    %699 = vmatprep.subr.mxu0 0.0
    %700 = vmatpush1.msra.mxu0 %v660
    %701 = vmatprep.subr.mxu0 0.0
    %702 = vmatpush1.msra.mxu0 %v661
    %703 = vmatprep.subr.mxu0 0.0
    %704 = vmatpush1.msra.mxu0 %v662
    %705 = vmatprep.subr.mxu0 0.0
    %706 = vmatpush1.msra.mxu0 %v663
    %707 = vmatprep.subr.mxu0 0.0
    %708 = vmatpush1.msra.mxu0 %v664
    %709 = vmatprep.subr.mxu0 0.0
    %710 = vmatpush1.msra.mxu0 %v665
    %711 = vmatprep.subr.mxu0 0.0
    %712 = vmatpush1.msra.mxu0 %v666
    %713 = vmatprep.subr.mxu0 0.0
    %714 = vmatpush1.msra.mxu0 %v667
    %715 = vmatprep.subr.mxu0 0.0
    %716 = vmatpush1.msra.mxu0 %v668
    %717 = vmatprep.subr.mxu0 0.0
    %718 = vmatpush1.msra.mxu0 %v669
    %719 = vmatprep.subr.mxu0 0.0
    %720 = vmatpush1.msra.mxu0 %v670
    %721 = vmatprep.subr.mxu0 0.0
    %722 = vmatpush1.msra.mxu0 %v671
    %723 = vmatprep.subr.mxu0 0.0
    %724 = vmatpush1.msra.mxu0 %v672
    %725 = vmatprep.subr.mxu0 0.0
    %726 = vmatpush1.msra.mxu0 %v673
    %727 = vmatprep.subr.mxu0 0.0
    %728 = vmatpush1.msra.mxu0 %v674
    %729 = vmatprep.subr.mxu0 0.0
    %730 = vmatpush1.msra.mxu0 %v675
    %731 = vmatprep.subr.mxu0 0.0
    %732 = vmatpush1.msra.mxu0 %v676
    %733 = vmatprep.subr.mxu0 0.0
    %734 = vmatpush1.msra.mxu0 %v677
    %735 = vmatprep.subr.mxu0 0.0
    %736 = vmatpush1.msra.mxu0 %v687
    %737 = vmatprep.subr.mxu0 0.0
    %738 = vmatpush1.msra.mxu0 0.0
    %739 = vmatprep.subr.mxu0 0.0
    %740 = vmatpush1.msra.mxu0 0.0
    %741 = vmatprep.subr.mxu0 0.0
    %742 = vmatpush1.msra.mxu0 0.0
    %743 = vmatprep.subr.mxu0 0.0
    %744 = vmatpush1.msra.mxu0 0.0
    %745 = vmatprep.subr.mxu0 0.0
    %746 = vmatpush1.msra.mxu0 0.0
    %747 = vmatprep.subr.mxu0 0.0
    %748 = vmatpush1.msra.mxu0 0.0
    %749 = vmatprep.subr.mxu0 0.0
    %750 = vmatpush1.msra.mxu0 0.0
    %751 = vmatprep.subr.mxu0 0.0
    %752 = vmatpush1.msra.mxu0 0.0
    %753 = vmatprep.mubr.f32.mxu0 %v361
    %754 = vmatmul.mubr.f32.gmra.mrb[0].mxu0 %v297
    %v755 = vpop.f32.mrb[0].mxu0
    %v756 = vadd.f32 %v684, %v755
    %v757 = vpop.f32.mrb[0].mxu0
    %758 = vdwg.mxu0
    %vm759 = vcmp.gt.f32.partialorder %v756, 0.0
    %v760 = vmul.f32 %v756, 0.01
    %v761 = vsel %vm759, %v756, %v760
    %v762 = vadd.f32 %v654, %v761
    %v763 = vpack.c.bf16 %v762, %v762
    %v764 = vld [vmem:[#allocation19] sm:$0xff]
    %v765 = vld [vmem:[#allocation19 + $0x8] sm:$0xff]
    %v766 = vld [vmem:[#allocation19 + $0x10] sm:$0xff]
    %v767 = vld [vmem:[#allocation19 + $0x18] sm:$0xff]
    %v768 = vld [vmem:[#allocation19 + $0x20] sm:$0xff]
    %v769 = vld [vmem:[#allocation19 + $0x28] sm:$0xff]
    %v770 = vld [vmem:[#allocation19 + $0x30] sm:$0xff]
    %v771 = vld [vmem:[#allocation19 + $0x38] sm:$0xff]
    %v772 = vld [vmem:[#allocation19 + $0x40] sm:$0xff]
    %v773 = vld [vmem:[#allocation19 + $0x48] sm:$0xff]
    %v774 = vld [vmem:[#allocation19 + $0x50] sm:$0xff]
    %v775 = vld [vmem:[#allocation19 + $0x58] sm:$0xff]
    %v776 = vld [vmem:[#allocation19 + $0x60] sm:$0xff]
    %v777 = vld [vmem:[#allocation19 + $0x68] sm:$0xff]
    %v778 = vld [vmem:[#allocation19 + $0x70] sm:$0xff]
    %v779 = vld [vmem:[#allocation19 + $0x78] sm:$0xff]
    %v780 = vld [vmem:[#allocation19 + $0x80] sm:$0xff]
    %v781 = vld [vmem:[#allocation19 + $0x88] sm:$0xff]
    %v782 = vld [vmem:[#allocation19 + $0x90] sm:$0xff]
    %v783 = vld [vmem:[#allocation19 + $0x98] sm:$0xff]
    %v784 = vld [vmem:[#allocation19 + $0xa0] sm:$0xff]
    %v785 = vld [vmem:[#allocation19 + $0xa8] sm:$0xff]
    %v786 = vld [vmem:[#allocation19 + $0xb0] sm:$0xff]
    %v787 = vld [vmem:[#allocation19 + $0xb8] sm:$0xff]
    %v788 = vld [vmem:[#allocation19 + $0xc0] sm:$0xff]
    %v789 = vld [vmem:[#allocation19 + $0xc8] sm:$0xff]
    %v790 = vld [vmem:[#allocation19 + $0xd0] sm:$0xff]
    %v791 = vld [vmem:[#allocation19 + $0xd8] sm:$0xff]
    %v792 = vld [vmem:[#allocation19 + $0xe0] sm:$0xff]
    %v793 = vld [vmem:[#allocation19 + $0xe8] sm:$0xff]
    %v794 = vld [vmem:[#allocation19 + $0xf0] sm:$0xff]
    %v795 = vld [vmem:[#allocation19 + $0xf8] sm:$0xff]
    %v796 = vld [vmem:[#allocation19 + $0x100] sm:$0xff]
    %v797 = vld [vmem:[#allocation19 + $0x108] sm:$0xff]
    %v798 = vld [vmem:[#allocation19 + $0x110] sm:$0xff]
    %v799 = vld [vmem:[#allocation19 + $0x118] sm:$0xff]
    %v800 = vld [vmem:[#allocation19 + $0x120] sm:$0xff]
    %v801 = vld [vmem:[#allocation19 + $0x128] sm:$0xff]
    %v802 = vld [vmem:[#allocation19 + $0x130] sm:$0xff]
    %v803 = vld [vmem:[#allocation19 + $0x138] sm:$0xff]
    %v804 = vld [vmem:[#allocation19 + $0x140] sm:$0xff]
    %v805 = vld [vmem:[#allocation19 + $0x148] sm:$0xff]
    %v806 = vld [vmem:[#allocation19 + $0x150] sm:$0xff]
    %v807 = vld [vmem:[#allocation19 + $0x158] sm:$0xff]
    %v808 = vld [vmem:[#allocation19 + $0x160] sm:$0xff]
    %v809 = vld [vmem:[#allocation19 + $0x168] sm:$0xff]
    %v810 = vld [vmem:[#allocation19 + $0x170] sm:$0xff]
    %v811 = vld [vmem:[#allocation19 + $0x178] sm:$0xff]
    %v812 = vld [vmem:[#allocation19 + $0x180] sm:$0xff]
    %v813 = vld [vmem:[#allocation19 + $0x188] sm:$0xff]
    %v814 = vld [vmem:[#allocation19 + $0x190] sm:$0xff]
    %v815 = vld [vmem:[#allocation19 + $0x198] sm:$0xff]
    %v816 = vld [vmem:[#allocation19 + $0x1a0] sm:$0xff]
    %v817 = vld [vmem:[#allocation19 + $0x1a8] sm:$0xff]
    %v818 = vld [vmem:[#allocation19 + $0x1b0] sm:$0xff]
    %v819 = vld [vmem:[#allocation19 + $0x1b8] sm:$0xff]
    %v820 = vld [vmem:[#allocation19 + $0x1c0] sm:$0xff]
    %v821 = vld [vmem:[#allocation19 + $0x1c8] sm:$0xff]
    %v822 = vld [vmem:[#allocation19 + $0x1d0] sm:$0xff]
    %v823 = vld [vmem:[#allocation19 + $0x1d8] sm:$0xff]
    %v824 = vld [vmem:[#allocation19 + $0x1e0] sm:$0xff]
    %v825 = vld [vmem:[#allocation19 + $0x1e8] sm:$0xff]
    %v826 = vld [vmem:[#allocation19 + $0x1f0] sm:$0xff]
    %v827 = vld [vmem:[#allocation19 + $0x1f8] sm:$0xff]
    %v828 = vld [vmem:[#allocation20] sm:$0xff]
    %v830 = vlaneseq
    %v831 = vshrl.u32 %v830, 7
    %v832 = vsub.s32 0, %v831
    %v833 = vrot.slane %v828, %v832
    %v834 = vlaneseq
    %v835 = vshrl.u32 %v834, 7
    %v836 = vsub.s32 1, %v835
    %v837 = vrot.slane %v828, %v836
    %v838 = vlaneseq
    %v839 = vshrl.u32 %v838, 7
    %v840 = vsub.s32 2, %v839
    %v841 = vrot.slane %v828, %v840
    %v842 = vlaneseq
    %v843 = vshrl.u32 %v842, 7
    %v844 = vsub.s32 3, %v843
    %v845 = vrot.slane %v828, %v844
    %v846 = vlaneseq
    %v847 = vshrl.u32 %v846, 7
    %v848 = vsub.s32 4, %v847
    %v849 = vrot.slane %v828, %v848
    %v850 = vlaneseq
    %v851 = vshrl.u32 %v850, 7
    %v852 = vsub.s32 5, %v851
    %v853 = vrot.slane %v828, %v852
    %v854 = vlaneseq
    %v855 = vshrl.u32 %v854, 7
    %v856 = vsub.s32 6, %v855
    %v857 = vrot.slane %v828, %v856
    %v858 = vlaneseq
    %v859 = vshrl.u32 %v858, 7
    %v860 = vsub.s32 7, %v859
    %v861 = vrot.slane %v828, %v860
    %v934 = vunpack.c.l.b16 %v764
    %v935 = vunpack.c.h.b16 %v764
    %v936 = vunpack.c.l.b16 %v765
    %v937 = vunpack.c.h.b16 %v765
    %v938 = vunpack.c.l.b16 %v766
    %v939 = vunpack.c.h.b16 %v766
    %v940 = vunpack.c.l.b16 %v767
    %v941 = vunpack.c.h.b16 %v767
    %v942 = vunpack.c.l.b16 %v768
    %v943 = vunpack.c.h.b16 %v768
    %v944 = vunpack.c.l.b16 %v769
    %v945 = vunpack.c.h.b16 %v769
    %v946 = vunpack.c.l.b16 %v770
    %v947 = vunpack.c.h.b16 %v770
    %v948 = vunpack.c.l.b16 %v771
    %v949 = vunpack.c.h.b16 %v771
    %v950 = vunpack.c.l.b16 %v772
    %v951 = vunpack.c.h.b16 %v772
    %v952 = vunpack.c.l.b16 %v773
    %v953 = vunpack.c.h.b16 %v773
    %v954 = vunpack.c.l.b16 %v774
    %v955 = vunpack.c.h.b16 %v774
    %v956 = vunpack.c.l.b16 %v775
    %v957 = vunpack.c.h.b16 %v775
    %v958 = vunpack.c.l.b16 %v776
    %v959 = vunpack.c.h.b16 %v776
    %v960 = vunpack.c.l.b16 %v777
    %v961 = vunpack.c.h.b16 %v777
    %v962 = vunpack.c.l.b16 %v778
    %v963 = vunpack.c.h.b16 %v778
    %v964 = vunpack.c.l.b16 %v779
    %v965 = vunpack.c.h.b16 %v779
    %v966 = vunpack.c.l.b16 %v780
    %v967 = vunpack.c.h.b16 %v780
    %v968 = vunpack.c.l.b16 %v781
    %v969 = vunpack.c.h.b16 %v781
    %v970 = vunpack.c.l.b16 %v782
    %v971 = vunpack.c.h.b16 %v782
    %v972 = vunpack.c.l.b16 %v783
    %v973 = vunpack.c.h.b16 %v783
    %v974 = vunpack.c.l.b16 %v784
    %v975 = vunpack.c.h.b16 %v784
    %v976 = vunpack.c.l.b16 %v785
    %v977 = vunpack.c.h.b16 %v785
    %v978 = vunpack.c.l.b16 %v786
    %v979 = vunpack.c.h.b16 %v786
    %v980 = vunpack.c.l.b16 %v787
    %v981 = vunpack.c.h.b16 %v787
    %v982 = vunpack.c.l.b16 %v788
    %v983 = vunpack.c.h.b16 %v788
    %v984 = vunpack.c.l.b16 %v789
    %v985 = vunpack.c.h.b16 %v789
    %v986 = vunpack.c.l.b16 %v790
    %v987 = vunpack.c.h.b16 %v790
    %v988 = vunpack.c.l.b16 %v791
    %v989 = vunpack.c.h.b16 %v791
    %v990 = vunpack.c.l.b16 %v792
    %v991 = vunpack.c.h.b16 %v792
    %v992 = vunpack.c.l.b16 %v793
    %v993 = vunpack.c.h.b16 %v793
    %v994 = vunpack.c.l.b16 %v794
    %v995 = vunpack.c.h.b16 %v794
    %v996 = vunpack.c.l.b16 %v795
    %v997 = vunpack.c.h.b16 %v795
    %v998 = vunpack.c.l.b16 %v796
    %v999 = vunpack.c.h.b16 %v796
    %v1000 = vunpack.c.l.b16 %v797
    %v1001 = vunpack.c.h.b16 %v797
    %v1002 = vunpack.c.l.b16 %v798
    %v1003 = vunpack.c.h.b16 %v798
    %v1004 = vunpack.c.l.b16 %v799
    %v1005 = vunpack.c.h.b16 %v799
    %v1006 = vunpack.c.l.b16 %v800
    %v1007 = vunpack.c.h.b16 %v800
    %v1008 = vunpack.c.l.b16 %v801
    %v1009 = vunpack.c.h.b16 %v801
    %v1010 = vunpack.c.l.b16 %v802
    %v1011 = vunpack.c.h.b16 %v802
    %v1012 = vunpack.c.l.b16 %v803
    %v1013 = vunpack.c.h.b16 %v803
    %v1014 = vunpack.c.l.b16 %v804
    %v1015 = vunpack.c.h.b16 %v804
    %v1016 = vunpack.c.l.b16 %v805
    %v1017 = vunpack.c.h.b16 %v805
    %v1018 = vunpack.c.l.b16 %v806
    %v1019 = vunpack.c.h.b16 %v806
    %v1020 = vunpack.c.l.b16 %v807
    %v1021 = vunpack.c.h.b16 %v807
    %v1022 = vunpack.c.l.b16 %v808
    %v1023 = vunpack.c.h.b16 %v808
    %v1024 = vunpack.c.l.b16 %v809
    %v1025 = vunpack.c.h.b16 %v809
    %v1026 = vunpack.c.l.b16 %v810
    %v1027 = vunpack.c.h.b16 %v810
    %v1028 = vunpack.c.l.b16 %v811
    %v1029 = vunpack.c.h.b16 %v811
    %v1030 = vunpack.c.l.b16 %v812
    %v1031 = vunpack.c.h.b16 %v812
    %v1032 = vunpack.c.l.b16 %v813
    %v1033 = vunpack.c.h.b16 %v813
    %v1034 = vunpack.c.l.b16 %v814
    %v1035 = vunpack.c.h.b16 %v814
    %v1036 = vunpack.c.l.b16 %v815
    %v1037 = vunpack.c.h.b16 %v815
    %v1038 = vunpack.c.l.b16 %v816
    %v1039 = vunpack.c.h.b16 %v816
    %v1040 = vunpack.c.l.b16 %v817
    %v1041 = vunpack.c.h.b16 %v817
    %v1042 = vunpack.c.l.b16 %v818
    %v1043 = vunpack.c.h.b16 %v818
    %v1044 = vunpack.c.l.b16 %v819
    %v1045 = vunpack.c.h.b16 %v819
    %v1046 = vunpack.c.l.b16 %v820
    %v1047 = vunpack.c.h.b16 %v820
    %v1048 = vunpack.c.l.b16 %v821
    %v1049 = vunpack.c.h.b16 %v821
    %v1050 = vunpack.c.l.b16 %v822
    %v1051 = vunpack.c.h.b16 %v822
    %v1052 = vunpack.c.l.b16 %v823
    %v1053 = vunpack.c.h.b16 %v823
    %v1054 = vunpack.c.l.b16 %v824
    %v1055 = vunpack.c.h.b16 %v824
    %v1056 = vunpack.c.l.b16 %v825
    %v1057 = vunpack.c.h.b16 %v825
    %v1058 = vunpack.c.l.b16 %v826
    %v1059 = vunpack.c.h.b16 %v826
    %v1060 = vunpack.c.l.b16 %v827
    %v1061 = vunpack.c.h.b16 %v827
    %v1062 = vpack.c.b16 %v942, %v934
    %v1063 = vpack.c.b16 %v943, %v935
    %v1064 = vpack.c.b16 %v944, %v936
    %v1065 = vpack.c.b16 %v945, %v937
    %v1066 = vpack.c.b16 %v946, %v938
    %v1067 = vpack.c.b16 %v947, %v939
    %v1068 = vpack.c.b16 %v948, %v940
    %v1069 = vpack.c.b16 %v949, %v941
    %v1070 = vpack.c.b16 %v958, %v950
    %v1071 = vpack.c.b16 %v959, %v951
    %v1072 = vpack.c.b16 %v960, %v952
    %v1073 = vpack.c.b16 %v961, %v953
    %v1074 = vpack.c.b16 %v962, %v954
    %v1075 = vpack.c.b16 %v963, %v955
    %v1076 = vpack.c.b16 %v964, %v956
    %v1077 = vpack.c.b16 %v965, %v957
    %v1078 = vpack.c.b16 %v974, %v966
    %v1079 = vpack.c.b16 %v975, %v967
    %v1080 = vpack.c.b16 %v976, %v968
    %v1081 = vpack.c.b16 %v977, %v969
    %v1082 = vpack.c.b16 %v978, %v970
    %v1083 = vpack.c.b16 %v979, %v971
    %v1084 = vpack.c.b16 %v980, %v972
    %v1085 = vpack.c.b16 %v981, %v973
    %v1086 = vpack.c.b16 %v990, %v982
    %v1087 = vpack.c.b16 %v991, %v983
    %v1088 = vpack.c.b16 %v992, %v984
    %v1089 = vpack.c.b16 %v993, %v985
    %v1090 = vpack.c.b16 %v994, %v986
    %v1091 = vpack.c.b16 %v995, %v987
    %v1092 = vpack.c.b16 %v996, %v988
    %v1093 = vpack.c.b16 %v997, %v989
    %v1094 = vpack.c.b16 %v1006, %v998
    %v1095 = vpack.c.b16 %v1007, %v999
    %v1096 = vpack.c.b16 %v1008, %v1000
    %v1097 = vpack.c.b16 %v1009, %v1001
    %v1098 = vpack.c.b16 %v1010, %v1002
    %v1099 = vpack.c.b16 %v1011, %v1003
    %v1100 = vpack.c.b16 %v1012, %v1004
    %v1101 = vpack.c.b16 %v1013, %v1005
    %v1102 = vpack.c.b16 %v1022, %v1014
    %v1103 = vpack.c.b16 %v1023, %v1015
    %v1104 = vpack.c.b16 %v1024, %v1016
    %v1105 = vpack.c.b16 %v1025, %v1017
    %v1106 = vpack.c.b16 %v1026, %v1018
    %v1107 = vpack.c.b16 %v1027, %v1019
    %v1108 = vpack.c.b16 %v1028, %v1020
    %v1109 = vpack.c.b16 %v1029, %v1021
    %v1110 = vpack.c.b16 %v1038, %v1030
    %v1111 = vpack.c.b16 %v1039, %v1031
    %v1112 = vpack.c.b16 %v1040, %v1032
    %v1113 = vpack.c.b16 %v1041, %v1033
    %v1114 = vpack.c.b16 %v1042, %v1034
    %v1115 = vpack.c.b16 %v1043, %v1035
    %v1116 = vpack.c.b16 %v1044, %v1036
    %v1117 = vpack.c.b16 %v1045, %v1037
    %v1118 = vpack.c.b16 %v1054, %v1046
    %v1119 = vpack.c.b16 %v1055, %v1047
    %v1120 = vpack.c.b16 %v1056, %v1048
    %v1121 = vpack.c.b16 %v1057, %v1049
    %v1122 = vpack.c.b16 %v1058, %v1050
    %v1123 = vpack.c.b16 %v1059, %v1051
    %v1124 = vpack.c.b16 %v1060, %v1052
    %v1125 = vpack.c.b16 %v1061, %v1053
    %1190 = vmatprep.subr.bf16.mxu0 %v1063
    %1191 = vmatpush1.bf16.msra.mxu0 %v1062
    %1192 = vmatprep.subr.bf16.mxu0 %v1071
    %1193 = vmatpush1.bf16.msra.mxu0 %v1070
    %1194 = vmatprep.subr.bf16.mxu0 %v1079
    %1195 = vmatpush1.bf16.msra.mxu0 %v1078
    %1196 = vmatprep.subr.bf16.mxu0 %v1087
    %1197 = vmatpush1.bf16.msra.mxu0 %v1086
    %1198 = vmatprep.subr.bf16.mxu0 %v1095
    %1199 = vmatpush1.bf16.msra.mxu0 %v1094
    %1200 = vmatprep.subr.bf16.mxu0 %v1103
    %1201 = vmatpush1.bf16.msra.mxu0 %v1102
    %1202 = vmatprep.subr.bf16.mxu0 %v1111
    %1203 = vmatpush1.bf16.msra.mxu0 %v1110
    %1204 = vmatprep.subr.bf16.mxu0 %v1119
    %1205 = vmatpush1.bf16.msra.mxu0 %v1118
    %1206 = vmatprep.subr.bf16.mxu0 0
    %1207 = vmatpush1.bf16.msra.mxu0 0
    %1208 = vmatprep.subr.bf16.mxu0 0
    %1209 = vmatpush1.bf16.msra.mxu0 0
    %1210 = vmatprep.subr.bf16.mxu0 0
    %1211 = vmatpush1.bf16.msra.mxu0 0
    %1212 = vmatprep.subr.bf16.mxu0 0
    %1213 = vmatpush1.bf16.msra.mxu0 0
    %1214 = vmatprep.subr.bf16.mxu0 0
    %1215 = vmatpush1.bf16.msra.mxu0 0
    %1216 = vmatprep.subr.bf16.mxu0 0
    %1217 = vmatpush1.bf16.msra.mxu0 0
    %1218 = vmatprep.subr.bf16.mxu0 0
    %1219 = vmatpush1.bf16.msra.mxu0 0
    %1220 = vmatprep.subr.bf16.mxu0 0
    %1221 = vmatpush1.bf16.msra.mxu0 0
    %1222 = vmatprep.mubr.bf16.mxu0 0
    %1223 = vmatmul.mubr.bf16.gmra.mrb[0].mxu0 %v763
    %v1224 = vpop.f32.mrb[0].mxu0
    %v1225 = vadd.f32 %v833, %v1224
    %v1226 = vpop.f32.mrb[0].mxu0
    %v1227 = vadd.f32 %v837, %v1226
    %v1228 = vpop.f32.mrb[0].mxu0
    %v1229 = vpop.f32.mrb[0].mxu0
    %1230 = vdwg.mxu0
    %1231 = vmatprep.subr.bf16.mxu0 %v1065
    %1232 = vmatpush1.bf16.msra.mxu0 %v1064
    %1233 = vmatprep.subr.bf16.mxu0 %v1073
    %1234 = vmatpush1.bf16.msra.mxu0 %v1072
    %1235 = vmatprep.subr.bf16.mxu0 %v1081
    %1236 = vmatpush1.bf16.msra.mxu0 %v1080
    %1237 = vmatprep.subr.bf16.mxu0 %v1089
    %1238 = vmatpush1.bf16.msra.mxu0 %v1088
    %1239 = vmatprep.subr.bf16.mxu0 %v1097
    %1240 = vmatpush1.bf16.msra.mxu0 %v1096
    %1241 = vmatprep.subr.bf16.mxu0 %v1105
    %1242 = vmatpush1.bf16.msra.mxu0 %v1104
    %1243 = vmatprep.subr.bf16.mxu0 %v1113
    %1244 = vmatpush1.bf16.msra.mxu0 %v1112
    %1245 = vmatprep.subr.bf16.mxu0 %v1121
    %1246 = vmatpush1.bf16.msra.mxu0 %v1120
    %1247 = vmatprep.subr.bf16.mxu0 0
    %1248 = vmatpush1.bf16.msra.mxu0 0
    %1249 = vmatprep.subr.bf16.mxu0 0
    %1250 = vmatpush1.bf16.msra.mxu0 0
    %1251 = vmatprep.subr.bf16.mxu0 0
    %1252 = vmatpush1.bf16.msra.mxu0 0
    %1253 = vmatprep.subr.bf16.mxu0 0
    %1254 = vmatpush1.bf16.msra.mxu0 0
    %1255 = vmatprep.subr.bf16.mxu0 0
    %1256 = vmatpush1.bf16.msra.mxu0 0
    %1257 = vmatprep.subr.bf16.mxu0 0
    %1258 = vmatpush1.bf16.msra.mxu0 0
    %1259 = vmatprep.subr.bf16.mxu0 0
    %1260 = vmatpush1.bf16.msra.mxu0 0
    %1261 = vmatprep.subr.bf16.mxu0 0
    %1262 = vmatpush1.bf16.msra.mxu0 0
    %1263 = vmatprep.mubr.bf16.mxu0 0
    %1264 = vmatmul.mubr.bf16.gmra.mrb[0].mxu0 %v763
    %v1265 = vpop.f32.mrb[0].mxu0
    %v1266 = vadd.f32 %v841, %v1265
    %v1267 = vpop.f32.mrb[0].mxu0
    %v1268 = vadd.f32 %v845, %v1267
    %v1269 = vpop.f32.mrb[0].mxu0
    %v1270 = vpop.f32.mrb[0].mxu0
    %1271 = vdwg.mxu0
    %1272 = vmatprep.subr.bf16.mxu0 %v1067
    %1273 = vmatpush1.bf16.msra.mxu0 %v1066
    %1274 = vmatprep.subr.bf16.mxu0 %v1075
    %1275 = vmatpush1.bf16.msra.mxu0 %v1074
    %1276 = vmatprep.subr.bf16.mxu0 %v1083
    %1277 = vmatpush1.bf16.msra.mxu0 %v1082
    %1278 = vmatprep.subr.bf16.mxu0 %v1091
    %1279 = vmatpush1.bf16.msra.mxu0 %v1090
    %1280 = vmatprep.subr.bf16.mxu0 %v1099
    %1281 = vmatpush1.bf16.msra.mxu0 %v1098
    %1282 = vmatprep.subr.bf16.mxu0 %v1107
    %1283 = vmatpush1.bf16.msra.mxu0 %v1106
    %1284 = vmatprep.subr.bf16.mxu0 %v1115
    %1285 = vmatpush1.bf16.msra.mxu0 %v1114
    %1286 = vmatprep.subr.bf16.mxu0 %v1123
    %1287 = vmatpush1.bf16.msra.mxu0 %v1122
    %1288 = vmatprep.subr.bf16.mxu0 0
    %1289 = vmatpush1.bf16.msra.mxu0 0
    %1290 = vmatprep.subr.bf16.mxu0 0
    %1291 = vmatpush1.bf16.msra.mxu0 0
    %1292 = vmatprep.subr.bf16.mxu0 0
    %1293 = vmatpush1.bf16.msra.mxu0 0
    %1294 = vmatprep.subr.bf16.mxu0 0
    %1295 = vmatpush1.bf16.msra.mxu0 0
    %1296 = vmatprep.subr.bf16.mxu0 0
    %1297 = vmatpush1.bf16.msra.mxu0 0
    %1298 = vmatprep.subr.bf16.mxu0 0
    %1299 = vmatpush1.bf16.msra.mxu0 0
    %1300 = vmatprep.subr.bf16.mxu0 0
    %1301 = vmatpush1.bf16.msra.mxu0 0
    %1302 = vmatprep.subr.bf16.mxu0 0
    %1303 = vmatpush1.bf16.msra.mxu0 0
    %1304 = vmatprep.mubr.bf16.mxu0 0
    %1305 = vmatmul.mubr.bf16.gmra.mrb[0].mxu0 %v763
    %v1306 = vpop.f32.mrb[0].mxu0
    %v1307 = vadd.f32 %v849, %v1306
    %v1308 = vpop.f32.mrb[0].mxu0
    %v1309 = vadd.f32 %v853, %v1308
    %v1310 = vpop.f32.mrb[0].mxu0
    %v1311 = vpop.f32.mrb[0].mxu0
    %1312 = vdwg.mxu0
    %1313 = vmatprep.subr.bf16.mxu0 %v1069
    %1314 = vmatpush1.bf16.msra.mxu0 %v1068
    %1315 = vmatprep.subr.bf16.mxu0 %v1077
    %1316 = vmatpush1.bf16.msra.mxu0 %v1076
    %1317 = vmatprep.subr.bf16.mxu0 %v1085
    %1318 = vmatpush1.bf16.msra.mxu0 %v1084
    %1319 = vmatprep.subr.bf16.mxu0 %v1093
    %1320 = vmatpush1.bf16.msra.mxu0 %v1092
    %1321 = vmatprep.subr.bf16.mxu0 %v1101
    %1322 = vmatpush1.bf16.msra.mxu0 %v1100
    %1323 = vmatprep.subr.bf16.mxu0 %v1109
    %1324 = vmatpush1.bf16.msra.mxu0 %v1108
    %1325 = vmatprep.subr.bf16.mxu0 %v1117
    %1326 = vmatpush1.bf16.msra.mxu0 %v1116
    %1327 = vmatprep.subr.bf16.mxu0 %v1125
    %1328 = vmatpush1.bf16.msra.mxu0 %v1124
    %1329 = vmatprep.subr.bf16.mxu0 0
    %1330 = vmatpush1.bf16.msra.mxu0 0
    %1331 = vmatprep.subr.bf16.mxu0 0
    %1332 = vmatpush1.bf16.msra.mxu0 0
    %1333 = vmatprep.subr.bf16.mxu0 0
    %1334 = vmatpush1.bf16.msra.mxu0 0
    %1335 = vmatprep.subr.bf16.mxu0 0
    %1336 = vmatpush1.bf16.msra.mxu0 0
    %1337 = vmatprep.subr.bf16.mxu0 0
    %1338 = vmatpush1.bf16.msra.mxu0 0
    %1339 = vmatprep.subr.bf16.mxu0 0
    %1340 = vmatpush1.bf16.msra.mxu0 0
    %1341 = vmatprep.subr.bf16.mxu0 0
    %1342 = vmatpush1.bf16.msra.mxu0 0
    %1343 = vmatprep.subr.bf16.mxu0 0
    %1344 = vmatpush1.bf16.msra.mxu0 0
    %1345 = vmatprep.mubr.bf16.mxu0 0
    %1346 = vmatmul.mubr.bf16.gmra.mrb[0].mxu0 %v763
    %v1347 = vpop.f32.mrb[0].mxu0
    %v1348 = vadd.f32 %v857, %v1347
    %v1349 = vpop.f32.mrb[0].mxu0
    %v1350 = vadd.f32 %v861, %v1349
    %v1351 = vpop.f32.mrb[0].mxu0
    %v1352 = vpop.f32.mrb[0].mxu0
    %1353 = vdwg.mxu0
    %vm1354 = vcmp.gt.f32.partialorder %v1225, 0.0
    %vm1355 = vcmp.gt.f32.partialorder %v1227, 0.0
    %vm1356 = vcmp.gt.f32.partialorder %v1266, 0.0
    %vm1357 = vcmp.gt.f32.partialorder %v1268, 0.0
    %vm1358 = vcmp.gt.f32.partialorder %v1307, 0.0
    %vm1359 = vcmp.gt.f32.partialorder %v1309, 0.0
    %vm1360 = vcmp.gt.f32.partialorder %v1348, 0.0
    %vm1361 = vcmp.gt.f32.partialorder %v1350, 0.0
    %v1362 = vmul.f32 %v1225, 0.01
    %v1363 = vmul.f32 %v1227, 0.01
    %v1364 = vmul.f32 %v1266, 0.01
    %v1365 = vmul.f32 %v1268, 0.01
    %v1366 = vmul.f32 %v1307, 0.01
    %v1367 = vmul.f32 %v1309, 0.01
    %v1368 = vmul.f32 %v1348, 0.01
    %v1369 = vmul.f32 %v1350, 0.01
    %v1370 = vsel %vm1354, %v1225, %v1362
    %v1371 = vsel %vm1355, %v1227, %v1363
    %v1372 = vsel %vm1356, %v1266, %v1364
    %v1373 = vsel %vm1357, %v1268, %v1365
    %v1374 = vsel %vm1358, %v1307, %v1366
    %v1375 = vsel %vm1359, %v1309, %v1367
    %v1376 = vsel %vm1360, %v1348, %v1368
    %v1377 = vsel %vm1361, %v1350, %v1369
    %v1378 = vld [vmem:[#allocation5] sm:$0xff]
    %v1379 = vld [vmem:[#allocation25] sm:$0xff]
    %v1380 = vld [vmem:[#allocation25 + $0x8] sm:$0xf]
    %1382 = vset.pattern.permute.xlu0 0
    %1383 = vperm.xlu0 %1382, %v1378
    %v1384 = vpop.permute.xlu0 %1383
    %v1388 = vlaneseq
    %v1389 = vshrl.u32 %v1388, 7
    %v1390 = vsub.s32 0, %v1389
    %v1391 = vrot.slane %v1379, %v1390
    %v1392 = vlaneseq
    %v1393 = vshrl.u32 %v1392, 7
    %v1394 = vsub.s32 2, %v1393
    %v1395 = vrot.slane %v1379, %v1394
    %v1396 = vlaneseq
    %v1397 = vshrl.u32 %v1396, 7
    %v1398 = vsub.s32 4, %v1397
    %v1399 = vrot.slane %v1379, %v1398
    %v1400 = vlaneseq
    %v1401 = vshrl.u32 %v1400, 7
    %v1402 = vsub.s32 6, %v1401
    %v1403 = vrot.slane %v1379, %v1402
    %v1404 = vlaneseq
    %v1405 = vshrl.u32 %v1404, 7
    %v1406 = vsub.s32 0, %v1405
    %v1407 = vrot.slane %v1380, %v1406
    %v1408 = vlaneseq
    %v1409 = vshrl.u32 %v1408, 7
    %v1410 = vsub.s32 2, %v1409
    %v1411 = vrot.slane %v1380, %v1410
    %v1418 = vlaneseq
    %v1419 = vshrl.u32 %v1418, 7
    %v1420 = vsub.s32 0, %v1419
    %v1421 = vrot.slane %v1391, %v1420
    %v1422 = vlaneseq
    %v1423 = vshrl.u32 %v1422, 7
    %v1424 = vsub.s32 0, %v1423
    %v1425 = vrot.slane %v1395, %v1424
    %v1426 = vlaneseq
    %v1427 = vshrl.u32 %v1426, 7
    %v1428 = vsub.s32 0, %v1427
    %v1429 = vrot.slane %v1399, %v1428
    %v1430 = vlaneseq
    %v1431 = vshrl.u32 %v1430, 7
    %v1432 = vsub.s32 0, %v1431
    %v1433 = vrot.slane %v1403, %v1432
    %v1434 = vlaneseq
    %v1435 = vshrl.u32 %v1434, 7
    %v1436 = vsub.s32 0, %v1435
    %v1437 = vrot.slane %v1407, %v1436
    %v1438 = vlaneseq
    %v1439 = vshrl.u32 %v1438, 7
    %v1440 = vsub.s32 0, %v1439
    %v1441 = vrot.slane %v1411, %v1440
    %v1442 = vmul.f32 %v1384, %v1421
    %v1443 = vmul.f32 %v1384, %v1425
    %v1444 = vmul.f32 %v1384, %v1429
    %v1445 = vmul.f32 %v1384, %v1433
    %v1446 = vmul.f32 %v1384, %v1437
    %v1447 = vmul.f32 %v1384, %v1441
    %1448 = vset.pattern.permute.xlu0 1
    %1449 = vperm.xlu0 %1448, %v1378
    %v1450 = vpop.permute.xlu0 %1449
    %v1452 = vlaneseq
    %v1453 = vshrl.u32 %v1452, 7
    %v1454 = vsub.s32 1, %v1453
    %v1455 = vrot.slane %v1379, %v1454
    %v1456 = vlaneseq
    %v1457 = vshrl.u32 %v1456, 7
    %v1458 = vsub.s32 3, %v1457
    %v1459 = vrot.slane %v1379, %v1458
    %v1460 = vlaneseq
    %v1461 = vshrl.u32 %v1460, 7
    %v1462 = vsub.s32 5, %v1461
    %v1463 = vrot.slane %v1379, %v1462
    %v1464 = vlaneseq
    %v1465 = vshrl.u32 %v1464, 7
    %v1466 = vsub.s32 7, %v1465
    %v1467 = vrot.slane %v1379, %v1466
    %v1468 = vlaneseq
    %v1469 = vshrl.u32 %v1468, 7
    %v1470 = vsub.s32 1, %v1469
    %v1471 = vrot.slane %v1380, %v1470
    %v1472 = vlaneseq
    %v1473 = vshrl.u32 %v1472, 7
    %v1474 = vsub.s32 3, %v1473
    %v1475 = vrot.slane %v1380, %v1474
    %v1482 = vlaneseq
    %v1483 = vshrl.u32 %v1482, 7
    %v1484 = vsub.s32 1, %v1483
    %v1485 = vrot.slane %v1455, %v1484
    %v1486 = vlaneseq
    %v1487 = vshrl.u32 %v1486, 7
    %v1488 = vsub.s32 1, %v1487
    %v1489 = vrot.slane %v1459, %v1488
    %v1490 = vlaneseq
    %v1491 = vshrl.u32 %v1490, 7
    %v1492 = vsub.s32 1, %v1491
    %v1493 = vrot.slane %v1463, %v1492
    %v1494 = vlaneseq
    %v1495 = vshrl.u32 %v1494, 7
    %v1496 = vsub.s32 1, %v1495
    %v1497 = vrot.slane %v1467, %v1496
    %v1498 = vlaneseq
    %v1499 = vshrl.u32 %v1498, 7
    %v1500 = vsub.s32 1, %v1499
    %v1501 = vrot.slane %v1471, %v1500
    %v1502 = vlaneseq
    %v1503 = vshrl.u32 %v1502, 7
    %v1504 = vsub.s32 1, %v1503
    %v1505 = vrot.slane %v1475, %v1504
    %v1506 = vmul.f32 %v1450, %v1485
    %v1507 = vmul.f32 %v1450, %v1489
    %v1508 = vmul.f32 %v1450, %v1493
    %v1509 = vmul.f32 %v1450, %v1497
    %v1510 = vmul.f32 %v1450, %v1501
    %v1511 = vmul.f32 %v1450, %v1505
    %v1512 = vadd.f32 %v1442, %v1506
    %v1513 = vadd.f32 %v1443, %v1507
    %v1514 = vadd.f32 %v1444, %v1508
    %v1515 = vadd.f32 %v1445, %v1509
    %v1516 = vadd.f32 %v1446, %v1510
    %v1517 = vadd.f32 %v1447, %v1511
    %v1518 = vld [vmem:[#allocation26] sm:$0x3f]
    %v1520 = vlaneseq
    %v1521 = vshrl.u32 %v1520, 7
    %v1522 = vsub.s32 0, %v1521
    %v1523 = vrot.slane %v1518, %v1522
    %v1524 = vlaneseq
    %v1525 = vshrl.u32 %v1524, 7
    %v1526 = vsub.s32 1, %v1525
    %v1527 = vrot.slane %v1518, %v1526
    %v1528 = vlaneseq
    %v1529 = vshrl.u32 %v1528, 7
    %v1530 = vsub.s32 2, %v1529
    %v1531 = vrot.slane %v1518, %v1530
    %v1532 = vlaneseq
    %v1533 = vshrl.u32 %v1532, 7
    %v1534 = vsub.s32 3, %v1533
    %v1535 = vrot.slane %v1518, %v1534
    %v1536 = vlaneseq
    %v1537 = vshrl.u32 %v1536, 7
    %v1538 = vsub.s32 4, %v1537
    %v1539 = vrot.slane %v1518, %v1538
    %v1540 = vlaneseq
    %v1541 = vshrl.u32 %v1540, 7
    %v1542 = vsub.s32 5, %v1541
    %v1543 = vrot.slane %v1518, %v1542
    %v1550 = vadd.f32 %v1512, %v1523
    %v1551 = vadd.f32 %v1513, %v1527
    %v1552 = vadd.f32 %v1514, %v1531
    %v1553 = vadd.f32 %v1515, %v1535
    %v1554 = vadd.f32 %v1516, %v1539
    %v1555 = vadd.f32 %v1517, %v1543
    %v1556 = vpack.c.bf16 %v1370, %v1370
    %v1557 = vpack.c.bf16 %v1371, %v1371
    %v1558 = vpack.c.bf16 %v1372, %v1372
    %v1559 = vpack.c.bf16 %v1373, %v1373
    %v1560 = vpack.c.bf16 %v1374, %v1374
    %v1561 = vpack.c.bf16 %v1375, %v1375
    %v1562 = vpack.c.bf16 %v1376, %v1376
    %v1563 = vpack.c.bf16 %v1377, %v1377
    %v1564 = vld [vmem:[#allocation22] sm:$0xff]
    %v1565 = vld [vmem:[#allocation22 + $0x8] sm:$0xf]
    %v1566 = vld [vmem:[#allocation22 + $0xc] sm:$0xff]
    %v1567 = vld [vmem:[#allocation22 + $0x14] sm:$0xf]
    %v1568 = vld [vmem:[#allocation22 + $0x18] sm:$0xff]
    %v1569 = vld [vmem:[#allocation22 + $0x20] sm:$0xf]
    %v1570 = vld [vmem:[#allocation22 + $0x24] sm:$0xff]
    %v1571 = vld [vmem:[#allocation22 + $0x2c] sm:$0xf]
    %v1572 = vld [vmem:[#allocation22 + $0x30] sm:$0xff]
    %v1573 = vld [vmem:[#allocation22 + $0x38] sm:$0xf]
    %v1574 = vld [vmem:[#allocation22 + $0x3c] sm:$0xff]
    %v1575 = vld [vmem:[#allocation22 + $0x44] sm:$0xf]
    %v1576 = vld [vmem:[#allocation22 + $0x48] sm:$0xff]
    %v1577 = vld [vmem:[#allocation22 + $0x50] sm:$0xf]
    %v1578 = vld [vmem:[#allocation22 + $0x54] sm:$0xff]
    %v1579 = vld [vmem:[#allocation22 + $0x5c] sm:$0xf]
    %v1580 = vld [vmem:[#allocation22 + $0x60] sm:$0xff]
    %v1581 = vld [vmem:[#allocation22 + $0x68] sm:$0xf]
    %v1582 = vld [vmem:[#allocation22 + $0x6c] sm:$0xff]
    %v1583 = vld [vmem:[#allocation22 + $0x74] sm:$0xf]
    %v1584 = vld [vmem:[#allocation22 + $0x78] sm:$0xff]
    %v1585 = vld [vmem:[#allocation22 + $0x80] sm:$0xf]
    %v1586 = vld [vmem:[#allocation22 + $0x84] sm:$0xff]
    %v1587 = vld [vmem:[#allocation22 + $0x8c] sm:$0xf]
    %v1588 = vld [vmem:[#allocation22 + $0x90] sm:$0xff]
    %v1589 = vld [vmem:[#allocation22 + $0x98] sm:$0xf]
    %v1590 = vld [vmem:[#allocation22 + $0x9c] sm:$0xff]
    %v1591 = vld [vmem:[#allocation22 + $0xa4] sm:$0xf]
    %v1592 = vld [vmem:[#allocation22 + $0xa8] sm:$0xff]
    %v1593 = vld [vmem:[#allocation22 + $0xb0] sm:$0xf]
    %v1594 = vld [vmem:[#allocation22 + $0xb4] sm:$0xff]
    %v1595 = vld [vmem:[#allocation22 + $0xbc] sm:$0xf]
    %v1596 = vld [vmem:[#allocation22 + $0xc0] sm:$0xff]
    %v1597 = vld [vmem:[#allocation22 + $0xc8] sm:$0xf]
    %v1598 = vld [vmem:[#allocation22 + $0xcc] sm:$0xff]
    %v1599 = vld [vmem:[#allocation22 + $0xd4] sm:$0xf]
    %v1600 = vld [vmem:[#allocation22 + $0xd8] sm:$0xff]
    %v1601 = vld [vmem:[#allocation22 + $0xe0] sm:$0xf]
    %v1602 = vld [vmem:[#allocation22 + $0xe4] sm:$0xff]
    %v1603 = vld [vmem:[#allocation22 + $0xec] sm:$0xf]
    %v1604 = vld [vmem:[#allocation22 + $0xf0] sm:$0xff]
    %v1605 = vld [vmem:[#allocation22 + $0xf8] sm:$0xf]
    %v1606 = vld [vmem:[#allocation22 + $0xfc] sm:$0xff]
    %v1607 = vld [vmem:[#allocation22 + $0x104] sm:$0xf]
    %v1608 = vld [vmem:[#allocation22 + $0x108] sm:$0xff]
    %v1609 = vld [vmem:[#allocation22 + $0x110] sm:$0xf]
    %v1610 = vld [vmem:[#allocation22 + $0x114] sm:$0xff]
    %v1611 = vld [vmem:[#allocation22 + $0x11c] sm:$0xf]
    %v1612 = vld [vmem:[#allocation22 + $0x120] sm:$0xff]
    %v1613 = vld [vmem:[#allocation22 + $0x128] sm:$0xf]
    %v1614 = vld [vmem:[#allocation22 + $0x12c] sm:$0xff]
    %v1615 = vld [vmem:[#allocation22 + $0x134] sm:$0xf]
    %v1616 = vld [vmem:[#allocation22 + $0x138] sm:$0xff]
    %v1617 = vld [vmem:[#allocation22 + $0x140] sm:$0xf]
    %v1618 = vld [vmem:[#allocation22 + $0x144] sm:$0xff]
    %v1619 = vld [vmem:[#allocation22 + $0x14c] sm:$0xf]
    %v1620 = vld [vmem:[#allocation22 + $0x150] sm:$0xff]
    %v1621 = vld [vmem:[#allocation22 + $0x158] sm:$0xf]
    %v1622 = vld [vmem:[#allocation22 + $0x15c] sm:$0xff]
    %v1623 = vld [vmem:[#allocation22 + $0x164] sm:$0xf]
    %v1624 = vld [vmem:[#allocation22 + $0x168] sm:$0xff]
    %v1625 = vld [vmem:[#allocation22 + $0x170] sm:$0xf]
    %v1626 = vld [vmem:[#allocation22 + $0x174] sm:$0xff]
    %v1627 = vld [vmem:[#allocation22 + $0x17c] sm:$0xf]
    %v1628 = vld [vmem:[#allocation22 + $0x180] sm:$0xff]
    %v1629 = vld [vmem:[#allocation22 + $0x188] sm:$0xf]
    %v1630 = vld [vmem:[#allocation22 + $0x18c] sm:$0xff]
    %v1631 = vld [vmem:[#allocation22 + $0x194] sm:$0xf]
    %v1632 = vld [vmem:[#allocation22 + $0x198] sm:$0xff]
    %v1633 = vld [vmem:[#allocation22 + $0x1a0] sm:$0xf]
    %v1634 = vld [vmem:[#allocation22 + $0x1a4] sm:$0xff]
    %v1635 = vld [vmem:[#allocation22 + $0x1ac] sm:$0xf]
    %v1636 = vld [vmem:[#allocation22 + $0x1b0] sm:$0xff]
    %v1637 = vld [vmem:[#allocation22 + $0x1b8] sm:$0xf]
    %v1638 = vld [vmem:[#allocation22 + $0x1bc] sm:$0xff]
    %v1639 = vld [vmem:[#allocation22 + $0x1c4] sm:$0xf]
    %v1640 = vld [vmem:[#allocation22 + $0x1c8] sm:$0xff]
    %v1641 = vld [vmem:[#allocation22 + $0x1d0] sm:$0xf]
    %v1642 = vld [vmem:[#allocation22 + $0x1d4] sm:$0xff]
    %v1643 = vld [vmem:[#allocation22 + $0x1dc] sm:$0xf]
    %v1644 = vld [vmem:[#allocation22 + $0x1e0] sm:$0xff]
    %v1645 = vld [vmem:[#allocation22 + $0x1e8] sm:$0xf]
    %v1646 = vld [vmem:[#allocation22 + $0x1ec] sm:$0xff]
    %v1647 = vld [vmem:[#allocation22 + $0x1f4] sm:$0xf]
    %v1648 = vld [vmem:[#allocation22 + $0x1f8] sm:$0xff]
    %v1649 = vld [vmem:[#allocation22 + $0x200] sm:$0xf]
    %v1650 = vld [vmem:[#allocation22 + $0x204] sm:$0xff]
    %v1651 = vld [vmem:[#allocation22 + $0x20c] sm:$0xf]
    %v1652 = vld [vmem:[#allocation22 + $0x210] sm:$0xff]
    %v1653 = vld [vmem:[#allocation22 + $0x218] sm:$0xf]
    %v1654 = vld [vmem:[#allocation22 + $0x21c] sm:$0xff]
    %v1655 = vld [vmem:[#allocation22 + $0x224] sm:$0xf]
    %v1656 = vld [vmem:[#allocation22 + $0x228] sm:$0xff]
    %v1657 = vld [vmem:[#allocation22 + $0x230] sm:$0xf]
    %v1658 = vld [vmem:[#allocation22 + $0x234] sm:$0xff]
    %v1659 = vld [vmem:[#allocation22 + $0x23c] sm:$0xf]
    %v1660 = vld [vmem:[#allocation22 + $0x240] sm:$0xff]
    %v1661 = vld [vmem:[#allocation22 + $0x248] sm:$0xf]
    %v1662 = vld [vmem:[#allocation22 + $0x24c] sm:$0xff]
    %v1663 = vld [vmem:[#allocation22 + $0x254] sm:$0xf]
    %v1664 = vld [vmem:[#allocation22 + $0x258] sm:$0xff]
    %v1665 = vld [vmem:[#allocation22 + $0x260] sm:$0xf]
    %v1666 = vld [vmem:[#allocation22 + $0x264] sm:$0xff]
    %v1667 = vld [vmem:[#allocation22 + $0x26c] sm:$0xf]
    %v1668 = vld [vmem:[#allocation22 + $0x270] sm:$0xff]
    %v1669 = vld [vmem:[#allocation22 + $0x278] sm:$0xf]
    %v1670 = vld [vmem:[#allocation22 + $0x27c] sm:$0xff]
    %v1671 = vld [vmem:[#allocation22 + $0x284] sm:$0xf]
    %v1672 = vld [vmem:[#allocation22 + $0x288] sm:$0xff]
    %v1673 = vld [vmem:[#allocation22 + $0x290] sm:$0xf]
    %v1674 = vld [vmem:[#allocation22 + $0x294] sm:$0xff]
    %v1675 = vld [vmem:[#allocation22 + $0x29c] sm:$0xf]
    %v1676 = vld [vmem:[#allocation22 + $0x2a0] sm:$0xff]
    %v1677 = vld [vmem:[#allocation22 + $0x2a8] sm:$0xf]
    %v1678 = vld [vmem:[#allocation22 + $0x2ac] sm:$0xff]
    %v1679 = vld [vmem:[#allocation22 + $0x2b4] sm:$0xf]
    %v1680 = vld [vmem:[#allocation22 + $0x2b8] sm:$0xff]
    %v1681 = vld [vmem:[#allocation22 + $0x2c0] sm:$0xf]
    %v1682 = vld [vmem:[#allocation22 + $0x2c4] sm:$0xff]
    %v1683 = vld [vmem:[#allocation22 + $0x2cc] sm:$0xf]
    %v1684 = vld [vmem:[#allocation22 + $0x2d0] sm:$0xff]
    %v1685 = vld [vmem:[#allocation22 + $0x2d8] sm:$0xf]
    %v1686 = vld [vmem:[#allocation22 + $0x2dc] sm:$0xff]
    %v1687 = vld [vmem:[#allocation22 + $0x2e4] sm:$0xf]
    %v1688 = vld [vmem:[#allocation22 + $0x2e8] sm:$0xff]
    %v1689 = vld [vmem:[#allocation22 + $0x2f0] sm:$0xf]
    %v1690 = vld [vmem:[#allocation22 + $0x2f4] sm:$0xff]
    %v1691 = vld [vmem:[#allocation22 + $0x2fc] sm:$0xf]
    %v1820 = vunpack.c.l.b16 %v1564
    %v1821 = vunpack.c.h.b16 %v1564
    %v1822 = vunpack.c.l.b16 %v1565
    %v1823 = vunpack.c.l.b16 %v1566
    %v1824 = vunpack.c.h.b16 %v1566
    %v1825 = vunpack.c.l.b16 %v1567
    %v1826 = vunpack.c.l.b16 %v1568
    %v1827 = vunpack.c.h.b16 %v1568
    %v1828 = vunpack.c.l.b16 %v1569
    %v1829 = vunpack.c.l.b16 %v1570
    %v1830 = vunpack.c.h.b16 %v1570
    %v1831 = vunpack.c.l.b16 %v1571
    %v1832 = vunpack.c.l.b16 %v1572
    %v1833 = vunpack.c.h.b16 %v1572
    %v1834 = vunpack.c.l.b16 %v1573
    %v1835 = vunpack.c.l.b16 %v1574
    %v1836 = vunpack.c.h.b16 %v1574
    %v1837 = vunpack.c.l.b16 %v1575
    %v1838 = vunpack.c.l.b16 %v1576
    %v1839 = vunpack.c.h.b16 %v1576
    %v1840 = vunpack.c.l.b16 %v1577
    %v1841 = vunpack.c.l.b16 %v1578
    %v1842 = vunpack.c.h.b16 %v1578
    %v1843 = vunpack.c.l.b16 %v1579
    %v1844 = vunpack.c.l.b16 %v1580
    %v1845 = vunpack.c.h.b16 %v1580
    %v1846 = vunpack.c.l.b16 %v1581
    %v1847 = vunpack.c.l.b16 %v1582
    %v1848 = vunpack.c.h.b16 %v1582
    %v1849 = vunpack.c.l.b16 %v1583
    %v1850 = vunpack.c.l.b16 %v1584
    %v1851 = vunpack.c.h.b16 %v1584
    %v1852 = vunpack.c.l.b16 %v1585
    %v1853 = vunpack.c.l.b16 %v1586
    %v1854 = vunpack.c.h.b16 %v1586
    %v1855 = vunpack.c.l.b16 %v1587
    %v1856 = vunpack.c.l.b16 %v1588
    %v1857 = vunpack.c.h.b16 %v1588
    %v1858 = vunpack.c.l.b16 %v1589
    %v1859 = vunpack.c.l.b16 %v1590
    %v1860 = vunpack.c.h.b16 %v1590
    %v1861 = vunpack.c.l.b16 %v1591
    %v1862 = vunpack.c.l.b16 %v1592
    %v1863 = vunpack.c.h.b16 %v1592
    %v1864 = vunpack.c.l.b16 %v1593
    %v1865 = vunpack.c.l.b16 %v1594
    %v1866 = vunpack.c.h.b16 %v1594
    %v1867 = vunpack.c.l.b16 %v1595
    %v1868 = vunpack.c.l.b16 %v1596
    %v1869 = vunpack.c.h.b16 %v1596
    %v1870 = vunpack.c.l.b16 %v1597
    %v1871 = vunpack.c.l.b16 %v1598
    %v1872 = vunpack.c.h.b16 %v1598
    %v1873 = vunpack.c.l.b16 %v1599
    %v1874 = vunpack.c.l.b16 %v1600
    %v1875 = vunpack.c.h.b16 %v1600
    %v1876 = vunpack.c.l.b16 %v1601
    %v1877 = vunpack.c.l.b16 %v1602
    %v1878 = vunpack.c.h.b16 %v1602
    %v1879 = vunpack.c.l.b16 %v1603
    %v1880 = vunpack.c.l.b16 %v1604
    %v1881 = vunpack.c.h.b16 %v1604
    %v1882 = vunpack.c.l.b16 %v1605
    %v1883 = vunpack.c.l.b16 %v1606
    %v1884 = vunpack.c.h.b16 %v1606
    %v1885 = vunpack.c.l.b16 %v1607
    %v1886 = vunpack.c.l.b16 %v1608
    %v1887 = vunpack.c.h.b16 %v1608
    %v1888 = vunpack.c.l.b16 %v1609
    %v1889 = vunpack.c.l.b16 %v1610
    %v1890 = vunpack.c.h.b16 %v1610
    %v1891 = vunpack.c.l.b16 %v1611
    %v1892 = vunpack.c.l.b16 %v1612
    %v1893 = vunpack.c.h.b16 %v1612
    %v1894 = vunpack.c.l.b16 %v1613
    %v1895 = vunpack.c.l.b16 %v1614
    %v1896 = vunpack.c.h.b16 %v1614
    %v1897 = vunpack.c.l.b16 %v1615
    %v1898 = vunpack.c.l.b16 %v1616
    %v1899 = vunpack.c.h.b16 %v1616
    %v1900 = vunpack.c.l.b16 %v1617
    %v1901 = vunpack.c.l.b16 %v1618
    %v1902 = vunpack.c.h.b16 %v1618
    %v1903 = vunpack.c.l.b16 %v1619
    %v1904 = vunpack.c.l.b16 %v1620
    %v1905 = vunpack.c.h.b16 %v1620
    %v1906 = vunpack.c.l.b16 %v1621
    %v1907 = vunpack.c.l.b16 %v1622
    %v1908 = vunpack.c.h.b16 %v1622
    %v1909 = vunpack.c.l.b16 %v1623
    %v1910 = vunpack.c.l.b16 %v1624
    %v1911 = vunpack.c.h.b16 %v1624
    %v1912 = vunpack.c.l.b16 %v1625
    %v1913 = vunpack.c.l.b16 %v1626
    %v1914 = vunpack.c.h.b16 %v1626
    %v1915 = vunpack.c.l.b16 %v1627
    %v1916 = vunpack.c.l.b16 %v1628
    %v1917 = vunpack.c.h.b16 %v1628
    %v1918 = vunpack.c.l.b16 %v1629
    %v1919 = vunpack.c.l.b16 %v1630
    %v1920 = vunpack.c.h.b16 %v1630
    %v1921 = vunpack.c.l.b16 %v1631
    %v1922 = vunpack.c.l.b16 %v1632
    %v1923 = vunpack.c.h.b16 %v1632
    %v1924 = vunpack.c.l.b16 %v1633
    %v1925 = vunpack.c.l.b16 %v1634
    %v1926 = vunpack.c.h.b16 %v1634
    %v1927 = vunpack.c.l.b16 %v1635
    %v1928 = vunpack.c.l.b16 %v1636
    %v1929 = vunpack.c.h.b16 %v1636
    %v1930 = vunpack.c.l.b16 %v1637
    %v1931 = vunpack.c.l.b16 %v1638
    %v1932 = vunpack.c.h.b16 %v1638
    %v1933 = vunpack.c.l.b16 %v1639
    %v1934 = vunpack.c.l.b16 %v1640
    %v1935 = vunpack.c.h.b16 %v1640
    %v1936 = vunpack.c.l.b16 %v1641
    %v1937 = vunpack.c.l.b16 %v1642
    %v1938 = vunpack.c.h.b16 %v1642
    %v1939 = vunpack.c.l.b16 %v1643
    %v1940 = vunpack.c.l.b16 %v1644
    %v1941 = vunpack.c.h.b16 %v1644
    %v1942 = vunpack.c.l.b16 %v1645
    %v1943 = vunpack.c.l.b16 %v1646
    %v1944 = vunpack.c.h.b16 %v1646
    %v1945 = vunpack.c.l.b16 %v1647
    %v1946 = vunpack.c.l.b16 %v1648
    %v1947 = vunpack.c.h.b16 %v1648
    %v1948 = vunpack.c.l.b16 %v1649
    %v1949 = vunpack.c.l.b16 %v1650
    %v1950 = vunpack.c.h.b16 %v1650
    %v1951 = vunpack.c.l.b16 %v1651
    %v1952 = vunpack.c.l.b16 %v1652
    %v1953 = vunpack.c.h.b16 %v1652
    %v1954 = vunpack.c.l.b16 %v1653
    %v1955 = vunpack.c.l.b16 %v1654
    %v1956 = vunpack.c.h.b16 %v1654
    %v1957 = vunpack.c.l.b16 %v1655
    %v1958 = vunpack.c.l.b16 %v1656
    %v1959 = vunpack.c.h.b16 %v1656
    %v1960 = vunpack.c.l.b16 %v1657
    %v1961 = vunpack.c.l.b16 %v1658
    %v1962 = vunpack.c.h.b16 %v1658
    %v1963 = vunpack.c.l.b16 %v1659
    %v1964 = vunpack.c.l.b16 %v1660
    %v1965 = vunpack.c.h.b16 %v1660
    %v1966 = vunpack.c.l.b16 %v1661
    %v1967 = vunpack.c.l.b16 %v1662
    %v1968 = vunpack.c.h.b16 %v1662
    %v1969 = vunpack.c.l.b16 %v1663
    %v1970 = vunpack.c.l.b16 %v1664
    %v1971 = vunpack.c.h.b16 %v1664
    %v1972 = vunpack.c.l.b16 %v1665
    %v1973 = vunpack.c.l.b16 %v1666
    %v1974 = vunpack.c.h.b16 %v1666
    %v1975 = vunpack.c.l.b16 %v1667
    %v1976 = vunpack.c.l.b16 %v1668
    %v1977 = vunpack.c.h.b16 %v1668
    %v1978 = vunpack.c.l.b16 %v1669
    %v1979 = vunpack.c.l.b16 %v1670
    %v1980 = vunpack.c.h.b16 %v1670
    %v1981 = vunpack.c.l.b16 %v1671
    %v1982 = vunpack.c.l.b16 %v1672
    %v1983 = vunpack.c.h.b16 %v1672
    %v1984 = vunpack.c.l.b16 %v1673
    %v1985 = vunpack.c.l.b16 %v1674
    %v1986 = vunpack.c.h.b16 %v1674
    %v1987 = vunpack.c.l.b16 %v1675
    %v1988 = vunpack.c.l.b16 %v1676
    %v1989 = vunpack.c.h.b16 %v1676
    %v1990 = vunpack.c.l.b16 %v1677
    %v1991 = vunpack.c.l.b16 %v1678
    %v1992 = vunpack.c.h.b16 %v1678
    %v1993 = vunpack.c.l.b16 %v1679
    %v1994 = vunpack.c.l.b16 %v1680
    %v1995 = vunpack.c.h.b16 %v1680
    %v1996 = vunpack.c.l.b16 %v1681
    %v1997 = vunpack.c.l.b16 %v1682
    %v1998 = vunpack.c.h.b16 %v1682
    %v1999 = vunpack.c.l.b16 %v1683
    %v2000 = vunpack.c.l.b16 %v1684
    %v2001 = vunpack.c.h.b16 %v1684
    %v2002 = vunpack.c.l.b16 %v1685
    %v2003 = vunpack.c.l.b16 %v1686
    %v2004 = vunpack.c.h.b16 %v1686
    %v2005 = vunpack.c.l.b16 %v1687
    %v2006 = vunpack.c.l.b16 %v1688
    %v2007 = vunpack.c.h.b16 %v1688
    %v2008 = vunpack.c.l.b16 %v1689
    %v2009 = vunpack.c.l.b16 %v1690
    %v2010 = vunpack.c.h.b16 %v1690
    %v2011 = vunpack.c.l.b16 %v1691
    %v2012 = vpack.c.b16 %v1823, %v1820
    %v2013 = vpack.c.b16 %v1824, %v1821
    %v2014 = vpack.c.b16 %v1825, %v1822
    %v2015 = vpack.c.b16 %v1829, %v1826
    %v2016 = vpack.c.b16 %v1830, %v1827
    %v2017 = vpack.c.b16 %v1831, %v1828
    %v2018 = vpack.c.b16 %v1835, %v1832
    %v2019 = vpack.c.b16 %v1836, %v1833
    %v2020 = vpack.c.b16 %v1837, %v1834
    %v2021 = vpack.c.b16 %v1841, %v1838
    %v2022 = vpack.c.b16 %v1842, %v1839
    %v2023 = vpack.c.b16 %v1843, %v1840
    %v2024 = vpack.c.b16 %v1847, %v1844
    %v2025 = vpack.c.b16 %v1848, %v1845
    %v2026 = vpack.c.b16 %v1849, %v1846
    %v2027 = vpack.c.b16 %v1853, %v1850
    %v2028 = vpack.c.b16 %v1854, %v1851
    %v2029 = vpack.c.b16 %v1855, %v1852
    %v2030 = vpack.c.b16 %v1859, %v1856
    %v2031 = vpack.c.b16 %v1860, %v1857
    %v2032 = vpack.c.b16 %v1861, %v1858
    %v2033 = vpack.c.b16 %v1865, %v1862
    %v2034 = vpack.c.b16 %v1866, %v1863
    %v2035 = vpack.c.b16 %v1867, %v1864
    %v2036 = vpack.c.b16 %v1871, %v1868
    %v2037 = vpack.c.b16 %v1872, %v1869
    %v2038 = vpack.c.b16 %v1873, %v1870
    %v2039 = vpack.c.b16 %v1877, %v1874
    %v2040 = vpack.c.b16 %v1878, %v1875
    %v2041 = vpack.c.b16 %v1879, %v1876
    %v2042 = vpack.c.b16 %v1883, %v1880
    %v2043 = vpack.c.b16 %v1884, %v1881
    %v2044 = vpack.c.b16 %v1885, %v1882
    %v2045 = vpack.c.b16 %v1889, %v1886
    %v2046 = vpack.c.b16 %v1890, %v1887
    %v2047 = vpack.c.b16 %v1891, %v1888
    %v2048 = vpack.c.b16 %v1895, %v1892
    %v2049 = vpack.c.b16 %v1896, %v1893
    %v2050 = vpack.c.b16 %v1897, %v1894
    %v2051 = vpack.c.b16 %v1901, %v1898
    %v2052 = vpack.c.b16 %v1902, %v1899
    %v2053 = vpack.c.b16 %v1903, %v1900
    %v2054 = vpack.c.b16 %v1907, %v1904
    %v2055 = vpack.c.b16 %v1908, %v1905
    %v2056 = vpack.c.b16 %v1909, %v1906
    %v2057 = vpack.c.b16 %v1913, %v1910
    %v2058 = vpack.c.b16 %v1914, %v1911
    %v2059 = vpack.c.b16 %v1915, %v1912
    %v2060 = vpack.c.b16 %v1919, %v1916
    %v2061 = vpack.c.b16 %v1920, %v1917
    %v2062 = vpack.c.b16 %v1921, %v1918
    %v2063 = vpack.c.b16 %v1925, %v1922
    %v2064 = vpack.c.b16 %v1926, %v1923
    %v2065 = vpack.c.b16 %v1927, %v1924
    %v2066 = vpack.c.b16 %v1931, %v1928
    %v2067 = vpack.c.b16 %v1932, %v1929
    %v2068 = vpack.c.b16 %v1933, %v1930
    %v2069 = vpack.c.b16 %v1937, %v1934
    %v2070 = vpack.c.b16 %v1938, %v1935
    %v2071 = vpack.c.b16 %v1939, %v1936
    %v2072 = vpack.c.b16 %v1943, %v1940
    %v2073 = vpack.c.b16 %v1944, %v1941
    %v2074 = vpack.c.b16 %v1945, %v1942
    %v2075 = vpack.c.b16 %v1949, %v1946
    %v2076 = vpack.c.b16 %v1950, %v1947
    %v2077 = vpack.c.b16 %v1951, %v1948
    %v2078 = vpack.c.b16 %v1955, %v1952
    %v2079 = vpack.c.b16 %v1956, %v1953
    %v2080 = vpack.c.b16 %v1957, %v1954
    %v2081 = vpack.c.b16 %v1961, %v1958
    %v2082 = vpack.c.b16 %v1962, %v1959
    %v2083 = vpack.c.b16 %v1963, %v1960
    %v2084 = vpack.c.b16 %v1967, %v1964
    %v2085 = vpack.c.b16 %v1968, %v1965
    %v2086 = vpack.c.b16 %v1969, %v1966
    %v2087 = vpack.c.b16 %v1973, %v1970
    %v2088 = vpack.c.b16 %v1974, %v1971
    %v2089 = vpack.c.b16 %v1975, %v1972
    %v2090 = vpack.c.b16 %v1979, %v1976
    %v2091 = vpack.c.b16 %v1980, %v1977
    %v2092 = vpack.c.b16 %v1981, %v1978
    %v2093 = vpack.c.b16 %v1985, %v1982
    %v2094 = vpack.c.b16 %v1986, %v1983
    %v2095 = vpack.c.b16 %v1987, %v1984
    %v2096 = vpack.c.b16 %v1991, %v1988
    %v2097 = vpack.c.b16 %v1992, %v1989
    %v2098 = vpack.c.b16 %v1993, %v1990
    %v2099 = vpack.c.b16 %v1997, %v1994
    %v2100 = vpack.c.b16 %v1998, %v1995
    %v2101 = vpack.c.b16 %v1999, %v1996
    %v2102 = vpack.c.b16 %v2003, %v2000
    %v2103 = vpack.c.b16 %v2004, %v2001
    %v2104 = vpack.c.b16 %v2005, %v2002
    %v2105 = vpack.c.b16 %v2009, %v2006
    %v2106 = vpack.c.b16 %v2010, %v2007
    %v2107 = vpack.c.b16 %v2011, %v2008
    %2204 = vmatprep.subr.bf16.mxu0 %v2013
    %2205 = vmatpush1.bf16.msra.mxu0 %v2012
    %2206 = vmatprep.subr.bf16.mxu0 %v2016
    %2207 = vmatpush1.bf16.msra.mxu0 %v2015
    %2208 = vmatprep.subr.bf16.mxu0 %v2019
    %2209 = vmatpush1.bf16.msra.mxu0 %v2018
    %2210 = vmatprep.subr.bf16.mxu0 %v2022
    %2211 = vmatpush1.bf16.msra.mxu0 %v2021
    %2212 = vmatprep.subr.bf16.mxu0 %v2025
    %2213 = vmatpush1.bf16.msra.mxu0 %v2024
    %2214 = vmatprep.subr.bf16.mxu0 %v2028
    %2215 = vmatpush1.bf16.msra.mxu0 %v2027
    %2216 = vmatprep.subr.bf16.mxu0 %v2031
    %2217 = vmatpush1.bf16.msra.mxu0 %v2030
    %2218 = vmatprep.subr.bf16.mxu0 %v2034
    %2219 = vmatpush1.bf16.msra.mxu0 %v2033
    %2220 = vmatprep.subr.bf16.mxu0 %v2037
    %2221 = vmatpush1.bf16.msra.mxu0 %v2036
    %2222 = vmatprep.subr.bf16.mxu0 %v2040
    %2223 = vmatpush1.bf16.msra.mxu0 %v2039
    %2224 = vmatprep.subr.bf16.mxu0 %v2043
    %2225 = vmatpush1.bf16.msra.mxu0 %v2042
    %2226 = vmatprep.subr.bf16.mxu0 %v2046
    %2227 = vmatpush1.bf16.msra.mxu0 %v2045
    %2228 = vmatprep.subr.bf16.mxu0 %v2049
    %2229 = vmatpush1.bf16.msra.mxu0 %v2048
    %2230 = vmatprep.subr.bf16.mxu0 %v2052
    %2231 = vmatpush1.bf16.msra.mxu0 %v2051
    %2232 = vmatprep.subr.bf16.mxu0 %v2055
    %2233 = vmatpush1.bf16.msra.mxu0 %v2054
    %2234 = vmatprep.subr.bf16.mxu0 %v2058
    %2235 = vmatpush1.bf16.msra.mxu0 %v2057
    %2236 = vmatprep.mubr.bf16.mxu0 %v1557
    %2237 = vmatmul.mubr.bf16.gmra.mrb[0].mxu0 %v1556
    %v2238 = vpop.f32.mrb[0].mxu0
    %v2239 = vadd.f32 %v1550, %v2238
    %v2240 = vpop.f32.mrb[0].mxu0
    %v2241 = vadd.f32 %v1551, %v2240
    %v2242 = vpop.f32.mrb[0].mxu0
    %v2243 = vpop.f32.mrb[0].mxu0
    %2244 = vdwg.mxu0
    %2245 = vmatprep.subr.bf16.mxu0 %v2061
    %2246 = vmatpush1.bf16.msra.mxu0 %v2060
    %2247 = vmatprep.subr.bf16.mxu0 %v2064
    %2248 = vmatpush1.bf16.msra.mxu0 %v2063
    %2249 = vmatprep.subr.bf16.mxu0 %v2067
    %2250 = vmatpush1.bf16.msra.mxu0 %v2066
    %2251 = vmatprep.subr.bf16.mxu0 %v2070
    %2252 = vmatpush1.bf16.msra.mxu0 %v2069
    %2253 = vmatprep.subr.bf16.mxu0 %v2073
    %2254 = vmatpush1.bf16.msra.mxu0 %v2072
    %2255 = vmatprep.subr.bf16.mxu0 %v2076
    %2256 = vmatpush1.bf16.msra.mxu0 %v2075
    %2257 = vmatprep.subr.bf16.mxu0 %v2079
    %2258 = vmatpush1.bf16.msra.mxu0 %v2078
    %2259 = vmatprep.subr.bf16.mxu0 %v2082
    %2260 = vmatpush1.bf16.msra.mxu0 %v2081
    %2261 = vmatprep.subr.bf16.mxu0 %v2085
    %2262 = vmatpush1.bf16.msra.mxu0 %v2084
    %2263 = vmatprep.subr.bf16.mxu0 %v2088
    %2264 = vmatpush1.bf16.msra.mxu0 %v2087
    %2265 = vmatprep.subr.bf16.mxu0 %v2091
    %2266 = vmatpush1.bf16.msra.mxu0 %v2090
    %2267 = vmatprep.subr.bf16.mxu0 %v2094
    %2268 = vmatpush1.bf16.msra.mxu0 %v2093
    %2269 = vmatprep.subr.bf16.mxu0 %v2097
    %2270 = vmatpush1.bf16.msra.mxu0 %v2096
    %2271 = vmatprep.subr.bf16.mxu0 %v2100
    %2272 = vmatpush1.bf16.msra.mxu0 %v2099
    %2273 = vmatprep.subr.bf16.mxu0 %v2103
    %2274 = vmatpush1.bf16.msra.mxu0 %v2102
    %2275 = vmatprep.subr.bf16.mxu0 %v2106
    %2276 = vmatpush1.bf16.msra.mxu0 %v2105
    %2277 = vmatprep.mubr.bf16.mxu0 %v1559
    %2278 = vmatmul.mubr.bf16.gmra.mrb[0].mxu0 %v1558
    %v2279 = vpop.f32.mrb[0].mxu0
    %v2280 = vadd.f32 %v2239, %v2279
    %v2281 = vpop.f32.mrb[0].mxu0
    %v2282 = vadd.f32 %v2241, %v2281
    %v2283 = vpop.f32.mrb[0].mxu0
    %v2284 = vpop.f32.mrb[0].mxu0
    %2285 = vdwg.mxu0
    %2286 = vmatprep.subr.bf16.mxu0 0
    %2287 = vmatpush1.bf16.msra.mxu0 %v2014
    %2288 = vmatprep.subr.bf16.mxu0 0
    %2289 = vmatpush1.bf16.msra.mxu0 %v2017
    %2290 = vmatprep.subr.bf16.mxu0 0
    %2291 = vmatpush1.bf16.msra.mxu0 %v2020
    %2292 = vmatprep.subr.bf16.mxu0 0
    %2293 = vmatpush1.bf16.msra.mxu0 %v2023
    %2294 = vmatprep.subr.bf16.mxu0 0
    %2295 = vmatpush1.bf16.msra.mxu0 %v2026
    %2296 = vmatprep.subr.bf16.mxu0 0
    %2297 = vmatpush1.bf16.msra.mxu0 %v2029
    %2298 = vmatprep.subr.bf16.mxu0 0
    %2299 = vmatpush1.bf16.msra.mxu0 %v2032
    %2300 = vmatprep.subr.bf16.mxu0 0
    %2301 = vmatpush1.bf16.msra.mxu0 %v2035
    %2302 = vmatprep.subr.bf16.mxu0 0
    %2303 = vmatpush1.bf16.msra.mxu0 %v2038
    %2304 = vmatprep.subr.bf16.mxu0 0
    %2305 = vmatpush1.bf16.msra.mxu0 %v2041
    %2306 = vmatprep.subr.bf16.mxu0 0
    %2307 = vmatpush1.bf16.msra.mxu0 %v2044
    %2308 = vmatprep.subr.bf16.mxu0 0
    %2309 = vmatpush1.bf16.msra.mxu0 %v2047
    %2310 = vmatprep.subr.bf16.mxu0 0
    %2311 = vmatpush1.bf16.msra.mxu0 %v2050
    %2312 = vmatprep.subr.bf16.mxu0 0
    %2313 = vmatpush1.bf16.msra.mxu0 %v2053
    %2314 = vmatprep.subr.bf16.mxu0 0
    %2315 = vmatpush1.bf16.msra.mxu0 %v2056
    %2316 = vmatprep.subr.bf16.mxu0 0
    %2317 = vmatpush1.bf16.msra.mxu0 %v2059
    %2318 = vmatprep.mubr.bf16.mxu0 %v1557
    %2319 = vmatmul.mubr.bf16.gmra.mrb[0].mxu0 %v1556
    %v2320 = vpop.f32.mrb[0].mxu0
    %v2321 = vadd.f32 %v1552, %v2320
    %v2322 = vpop.f32.mrb[0].mxu0
    %v2323 = vpop.f32.mrb[0].mxu0
    %v2324 = vpop.f32.mrb[0].mxu0
    %2325 = vdwg.mxu0
    %2326 = vmatprep.subr.bf16.mxu0 0
    %2327 = vmatpush1.bf16.msra.mxu0 %v2062
    %2328 = vmatprep.subr.bf16.mxu0 0
    %2329 = vmatpush1.bf16.msra.mxu0 %v2065
    %2330 = vmatprep.subr.bf16.mxu0 0
    %2331 = vmatpush1.bf16.msra.mxu0 %v2068
    %2332 = vmatprep.subr.bf16.mxu0 0
    %2333 = vmatpush1.bf16.msra.mxu0 %v2071
    %2334 = vmatprep.subr.bf16.mxu0 0
    %2335 = vmatpush1.bf16.msra.mxu0 %v2074
    %2336 = vmatprep.subr.bf16.mxu0 0
    %2337 = vmatpush1.bf16.msra.mxu0 %v2077
    %2338 = vmatprep.subr.bf16.mxu0 0
    %2339 = vmatpush1.bf16.msra.mxu0 %v2080
    %2340 = vmatprep.subr.bf16.mxu0 0
    %2341 = vmatpush1.bf16.msra.mxu0 %v2083
    %2342 = vmatprep.subr.bf16.mxu0 0
    %2343 = vmatpush1.bf16.msra.mxu0 %v2086
    %2344 = vmatprep.subr.bf16.mxu0 0
    %2345 = vmatpush1.bf16.msra.mxu0 %v2089
    %2346 = vmatprep.subr.bf16.mxu0 0
    %2347 = vmatpush1.bf16.msra.mxu0 %v2092
    %2348 = vmatprep.subr.bf16.mxu0 0
    %2349 = vmatpush1.bf16.msra.mxu0 %v2095
    %2350 = vmatprep.subr.bf16.mxu0 0
    %2351 = vmatpush1.bf16.msra.mxu0 %v2098
    %2352 = vmatprep.subr.bf16.mxu0 0
    %2353 = vmatpush1.bf16.msra.mxu0 %v2101
    %2354 = vmatprep.subr.bf16.mxu0 0
    %2355 = vmatpush1.bf16.msra.mxu0 %v2104
    %2356 = vmatprep.subr.bf16.mxu0 0
    %2357 = vmatpush1.bf16.msra.mxu0 %v2107
    %2358 = vmatprep.mubr.bf16.mxu0 %v1559
    %2359 = vmatmul.mubr.bf16.gmra.mrb[0].mxu0 %v1558
    %v2360 = vpop.f32.mrb[0].mxu0
    %v2361 = vadd.f32 %v2321, %v2360
    %v2362 = vpop.f32.mrb[0].mxu0
    %v2363 = vpop.f32.mrb[0].mxu0
    %v2364 = vpop.f32.mrb[0].mxu0
    %2365 = vdwg.mxu0
    %vm2366 = vcmp.gt.f32.partialorder %v2280, 0.0
    %vm2367 = vcmp.gt.f32.partialorder %v2282, 0.0
    %vm2368 = vcmp.gt.f32.partialorder %v2361, 0.0
    %v2369 = vmul.f32 %v2280, 0.01
    %v2370 = vmul.f32 %v2282, 0.01
    %v2371 = vmul.f32 %v2361, 0.01
    %v2372 = vsel %vm2366, %v2280, %v2369
    %v2373 = vsel %vm2367, %v2282, %v2370
    %v2374 = vsel %vm2368, %v2361, %v2371
    %v2375 = vld [vmem:[#allocation23] sm:$0xff]
    %v2376 = vld [vmem:[#allocation23 + $0x8] sm:$0xf]
    %v2377 = vld [vmem:[#allocation23 + $0xc] sm:$0xff]
    %v2378 = vld [vmem:[#allocation23 + $0x14] sm:$0xf]
    %v2379 = vld [vmem:[#allocation23 + $0x18] sm:$0xff]
    %v2380 = vld [vmem:[#allocation23 + $0x20] sm:$0xf]
    %v2381 = vld [vmem:[#allocation23 + $0x24] sm:$0xff]
    %v2382 = vld [vmem:[#allocation23 + $0x2c] sm:$0xf]
    %v2383 = vld [vmem:[#allocation23 + $0x30] sm:$0xff]
    %v2384 = vld [vmem:[#allocation23 + $0x38] sm:$0xf]
    %v2385 = vld [vmem:[#allocation23 + $0x3c] sm:$0xff]
    %v2386 = vld [vmem:[#allocation23 + $0x44] sm:$0xf]
    %v2387 = vld [vmem:[#allocation23 + $0x48] sm:$0xff]
    %v2388 = vld [vmem:[#allocation23 + $0x50] sm:$0xf]
    %v2389 = vld [vmem:[#allocation23 + $0x54] sm:$0xff]
    %v2390 = vld [vmem:[#allocation23 + $0x5c] sm:$0xf]
    %v2391 = vld [vmem:[#allocation23 + $0x60] sm:$0xff]
    %v2392 = vld [vmem:[#allocation23 + $0x68] sm:$0xf]
    %v2393 = vld [vmem:[#allocation23 + $0x6c] sm:$0xff]
    %v2394 = vld [vmem:[#allocation23 + $0x74] sm:$0xf]
    %v2395 = vld [vmem:[#allocation23 + $0x78] sm:$0xff]
    %v2396 = vld [vmem:[#allocation23 + $0x80] sm:$0xf]
    %v2397 = vld [vmem:[#allocation23 + $0x84] sm:$0xff]
    %v2398 = vld [vmem:[#allocation23 + $0x8c] sm:$0xf]
    %v2399 = vld [vmem:[#allocation23 + $0x90] sm:$0xff]
    %v2400 = vld [vmem:[#allocation23 + $0x98] sm:$0xf]
    %v2401 = vld [vmem:[#allocation23 + $0x9c] sm:$0xff]
    %v2402 = vld [vmem:[#allocation23 + $0xa4] sm:$0xf]
    %v2403 = vld [vmem:[#allocation23 + $0xa8] sm:$0xff]
    %v2404 = vld [vmem:[#allocation23 + $0xb0] sm:$0xf]
    %v2405 = vld [vmem:[#allocation23 + $0xb4] sm:$0xff]
    %v2406 = vld [vmem:[#allocation23 + $0xbc] sm:$0xf]
    %v2407 = vld [vmem:[#allocation23 + $0xc0] sm:$0xff]
    %v2408 = vld [vmem:[#allocation23 + $0xc8] sm:$0xf]
    %v2409 = vld [vmem:[#allocation23 + $0xcc] sm:$0xff]
    %v2410 = vld [vmem:[#allocation23 + $0xd4] sm:$0xf]
    %v2411 = vld [vmem:[#allocation23 + $0xd8] sm:$0xff]
    %v2412 = vld [vmem:[#allocation23 + $0xe0] sm:$0xf]
    %v2413 = vld [vmem:[#allocation23 + $0xe4] sm:$0xff]
    %v2414 = vld [vmem:[#allocation23 + $0xec] sm:$0xf]
    %v2415 = vld [vmem:[#allocation23 + $0xf0] sm:$0xff]
    %v2416 = vld [vmem:[#allocation23 + $0xf8] sm:$0xf]
    %v2417 = vld [vmem:[#allocation23 + $0xfc] sm:$0xff]
    %v2418 = vld [vmem:[#allocation23 + $0x104] sm:$0xf]
    %v2419 = vld [vmem:[#allocation23 + $0x108] sm:$0xff]
    %v2420 = vld [vmem:[#allocation23 + $0x110] sm:$0xf]
    %v2421 = vld [vmem:[#allocation23 + $0x114] sm:$0xff]
    %v2422 = vld [vmem:[#allocation23 + $0x11c] sm:$0xf]
    %v2423 = vld [vmem:[#allocation23 + $0x120] sm:$0xff]
    %v2424 = vld [vmem:[#allocation23 + $0x128] sm:$0xf]
    %v2425 = vld [vmem:[#allocation23 + $0x12c] sm:$0xff]
    %v2426 = vld [vmem:[#allocation23 + $0x134] sm:$0xf]
    %v2427 = vld [vmem:[#allocation23 + $0x138] sm:$0xff]
    %v2428 = vld [vmem:[#allocation23 + $0x140] sm:$0xf]
    %v2429 = vld [vmem:[#allocation23 + $0x144] sm:$0xff]
    %v2430 = vld [vmem:[#allocation23 + $0x14c] sm:$0xf]
    %v2431 = vld [vmem:[#allocation23 + $0x150] sm:$0xff]
    %v2432 = vld [vmem:[#allocation23 + $0x158] sm:$0xf]
    %v2433 = vld [vmem:[#allocation23 + $0x15c] sm:$0xff]
    %v2434 = vld [vmem:[#allocation23 + $0x164] sm:$0xf]
    %v2435 = vld [vmem:[#allocation23 + $0x168] sm:$0xff]
    %v2436 = vld [vmem:[#allocation23 + $0x170] sm:$0xf]
    %v2437 = vld [vmem:[#allocation23 + $0x174] sm:$0xff]
    %v2438 = vld [vmem:[#allocation23 + $0x17c] sm:$0xf]
    %v2439 = vld [vmem:[#allocation23 + $0x180] sm:$0xff]
    %v2440 = vld [vmem:[#allocation23 + $0x188] sm:$0xf]
    %v2441 = vld [vmem:[#allocation23 + $0x18c] sm:$0xff]
    %v2442 = vld [vmem:[#allocation23 + $0x194] sm:$0xf]
    %v2443 = vld [vmem:[#allocation23 + $0x198] sm:$0xff]
    %v2444 = vld [vmem:[#allocation23 + $0x1a0] sm:$0xf]
    %v2445 = vld [vmem:[#allocation23 + $0x1a4] sm:$0xff]
    %v2446 = vld [vmem:[#allocation23 + $0x1ac] sm:$0xf]
    %v2447 = vld [vmem:[#allocation23 + $0x1b0] sm:$0xff]
    %v2448 = vld [vmem:[#allocation23 + $0x1b8] sm:$0xf]
    %v2449 = vld [vmem:[#allocation23 + $0x1bc] sm:$0xff]
    %v2450 = vld [vmem:[#allocation23 + $0x1c4] sm:$0xf]
    %v2451 = vld [vmem:[#allocation23 + $0x1c8] sm:$0xff]
    %v2452 = vld [vmem:[#allocation23 + $0x1d0] sm:$0xf]
    %v2453 = vld [vmem:[#allocation23 + $0x1d4] sm:$0xff]
    %v2454 = vld [vmem:[#allocation23 + $0x1dc] sm:$0xf]
    %v2455 = vld [vmem:[#allocation23 + $0x1e0] sm:$0xff]
    %v2456 = vld [vmem:[#allocation23 + $0x1e8] sm:$0xf]
    %v2457 = vld [vmem:[#allocation23 + $0x1ec] sm:$0xff]
    %v2458 = vld [vmem:[#allocation23 + $0x1f4] sm:$0xf]
    %v2459 = vld [vmem:[#allocation23 + $0x1f8] sm:$0xff]
    %v2460 = vld [vmem:[#allocation23 + $0x200] sm:$0xf]
    %v2461 = vld [vmem:[#allocation23 + $0x204] sm:$0xff]
    %v2462 = vld [vmem:[#allocation23 + $0x20c] sm:$0xf]
    %v2463 = vld [vmem:[#allocation23 + $0x210] sm:$0xff]
    %v2464 = vld [vmem:[#allocation23 + $0x218] sm:$0xf]
    %v2465 = vld [vmem:[#allocation23 + $0x21c] sm:$0xff]
    %v2466 = vld [vmem:[#allocation23 + $0x224] sm:$0xf]
    %v2467 = vld [vmem:[#allocation23 + $0x228] sm:$0xff]
    %v2468 = vld [vmem:[#allocation23 + $0x230] sm:$0xf]
    %v2469 = vld [vmem:[#allocation23 + $0x234] sm:$0xff]
    %v2470 = vld [vmem:[#allocation23 + $0x23c] sm:$0xf]
    %v2471 = vld [vmem:[#allocation23 + $0x240] sm:$0xff]
    %v2472 = vld [vmem:[#allocation23 + $0x248] sm:$0xf]
    %v2473 = vld [vmem:[#allocation23 + $0x24c] sm:$0xff]
    %v2474 = vld [vmem:[#allocation23 + $0x254] sm:$0xf]
    %v2475 = vld [vmem:[#allocation23 + $0x258] sm:$0xff]
    %v2476 = vld [vmem:[#allocation23 + $0x260] sm:$0xf]
    %v2477 = vld [vmem:[#allocation23 + $0x264] sm:$0xff]
    %v2478 = vld [vmem:[#allocation23 + $0x26c] sm:$0xf]
    %v2479 = vld [vmem:[#allocation23 + $0x270] sm:$0xff]
    %v2480 = vld [vmem:[#allocation23 + $0x278] sm:$0xf]
    %v2481 = vld [vmem:[#allocation23 + $0x27c] sm:$0xff]
    %v2482 = vld [vmem:[#allocation23 + $0x284] sm:$0xf]
    %v2483 = vld [vmem:[#allocation23 + $0x288] sm:$0xff]
    %v2484 = vld [vmem:[#allocation23 + $0x290] sm:$0xf]
    %v2485 = vld [vmem:[#allocation23 + $0x294] sm:$0xff]
    %v2486 = vld [vmem:[#allocation23 + $0x29c] sm:$0xf]
    %v2487 = vld [vmem:[#allocation23 + $0x2a0] sm:$0xff]
    %v2488 = vld [vmem:[#allocation23 + $0x2a8] sm:$0xf]
    %v2489 = vld [vmem:[#allocation23 + $0x2ac] sm:$0xff]
    %v2490 = vld [vmem:[#allocation23 + $0x2b4] sm:$0xf]
    %v2491 = vld [vmem:[#allocation23 + $0x2b8] sm:$0xff]
    %v2492 = vld [vmem:[#allocation23 + $0x2c0] sm:$0xf]
    %v2493 = vld [vmem:[#allocation23 + $0x2c4] sm:$0xff]
    %v2494 = vld [vmem:[#allocation23 + $0x2cc] sm:$0xf]
    %v2495 = vld [vmem:[#allocation23 + $0x2d0] sm:$0xff]
    %v2496 = vld [vmem:[#allocation23 + $0x2d8] sm:$0xf]
    %v2497 = vld [vmem:[#allocation23 + $0x2dc] sm:$0xff]
    %v2498 = vld [vmem:[#allocation23 + $0x2e4] sm:$0xf]
    %v2499 = vld [vmem:[#allocation23 + $0x2e8] sm:$0xff]
    %v2500 = vld [vmem:[#allocation23 + $0x2f0] sm:$0xf]
    %v2501 = vld [vmem:[#allocation23 + $0x2f4] sm:$0xff]
    %v2502 = vld [vmem:[#allocation23 + $0x2fc] sm:$0xf]
    %v2631 = vunpack.c.l.b16 %v2375
    %v2632 = vunpack.c.h.b16 %v2375
    %v2633 = vunpack.c.l.b16 %v2376
    %v2634 = vunpack.c.l.b16 %v2377
    %v2635 = vunpack.c.h.b16 %v2377
    %v2636 = vunpack.c.l.b16 %v2378
    %v2637 = vunpack.c.l.b16 %v2379
    %v2638 = vunpack.c.h.b16 %v2379
    %v2639 = vunpack.c.l.b16 %v2380
    %v2640 = vunpack.c.l.b16 %v2381
    %v2641 = vunpack.c.h.b16 %v2381
    %v2642 = vunpack.c.l.b16 %v2382
    %v2643 = vunpack.c.l.b16 %v2383
    %v2644 = vunpack.c.h.b16 %v2383
    %v2645 = vunpack.c.l.b16 %v2384
    %v2646 = vunpack.c.l.b16 %v2385
    %v2647 = vunpack.c.h.b16 %v2385
    %v2648 = vunpack.c.l.b16 %v2386
    %v2649 = vunpack.c.l.b16 %v2387
    %v2650 = vunpack.c.h.b16 %v2387
    %v2651 = vunpack.c.l.b16 %v2388
    %v2652 = vunpack.c.l.b16 %v2389
    %v2653 = vunpack.c.h.b16 %v2389
    %v2654 = vunpack.c.l.b16 %v2390
    %v2655 = vunpack.c.l.b16 %v2391
    %v2656 = vunpack.c.h.b16 %v2391
    %v2657 = vunpack.c.l.b16 %v2392
    %v2658 = vunpack.c.l.b16 %v2393
    %v2659 = vunpack.c.h.b16 %v2393
    %v2660 = vunpack.c.l.b16 %v2394
    %v2661 = vunpack.c.l.b16 %v2395
    %v2662 = vunpack.c.h.b16 %v2395
    %v2663 = vunpack.c.l.b16 %v2396
    %v2664 = vunpack.c.l.b16 %v2397
    %v2665 = vunpack.c.h.b16 %v2397
    %v2666 = vunpack.c.l.b16 %v2398
    %v2667 = vunpack.c.l.b16 %v2399
    %v2668 = vunpack.c.h.b16 %v2399
    %v2669 = vunpack.c.l.b16 %v2400
    %v2670 = vunpack.c.l.b16 %v2401
    %v2671 = vunpack.c.h.b16 %v2401
    %v2672 = vunpack.c.l.b16 %v2402
    %v2673 = vunpack.c.l.b16 %v2403
    %v2674 = vunpack.c.h.b16 %v2403
    %v2675 = vunpack.c.l.b16 %v2404
    %v2676 = vunpack.c.l.b16 %v2405
    %v2677 = vunpack.c.h.b16 %v2405
    %v2678 = vunpack.c.l.b16 %v2406
    %v2679 = vunpack.c.l.b16 %v2407
    %v2680 = vunpack.c.h.b16 %v2407
    %v2681 = vunpack.c.l.b16 %v2408
    %v2682 = vunpack.c.l.b16 %v2409
    %v2683 = vunpack.c.h.b16 %v2409
    %v2684 = vunpack.c.l.b16 %v2410
    %v2685 = vunpack.c.l.b16 %v2411
    %v2686 = vunpack.c.h.b16 %v2411
    %v2687 = vunpack.c.l.b16 %v2412
    %v2688 = vunpack.c.l.b16 %v2413
    %v2689 = vunpack.c.h.b16 %v2413
    %v2690 = vunpack.c.l.b16 %v2414
    %v2691 = vunpack.c.l.b16 %v2415
    %v2692 = vunpack.c.h.b16 %v2415
    %v2693 = vunpack.c.l.b16 %v2416
    %v2694 = vunpack.c.l.b16 %v2417
    %v2695 = vunpack.c.h.b16 %v2417
    %v2696 = vunpack.c.l.b16 %v2418
    %v2697 = vunpack.c.l.b16 %v2419
    %v2698 = vunpack.c.h.b16 %v2419
    %v2699 = vunpack.c.l.b16 %v2420
    %v2700 = vunpack.c.l.b16 %v2421
    %v2701 = vunpack.c.h.b16 %v2421
    %v2702 = vunpack.c.l.b16 %v2422
    %v2703 = vunpack.c.l.b16 %v2423
    %v2704 = vunpack.c.h.b16 %v2423
    %v2705 = vunpack.c.l.b16 %v2424
    %v2706 = vunpack.c.l.b16 %v2425
    %v2707 = vunpack.c.h.b16 %v2425
    %v2708 = vunpack.c.l.b16 %v2426
    %v2709 = vunpack.c.l.b16 %v2427
    %v2710 = vunpack.c.h.b16 %v2427
    %v2711 = vunpack.c.l.b16 %v2428
    %v2712 = vunpack.c.l.b16 %v2429
    %v2713 = vunpack.c.h.b16 %v2429
    %v2714 = vunpack.c.l.b16 %v2430
    %v2715 = vunpack.c.l.b16 %v2431
    %v2716 = vunpack.c.h.b16 %v2431
    %v2717 = vunpack.c.l.b16 %v2432
    %v2718 = vunpack.c.l.b16 %v2433
    %v2719 = vunpack.c.h.b16 %v2433
    %v2720 = vunpack.c.l.b16 %v2434
    %v2721 = vunpack.c.l.b16 %v2435
    %v2722 = vunpack.c.h.b16 %v2435
    %v2723 = vunpack.c.l.b16 %v2436
    %v2724 = vunpack.c.l.b16 %v2437
    %v2725 = vunpack.c.h.b16 %v2437
    %v2726 = vunpack.c.l.b16 %v2438
    %v2727 = vunpack.c.l.b16 %v2439
    %v2728 = vunpack.c.h.b16 %v2439
    %v2729 = vunpack.c.l.b16 %v2440
    %v2730 = vunpack.c.l.b16 %v2441
    %v2731 = vunpack.c.h.b16 %v2441
    %v2732 = vunpack.c.l.b16 %v2442
    %v2733 = vunpack.c.l.b16 %v2443
    %v2734 = vunpack.c.h.b16 %v2443
    %v2735 = vunpack.c.l.b16 %v2444
    %v2736 = vunpack.c.l.b16 %v2445
    %v2737 = vunpack.c.h.b16 %v2445
    %v2738 = vunpack.c.l.b16 %v2446
    %v2739 = vunpack.c.l.b16 %v2447
    %v2740 = vunpack.c.h.b16 %v2447
    %v2741 = vunpack.c.l.b16 %v2448
    %v2742 = vunpack.c.l.b16 %v2449
    %v2743 = vunpack.c.h.b16 %v2449
    %v2744 = vunpack.c.l.b16 %v2450
    %v2745 = vunpack.c.l.b16 %v2451
    %v2746 = vunpack.c.h.b16 %v2451
    %v2747 = vunpack.c.l.b16 %v2452
    %v2748 = vunpack.c.l.b16 %v2453
    %v2749 = vunpack.c.h.b16 %v2453
    %v2750 = vunpack.c.l.b16 %v2454
    %v2751 = vunpack.c.l.b16 %v2455
    %v2752 = vunpack.c.h.b16 %v2455
    %v2753 = vunpack.c.l.b16 %v2456
    %v2754 = vunpack.c.l.b16 %v2457
    %v2755 = vunpack.c.h.b16 %v2457
    %v2756 = vunpack.c.l.b16 %v2458
    %v2757 = vunpack.c.l.b16 %v2459
    %v2758 = vunpack.c.h.b16 %v2459
    %v2759 = vunpack.c.l.b16 %v2460
    %v2760 = vunpack.c.l.b16 %v2461
    %v2761 = vunpack.c.h.b16 %v2461
    %v2762 = vunpack.c.l.b16 %v2462
    %v2763 = vunpack.c.l.b16 %v2463
    %v2764 = vunpack.c.h.b16 %v2463
    %v2765 = vunpack.c.l.b16 %v2464
    %v2766 = vunpack.c.l.b16 %v2465
    %v2767 = vunpack.c.h.b16 %v2465
    %v2768 = vunpack.c.l.b16 %v2466
    %v2769 = vunpack.c.l.b16 %v2467
    %v2770 = vunpack.c.h.b16 %v2467
    %v2771 = vunpack.c.l.b16 %v2468
    %v2772 = vunpack.c.l.b16 %v2469
    %v2773 = vunpack.c.h.b16 %v2469
    %v2774 = vunpack.c.l.b16 %v2470
    %v2775 = vunpack.c.l.b16 %v2471
    %v2776 = vunpack.c.h.b16 %v2471
    %v2777 = vunpack.c.l.b16 %v2472
    %v2778 = vunpack.c.l.b16 %v2473
    %v2779 = vunpack.c.h.b16 %v2473
    %v2780 = vunpack.c.l.b16 %v2474
    %v2781 = vunpack.c.l.b16 %v2475
    %v2782 = vunpack.c.h.b16 %v2475
    %v2783 = vunpack.c.l.b16 %v2476
    %v2784 = vunpack.c.l.b16 %v2477
    %v2785 = vunpack.c.h.b16 %v2477
    %v2786 = vunpack.c.l.b16 %v2478
    %v2787 = vunpack.c.l.b16 %v2479
    %v2788 = vunpack.c.h.b16 %v2479
    %v2789 = vunpack.c.l.b16 %v2480
    %v2790 = vunpack.c.l.b16 %v2481
    %v2791 = vunpack.c.h.b16 %v2481
    %v2792 = vunpack.c.l.b16 %v2482
    %v2793 = vunpack.c.l.b16 %v2483
    %v2794 = vunpack.c.h.b16 %v2483
    %v2795 = vunpack.c.l.b16 %v2484
    %v2796 = vunpack.c.l.b16 %v2485
    %v2797 = vunpack.c.h.b16 %v2485
    %v2798 = vunpack.c.l.b16 %v2486
    %v2799 = vunpack.c.l.b16 %v2487
    %v2800 = vunpack.c.h.b16 %v2487
    %v2801 = vunpack.c.l.b16 %v2488
    %v2802 = vunpack.c.l.b16 %v2489
    %v2803 = vunpack.c.h.b16 %v2489
    %v2804 = vunpack.c.l.b16 %v2490
    %v2805 = vunpack.c.l.b16 %v2491
    %v2806 = vunpack.c.h.b16 %v2491
    %v2807 = vunpack.c.l.b16 %v2492
    %v2808 = vunpack.c.l.b16 %v2493
    %v2809 = vunpack.c.h.b16 %v2493
    %v2810 = vunpack.c.l.b16 %v2494
    %v2811 = vunpack.c.l.b16 %v2495
    %v2812 = vunpack.c.h.b16 %v2495
    %v2813 = vunpack.c.l.b16 %v2496
    %v2814 = vunpack.c.l.b16 %v2497
    %v2815 = vunpack.c.h.b16 %v2497
    %v2816 = vunpack.c.l.b16 %v2498
    %v2817 = vunpack.c.l.b16 %v2499
    %v2818 = vunpack.c.h.b16 %v2499
    %v2819 = vunpack.c.l.b16 %v2500
    %v2820 = vunpack.c.l.b16 %v2501
    %v2821 = vunpack.c.h.b16 %v2501
    %v2822 = vunpack.c.l.b16 %v2502
    %v2823 = vpack.c.b16 %v2634, %v2631
    %v2824 = vpack.c.b16 %v2635, %v2632
    %v2825 = vpack.c.b16 %v2636, %v2633
    %v2826 = vpack.c.b16 %v2640, %v2637
    %v2827 = vpack.c.b16 %v2641, %v2638
    %v2828 = vpack.c.b16 %v2642, %v2639
    %v2829 = vpack.c.b16 %v2646, %v2643
    %v2830 = vpack.c.b16 %v2647, %v2644
    %v2831 = vpack.c.b16 %v2648, %v2645
    %v2832 = vpack.c.b16 %v2652, %v2649
    %v2833 = vpack.c.b16 %v2653, %v2650
    %v2834 = vpack.c.b16 %v2654, %v2651
    %v2835 = vpack.c.b16 %v2658, %v2655
    %v2836 = vpack.c.b16 %v2659, %v2656
    %v2837 = vpack.c.b16 %v2660, %v2657
    %v2838 = vpack.c.b16 %v2664, %v2661
    %v2839 = vpack.c.b16 %v2665, %v2662
    %v2840 = vpack.c.b16 %v2666, %v2663
    %v2841 = vpack.c.b16 %v2670, %v2667
    %v2842 = vpack.c.b16 %v2671, %v2668
    %v2843 = vpack.c.b16 %v2672, %v2669
    %v2844 = vpack.c.b16 %v2676, %v2673
    %v2845 = vpack.c.b16 %v2677, %v2674
    %v2846 = vpack.c.b16 %v2678, %v2675
    %v2847 = vpack.c.b16 %v2682, %v2679
    %v2848 = vpack.c.b16 %v2683, %v2680
    %v2849 = vpack.c.b16 %v2684, %v2681
    %v2850 = vpack.c.b16 %v2688, %v2685
    %v2851 = vpack.c.b16 %v2689, %v2686
    %v2852 = vpack.c.b16 %v2690, %v2687
    %v2853 = vpack.c.b16 %v2694, %v2691
    %v2854 = vpack.c.b16 %v2695, %v2692
    %v2855 = vpack.c.b16 %v2696, %v2693
    %v2856 = vpack.c.b16 %v2700, %v2697
    %v2857 = vpack.c.b16 %v2701, %v2698
    %v2858 = vpack.c.b16 %v2702, %v2699
    %v2859 = vpack.c.b16 %v2706, %v2703
    %v2860 = vpack.c.b16 %v2707, %v2704
    %v2861 = vpack.c.b16 %v2708, %v2705
    %v2862 = vpack.c.b16 %v2712, %v2709
    %v2863 = vpack.c.b16 %v2713, %v2710
    %v2864 = vpack.c.b16 %v2714, %v2711
    %v2865 = vpack.c.b16 %v2718, %v2715
    %v2866 = vpack.c.b16 %v2719, %v2716
    %v2867 = vpack.c.b16 %v2720, %v2717
    %v2868 = vpack.c.b16 %v2724, %v2721
    %v2869 = vpack.c.b16 %v2725, %v2722
    %v2870 = vpack.c.b16 %v2726, %v2723
    %v2871 = vpack.c.b16 %v2730, %v2727
    %v2872 = vpack.c.b16 %v2731, %v2728
    %v2873 = vpack.c.b16 %v2732, %v2729
    %v2874 = vpack.c.b16 %v2736, %v2733
    %v2875 = vpack.c.b16 %v2737, %v2734
    %v2876 = vpack.c.b16 %v2738, %v2735
    %v2877 = vpack.c.b16 %v2742, %v2739
    %v2878 = vpack.c.b16 %v2743, %v2740
    %v2879 = vpack.c.b16 %v2744, %v2741
    %v2880 = vpack.c.b16 %v2748, %v2745
    %v2881 = vpack.c.b16 %v2749, %v2746
    %v2882 = vpack.c.b16 %v2750, %v2747
    %v2883 = vpack.c.b16 %v2754, %v2751
    %v2884 = vpack.c.b16 %v2755, %v2752
    %v2885 = vpack.c.b16 %v2756, %v2753
    %v2886 = vpack.c.b16 %v2760, %v2757
    %v2887 = vpack.c.b16 %v2761, %v2758
    %v2888 = vpack.c.b16 %v2762, %v2759
    %v2889 = vpack.c.b16 %v2766, %v2763
    %v2890 = vpack.c.b16 %v2767, %v2764
    %v2891 = vpack.c.b16 %v2768, %v2765
    %v2892 = vpack.c.b16 %v2772, %v2769
    %v2893 = vpack.c.b16 %v2773, %v2770
    %v2894 = vpack.c.b16 %v2774, %v2771
    %v2895 = vpack.c.b16 %v2778, %v2775
    %v2896 = vpack.c.b16 %v2779, %v2776
    %v2897 = vpack.c.b16 %v2780, %v2777
    %v2898 = vpack.c.b16 %v2784, %v2781
    %v2899 = vpack.c.b16 %v2785, %v2782
    %v2900 = vpack.c.b16 %v2786, %v2783
    %v2901 = vpack.c.b16 %v2790, %v2787
    %v2902 = vpack.c.b16 %v2791, %v2788
    %v2903 = vpack.c.b16 %v2792, %v2789
    %v2904 = vpack.c.b16 %v2796, %v2793
    %v2905 = vpack.c.b16 %v2797, %v2794
    %v2906 = vpack.c.b16 %v2798, %v2795
    %v2907 = vpack.c.b16 %v2802, %v2799
    %v2908 = vpack.c.b16 %v2803, %v2800
    %v2909 = vpack.c.b16 %v2804, %v2801
    %v2910 = vpack.c.b16 %v2808, %v2805
    %v2911 = vpack.c.b16 %v2809, %v2806
    %v2912 = vpack.c.b16 %v2810, %v2807
    %v2913 = vpack.c.b16 %v2814, %v2811
    %v2914 = vpack.c.b16 %v2815, %v2812
    %v2915 = vpack.c.b16 %v2816, %v2813
    %v2916 = vpack.c.b16 %v2820, %v2817
    %v2917 = vpack.c.b16 %v2821, %v2818
    %v2918 = vpack.c.b16 %v2822, %v2819
    %3015 = vmatprep.subr.bf16.mxu0 %v2824
    %3016 = vmatpush1.bf16.msra.mxu0 %v2823
    %3017 = vmatprep.subr.bf16.mxu0 %v2827
    %3018 = vmatpush1.bf16.msra.mxu0 %v2826
    %3019 = vmatprep.subr.bf16.mxu0 %v2830
    %3020 = vmatpush1.bf16.msra.mxu0 %v2829
    %3021 = vmatprep.subr.bf16.mxu0 %v2833
    %3022 = vmatpush1.bf16.msra.mxu0 %v2832
    %3023 = vmatprep.subr.bf16.mxu0 %v2836
    %3024 = vmatpush1.bf16.msra.mxu0 %v2835
    %3025 = vmatprep.subr.bf16.mxu0 %v2839
    %3026 = vmatpush1.bf16.msra.mxu0 %v2838
    %3027 = vmatprep.subr.bf16.mxu0 %v2842
    %3028 = vmatpush1.bf16.msra.mxu0 %v2841
    %3029 = vmatprep.subr.bf16.mxu0 %v2845
    %3030 = vmatpush1.bf16.msra.mxu0 %v2844
    %3031 = vmatprep.subr.bf16.mxu0 %v2848
    %3032 = vmatpush1.bf16.msra.mxu0 %v2847
    %3033 = vmatprep.subr.bf16.mxu0 %v2851
    %3034 = vmatpush1.bf16.msra.mxu0 %v2850
    %3035 = vmatprep.subr.bf16.mxu0 %v2854
    %3036 = vmatpush1.bf16.msra.mxu0 %v2853
    %3037 = vmatprep.subr.bf16.mxu0 %v2857
    %3038 = vmatpush1.bf16.msra.mxu0 %v2856
    %3039 = vmatprep.subr.bf16.mxu0 %v2860
    %3040 = vmatpush1.bf16.msra.mxu0 %v2859
    %3041 = vmatprep.subr.bf16.mxu0 %v2863
    %3042 = vmatpush1.bf16.msra.mxu0 %v2862
    %3043 = vmatprep.subr.bf16.mxu0 %v2866
    %3044 = vmatpush1.bf16.msra.mxu0 %v2865
    %3045 = vmatprep.subr.bf16.mxu0 %v2869
    %3046 = vmatpush1.bf16.msra.mxu0 %v2868
    %3047 = vmatprep.mubr.bf16.mxu0 %v1561
    %3048 = vmatmul.mubr.bf16.gmra.mrb[0].mxu0 %v1560
    %v3049 = vpop.f32.mrb[0].mxu0
    %v3050 = vadd.f32 %v1553, %v3049
    %v3051 = vpop.f32.mrb[0].mxu0
    %v3052 = vadd.f32 %v1554, %v3051
    %v3053 = vpop.f32.mrb[0].mxu0
    %v3054 = vpop.f32.mrb[0].mxu0
    %3055 = vdwg.mxu0
    %3056 = vmatprep.subr.bf16.mxu0 %v2872
    %3057 = vmatpush1.bf16.msra.mxu0 %v2871
    %3058 = vmatprep.subr.bf16.mxu0 %v2875
    %3059 = vmatpush1.bf16.msra.mxu0 %v2874
    %3060 = vmatprep.subr.bf16.mxu0 %v2878
    %3061 = vmatpush1.bf16.msra.mxu0 %v2877
    %3062 = vmatprep.subr.bf16.mxu0 %v2881
    %3063 = vmatpush1.bf16.msra.mxu0 %v2880
    %3064 = vmatprep.subr.bf16.mxu0 %v2884
    %3065 = vmatpush1.bf16.msra.mxu0 %v2883
    %3066 = vmatprep.subr.bf16.mxu0 %v2887
    %3067 = vmatpush1.bf16.msra.mxu0 %v2886
    %3068 = vmatprep.subr.bf16.mxu0 %v2890
    %3069 = vmatpush1.bf16.msra.mxu0 %v2889
    %3070 = vmatprep.subr.bf16.mxu0 %v2893
    %3071 = vmatpush1.bf16.msra.mxu0 %v2892
    %3072 = vmatprep.subr.bf16.mxu0 %v2896
    %3073 = vmatpush1.bf16.msra.mxu0 %v2895
    %3074 = vmatprep.subr.bf16.mxu0 %v2899
    %3075 = vmatpush1.bf16.msra.mxu0 %v2898
    %3076 = vmatprep.subr.bf16.mxu0 %v2902
    %3077 = vmatpush1.bf16.msra.mxu0 %v2901
    %3078 = vmatprep.subr.bf16.mxu0 %v2905
    %3079 = vmatpush1.bf16.msra.mxu0 %v2904
    %3080 = vmatprep.subr.bf16.mxu0 %v2908
    %3081 = vmatpush1.bf16.msra.mxu0 %v2907
    %3082 = vmatprep.subr.bf16.mxu0 %v2911
    %3083 = vmatpush1.bf16.msra.mxu0 %v2910
    %3084 = vmatprep.subr.bf16.mxu0 %v2914
    %3085 = vmatpush1.bf16.msra.mxu0 %v2913
    %3086 = vmatprep.subr.bf16.mxu0 %v2917
    %3087 = vmatpush1.bf16.msra.mxu0 %v2916
    %3088 = vmatprep.mubr.bf16.mxu0 %v1563
    %3089 = vmatmul.mubr.bf16.gmra.mrb[0].mxu0 %v1562
    %v3090 = vpop.f32.mrb[0].mxu0
    %v3091 = vadd.f32 %v3050, %v3090
    %v3092 = vpop.f32.mrb[0].mxu0
    %v3093 = vadd.f32 %v3052, %v3092
    %v3094 = vpop.f32.mrb[0].mxu0
    %v3095 = vpop.f32.mrb[0].mxu0
    %3096 = vdwg.mxu0
    %3097 = vmatprep.subr.bf16.mxu0 0
    %3098 = vmatpush1.bf16.msra.mxu0 %v2825
    %3099 = vmatprep.subr.bf16.mxu0 0
    %3100 = vmatpush1.bf16.msra.mxu0 %v2828
    %3101 = vmatprep.subr.bf16.mxu0 0
    %3102 = vmatpush1.bf16.msra.mxu0 %v2831
    %3103 = vmatprep.subr.bf16.mxu0 0
    %3104 = vmatpush1.bf16.msra.mxu0 %v2834
    %3105 = vmatprep.subr.bf16.mxu0 0
    %3106 = vmatpush1.bf16.msra.mxu0 %v2837
    %3107 = vmatprep.subr.bf16.mxu0 0
    %3108 = vmatpush1.bf16.msra.mxu0 %v2840
    %3109 = vmatprep.subr.bf16.mxu0 0
    %3110 = vmatpush1.bf16.msra.mxu0 %v2843
    %3111 = vmatprep.subr.bf16.mxu0 0
    %3112 = vmatpush1.bf16.msra.mxu0 %v2846
    %3113 = vmatprep.subr.bf16.mxu0 0
    %3114 = vmatpush1.bf16.msra.mxu0 %v2849
    %3115 = vmatprep.subr.bf16.mxu0 0
    %3116 = vmatpush1.bf16.msra.mxu0 %v2852
    %3117 = vmatprep.subr.bf16.mxu0 0
    %3118 = vmatpush1.bf16.msra.mxu0 %v2855
    %3119 = vmatprep.subr.bf16.mxu0 0
    %3120 = vmatpush1.bf16.msra.mxu0 %v2858
    %3121 = vmatprep.subr.bf16.mxu0 0
    %3122 = vmatpush1.bf16.msra.mxu0 %v2861
    %3123 = vmatprep.subr.bf16.mxu0 0
    %3124 = vmatpush1.bf16.msra.mxu0 %v2864
    %3125 = vmatprep.subr.bf16.mxu0 0
    %3126 = vmatpush1.bf16.msra.mxu0 %v2867
    %3127 = vmatprep.subr.bf16.mxu0 0
    %3128 = vmatpush1.bf16.msra.mxu0 %v2870
    %3129 = vmatprep.mubr.bf16.mxu0 %v1561
    %3130 = vmatmul.mubr.bf16.gmra.mrb[0].mxu0 %v1560
    %v3131 = vpop.f32.mrb[0].mxu0
    %v3132 = vadd.f32 %v1555, %v3131
    %v3133 = vpop.f32.mrb[0].mxu0
    %v3134 = vpop.f32.mrb[0].mxu0
    %v3135 = vpop.f32.mrb[0].mxu0
    %3136 = vdwg.mxu0
    %3137 = vmatprep.subr.bf16.mxu0 0
    %3138 = vmatpush1.bf16.msra.mxu0 %v2873
    %3139 = vmatprep.subr.bf16.mxu0 0
    %3140 = vmatpush1.bf16.msra.mxu0 %v2876
    %3141 = vmatprep.subr.bf16.mxu0 0
    %3142 = vmatpush1.bf16.msra.mxu0 %v2879
    %3143 = vmatprep.subr.bf16.mxu0 0
    %3144 = vmatpush1.bf16.msra.mxu0 %v2882
    %3145 = vmatprep.subr.bf16.mxu0 0
    %3146 = vmatpush1.bf16.msra.mxu0 %v2885
    %3147 = vmatprep.subr.bf16.mxu0 0
    %3148 = vmatpush1.bf16.msra.mxu0 %v2888
    %3149 = vmatprep.subr.bf16.mxu0 0
    %3150 = vmatpush1.bf16.msra.mxu0 %v2891
    %3151 = vmatprep.subr.bf16.mxu0 0
    %3152 = vmatpush1.bf16.msra.mxu0 %v2894
    %3153 = vmatprep.subr.bf16.mxu0 0
    %3154 = vmatpush1.bf16.msra.mxu0 %v2897
    %3155 = vmatprep.subr.bf16.mxu0 0
    %3156 = vmatpush1.bf16.msra.mxu0 %v2900
    %3157 = vmatprep.subr.bf16.mxu0 0
    %3158 = vmatpush1.bf16.msra.mxu0 %v2903
    %3159 = vmatprep.subr.bf16.mxu0 0
    %3160 = vmatpush1.bf16.msra.mxu0 %v2906
    %3161 = vmatprep.subr.bf16.mxu0 0
    %3162 = vmatpush1.bf16.msra.mxu0 %v2909
    %3163 = vmatprep.subr.bf16.mxu0 0
    %3164 = vmatpush1.bf16.msra.mxu0 %v2912
    %3165 = vmatprep.subr.bf16.mxu0 0
    %3166 = vmatpush1.bf16.msra.mxu0 %v2915
    %3167 = vmatprep.subr.bf16.mxu0 0
    %3168 = vmatpush1.bf16.msra.mxu0 %v2918
    %3169 = vmatprep.mubr.bf16.mxu0 %v1563
    %3170 = vmatmul.mubr.bf16.gmra.mrb[0].mxu0 %v1562
    %v3171 = vpop.f32.mrb[0].mxu0
    %v3172 = vadd.f32 %v3132, %v3171
    %v3173 = vpop.f32.mrb[0].mxu0
    %v3174 = vpop.f32.mrb[0].mxu0
    %v3175 = vpop.f32.mrb[0].mxu0
    %3176 = vdwg.mxu0
    %vm3177 = vcmp.gt.f32.partialorder %v3091, 0.0
    %vm3178 = vcmp.gt.f32.partialorder %v3093, 0.0
    %vm3179 = vcmp.gt.f32.partialorder %v3172, 0.0
    %v3180 = vmul.f32 %v3091, 0.01
    %v3181 = vmul.f32 %v3093, 0.01
    %v3182 = vmul.f32 %v3172, 0.01
    %v3183 = vsel %vm3177, %v3091, %v3180
    %v3184 = vsel %vm3178, %v3093, %v3181
    %v3185 = vsel %vm3179, %v3172, %v3182
    %v3186 = vld [vmem:[#allocation28] sm:$0x7]
    %v3188 = vlaneseq
    %v3189 = vshrl.u32 %v3188, 7
    %v3190 = vsub.s32 0, %v3189
    %v3191 = vrot.slane %v3186, %v3190
    %v3192 = vlaneseq
    %v3193 = vshrl.u32 %v3192, 7
    %v3194 = vsub.s32 1, %v3193
    %v3195 = vrot.slane %v3186, %v3194
    %v3196 = vlaneseq
    %v3197 = vshrl.u32 %v3196, 7
    %v3198 = vsub.s32 2, %v3197
    %v3199 = vrot.slane %v3186, %v3198
    %v3203 = vmul.f32 %v2372, %v3191
    %v3204 = vmul.f32 %v2373, %v3195
    %v3205 = vmul.f32 %v2374, %v3199
    %v3206 = vadd.f32 %v3203, %v3204
    %v3207 = vadd.f32 %v3206, %v3205
    %3208 = vadd.xlane.f32.xlu0 %v3207
    %v3209 = vpop.xlane.xlu0 %3208
    %v3210 = vld [vmem:[#allocation29] sm:$0x7]
    %v3212 = vlaneseq
    %v3213 = vshrl.u32 %v3212, 7
    %v3214 = vsub.s32 0, %v3213
    %v3215 = vrot.slane %v3210, %v3214
    %v3216 = vlaneseq
    %v3217 = vshrl.u32 %v3216, 7
    %v3218 = vsub.s32 1, %v3217
    %v3219 = vrot.slane %v3210, %v3218
    %v3220 = vlaneseq
    %v3221 = vshrl.u32 %v3220, 7
    %v3222 = vsub.s32 2, %v3221
    %v3223 = vrot.slane %v3210, %v3222
    %v3227 = vmul.f32 %v3183, %v3215
    %v3228 = vmul.f32 %v3184, %v3219
    %v3229 = vmul.f32 %v3185, %v3223
    %v3230 = vadd.f32 %v3227, %v3228
    %v3231 = vadd.f32 %v3230, %v3229
    %3232 = vadd.xlane.f32.xlu0 %v3231
    %v3233 = vpop.xlane.xlu0 %3232
    %v3234 = vlaneseq
    %v3235 = vand.u32 %v3234, 127
    %vm3236 = vcmp.eq.s32.totalorder %v3235, 0
    %vm3237 = vcmp.eq.s32.totalorder %v3235, 1
    %v3238 = vsel %vm3237, %v3233, 0.0
    %v3239 = vsel %vm3236, %v3209, %v3238
    %v3240 = vld [vmem:[#allocation31] sm:$0x1]
    %v3242 = vlaneseq
    %v3243 = vshrl.u32 %v3242, 7
    %v3244 = vsub.s32 0, %v3243
    %v3245 = vrot.slane %v3240, %v3244
    %v3247 = vadd.f32 %v3239, %v3245
    %3248 = vst [vmem:[#allocation32] sm:$0xff] %v3247
    // Predicated region
    $region154: #{tpu_custom_call.1} parent=1 // pred_check
      _
    $region155: #{tpu_custom_call.1} parent=1 // pred_check_branch
      %3250 = sbr.rel (0) target = $region157
    $region156: #{tpu_custom_call.1} parent=1 // pred_region
      %s3252 = ssub.s32 128, 128
      %3253 = vsyncadd [#allocation4], %s3252
      %s3255 = sshll.u32 [#allocation32], 4
      %s3256 = int_to_ptr.vmem [resolvable:$true] %s3255
      %3258 = dma.vmem_to_hbm [thread:$0]  %s3256, 128, %s19, [#allocation4]
    $region157: #{tpu_custom_call.1} parent=1 // pred_fallthru
      _
    // Predicated region
    $region158: #{tpu_custom_call.1} parent=1 // pred_check
      _
    $region159: #{tpu_custom_call.1} parent=1 // pred_check_branch
      %3260 = sbr.rel (0) target = $region161
    $region160: #{tpu_custom_call.1} parent=1 // pred_region
      %3261 = dma.done [#allocation4], 128
    $region161: #{tpu_custom_call.1} parent=1 // pred_fallthru
      _
    %3262 = vsyncpa [#allocation3], 1
    %3263 = vsyncpa [#allocation6], 1
    %3264 = vsyncpa [#allocation9], 1
    %3265 = vsyncpa [#allocation12], 1
    %3266 = vsyncpa [#allocation15], 1
    %3267 = vsyncpa [#allocation18], 1
    %3268 = vsyncpa [#allocation21], 1
    %3269 = vsyncpa [#allocation24], 1
    %3270 = vsyncpa [#allocation27], 1
    %3271 = vsyncpa [#allocation30], 1
    %3272 = vsyncpa [#allocation4], 1

</llo_original>
